<compile_context>
chip_gen: v5e
topology: v5e:2x2
jax: 0.10.0
libtpu: 0.0.40
codegen_flags: <defaults>
</compile_context>

<pallas_src>
import numpy as np
import jax
import jax.numpy as jnp
from jax import lax
from jax.experimental import pallas as pl
from jax.experimental.pallas import tpu as pltpu

LANE = 128


def _round_up(x, m):
    return ((x + m - 1) // m) * m


# ----------------------------- parameter prep (XLA glue) -----------------------------
def _prep_bn(gamma, beta, mean, var, eps, cp):
    scale = gamma / jnp.sqrt(var + eps)
    bias = beta - mean * scale
    c = scale.shape[0]
    scale = jnp.pad(scale, (0, cp - c)).reshape(1, cp).astype(jnp.float32)
    bias = jnp.pad(bias, (0, cp - c)).reshape(1, cp).astype(jnp.float32)
    return scale, bias


def _prep_w3x3(w_oihw, cinp, coutp):
    """(Cout, Cin, 3, 3) -> (9, Cinp, Coutp) bf16, tap-major (ky, kx)."""
    cout, cin = w_oihw.shape[:2]
    w = jnp.transpose(w_oihw, (2, 3, 1, 0)).reshape(9, cin, cout)
    w = jnp.pad(w, ((0, 0), (0, cinp - cin), (0, coutp - cout)))
    return w.astype(jnp.bfloat16)


def _prep_w1x1(w_oihw, cinp, coutp):
    cout, cin = w_oihw.shape[:2]
    w = jnp.transpose(w_oihw[:, :, 0, 0], (1, 0))
    w = jnp.pad(w, ((0, cinp - cin), (0, coutp - cout)))
    return w.astype(jnp.bfloat16)


def _build_conv_sources(img_nhwc, stride, cp, with_mask):
    """Prepare a (pad=1) 3x3 conv input so each tap is a contiguous row slice.

    The padded image is decomposed into stride^2 phases, each flattened to
    (rows, Cp) with one guard row top/bottom; tap (ky, kx) of the extended
    output grid (Ho, Wo+2) is then src[off_t : off_t + Ho*(Wo+2)].

    Returns: srcs (N, S*R, Cp) bf16, mask (S*R, 1) f32 | None,
             tap_offsets (9 python ints), M = Ho*(Wo+2), (Ho, Wo, We).
    """
    n, h, w, c = img_nhwc.shape
    s = stride
    ho = (h - 1) // s + 1
    wo = (w - 1) // s + 1
    we = wo + 2                       # extended output width (junk cols 0 and wo+1)
    nrows = ho + (3 - 1) // s         # phase content rows
    r = (nrows + 2) * we              # + top/bottom guard rows
    m = ho * we

    hp = s * nrows                    # padded spatial extent needed by the phases
    wp = s * we
    xp = jnp.pad(img_nhwc, ((0, 0), (1, hp - h - 1), (1, wp - w - 1), (0, cp - c)))

    phases, masks = [], []
    for py in range(s):
        for px in range(s):
            ph = xp[:, py::s, px::s, :][:, :nrows, :we, :]
            ph = jnp.pad(ph, ((0, 0), (1, 1), (0, 0), (0, 0)))   # guard rows
            phases.append(ph.reshape(n, r, cp))
            if with_mask:
                gi = np.arange(nrows + 2) - 1                    # -1 / nrows -> guards
                gj = np.arange(we)
                rv = (s * gi + py >= 1) & (s * gi + py <= h)
                cv = (s * gj + px >= 1) & (s * gj + px <= w)
                masks.append((rv[:, None] & cv[None, :]).astype(np.float32).reshape(r, 1))

    srcs = jnp.concatenate(phases, axis=1).astype(jnp.bfloat16)   # (N, S*R, Cp)
    mask = jnp.asarray(np.concatenate(masks, axis=0)) if with_mask else None

    offs = []
    for ky in range(3):
        for kx in range(3):
            s_idx = (ky % s) * s + (kx % s)
            offs.append(s_idx * r + we * (1 + ky // s) + (kx // s) - 1)
    return srcs, mask, offs, m, (ho, wo, we)


def _to_extended(img_nhwc, cp, dtype):
    """Lay an (N, H, W, C) tensor onto the extended output grid (N, H*(W+2), Cp)."""
    n, h, w, c = img_nhwc.shape
    y = jnp.pad(img_nhwc, ((0, 0), (0, 0), (1, 1), (0, cp - c)))
    return y.reshape(n, h * (w + 2), cp).astype(dtype)


# ----------------------------- fused conv3x3 Pallas kernel -----------------------------
def fused_conv3x3(srcs, w9, tap_offsets, m, *,
                  in_mask=None, in_scale=None, in_bias=None,
                  out_scale=None, out_bias=None,
                  residual=None, res_w=None,
                  emit_conv_src_layout=False, ext_width=None,
                  out_dtype=jnp.float32):
    """3x3 conv as 9 chained MXU dots over tap slices, with optional fused
    input-side bn+relu (precomputed once into VMEM), output-side bn+relu,
    residual (identity add or 1x1 conv), and optional emission of the output
    directly in the *next* conv's flattened source layout."""
    n, rows, cinp = srcs.shape
    coutp = w9.shape[-1]
    has_in_bn = in_scale is not None
    has_out_bn = out_scale is not None
    res_mode = None if residual is None else ("matmul" if res_w is not None else "add")
    we = ext_width
    out_rows = m + 4 * we if emit_conv_src_layout else m

    def kernel(*refs):
        it = iter(refs)
        src_ref = next(it)
        if has_in_bn:
            msk_ref = next(it)
            s1_ref = next(it)
            b1_ref = next(it)
        w_ref = next(it)
        if has_out_bn:
            s2_ref = next(it)
            b2_ref = next(it)
        if res_mode is not None:
            res_ref = next(it)
        if res_mode == "matmul":
            wr_ref = next(it)
        out_ref = next(it)
        if has_in_bn:
            pre_ref = next(it)        # (rows, Cinp) bf16 VMEM scratch

        # bn1 + relu + pad-validity mask applied ONCE over the source rows
        # (taps below read slices of pre_ref instead of redoing this 9x).
        if has_in_bn:
            a_all = jnp.maximum(
                src_ref[0].astype(jnp.float32) * s1_ref[...] + b1_ref[...], 0.0)
            pre_ref[...] = (a_all * msk_ref[...]).astype(jnp.bfloat16)

            def tap(off):
                return pre_ref[pl.ds(off, m), :]
        else:
            def tap(off):
                return src_ref[0, pl.ds(off, m), :]

        # Chained value accumulation: no zeroed scratch, no 9x RMW over VMEM.
        acc = jnp.dot(tap(tap_offsets[0]), w_ref[0],
                      preferred_element_type=jnp.float32)
        for t in range(1, 9):
            acc = acc + jnp.dot(tap(tap_offsets[t]), w_ref[t],
                                preferred_element_type=jnp.float32)

        y = acc
        if has_out_bn:
            y = jnp.maximum(y * s2_ref[...] + b2_ref[...], 0.0)
        if res_mode == "add":
            y = y + res_ref[0].astype(jnp.float32)
        elif res_mode == "matmul":
            y = y + jnp.dot(res_ref[0], wr_ref[...],
                            preferred_element_type=jnp.float32)

        if emit_conv_src_layout:
            # Zero the junk columns (they become the next conv's left/right pad)
            # and surround with guard + top/bottom pad rows -> output IS the
            # next conv's source layout; no XLA repack between the two kernels.
            col = lax.broadcasted_iota(jnp.int32, (m, 1), 0) % we
            valid = jnp.logical_and(col >= 1, col <= we - 2)
            y = jnp.where(valid, y, 0.0)
            yb = y.astype(out_ref.dtype)
            zeros = jnp.zeros((2 * we, coutp), out_ref.dtype)
            out_ref[0, pl.ds(0, 2 * we), :] = zeros
            out_ref[0, pl.ds(2 * we, m), :] = yb
            out_ref[0, pl.ds(2 * we + m, 2 * we), :] = zeros
        else:
            out_ref[0] = y.astype(out_ref.dtype)

    inputs = [srcs]
    in_specs = [pl.BlockSpec((1, rows, cinp), lambda i: (i, 0, 0))]
    if has_in_bn:
        inputs += [in_mask, in_scale, in_bias]
        in_specs += [pl.BlockSpec(in_mask.shape, lambda i: (0, 0)),
                     pl.BlockSpec((1, cinp), lambda i: (0, 0)),
                     pl.BlockSpec((1, cinp), lambda i: (0, 0))]
    inputs.append(w9)
    in_specs.append(pl.BlockSpec((9, cinp, coutp), lambda i: (0, 0, 0)))
    if has_out_bn:
        inputs += [out_scale, out_bias]
        in_specs += [pl.BlockSpec((1, coutp), lambda i: (0, 0)),
                     pl.BlockSpec((1, coutp), lambda i: (0, 0))]
    if residual is not None:
        inputs.append(residual)
        in_specs.append(pl.BlockSpec((1, m, residual.shape[-1]), lambda i: (i, 0, 0)))
    if res_w is not None:
        inputs.append(res_w)
        in_specs.append(pl.BlockSpec(res_w.shape, lambda i: (0, 0)))

    scratch_shapes = []
    if has_in_bn:
        scratch_shapes.append(pltpu.VMEM((rows, cinp), jnp.bfloat16))

    # Explicit VMEM budget from the actual per-step footprint (+ headroom).
    out_itemsize = jnp.dtype(out_dtype).itemsize
    vmem_bytes = (
        2 * rows * cinp * 2                                     # src, double-buffered bf16
        + 2 * 9 * cinp * coutp * 2                              # weights (grid-invariant)
        + 2 * out_rows * coutp * out_itemsize                   # output, double-buffered
        + (rows * cinp * 2 if has_in_bn else 0)                 # bn1 prologue scratch
        + (2 * m * int(residual.shape[-1]) * 2 if residual is not None else 0)
        + (2 * int(np.prod(res_w.shape)) * 2 if res_w is not None else 0)
        + m * coutp * 4                                         # live f32 accumulator
        + (2 * rows * 4 if has_in_bn else 0)                    # mask + bn vectors
    )
    vmem_limit = int(min(max(int(vmem_bytes * 1.5) + (1 << 20), 4 << 20), 96 << 20))

    return pl.pallas_call(
        kernel,
        out_shape=jax.ShapeDtypeStruct((n, out_rows, coutp), out_dtype),
        grid=(n,),
        in_specs=in_specs,
        out_specs=pl.BlockSpec((1, out_rows, coutp), lambda i: (i, 0, 0)),
        scratch_shapes=scratch_shapes,
        compiler_params=pltpu.CompilerParams(
            dimension_semantics=("parallel",),
            vmem_limit_bytes=vmem_limit),
    )(*inputs)


# ----------------------------- BasicBlock forward -----------------------------
def basic_block_forward(x_nchw, params, *, stride, equal_in_out, eps=1e-5):
    x = jnp.transpose(x_nchw, (0, 2, 3, 1)).astype(jnp.float32)   # NHWC
    n, h, w, cin = x.shape
    cout = params["conv1"].shape[0]
    cinp, coutp = _round_up(cin, LANE), _round_up(cout, LANE)

    s1, b1 = _prep_bn(*params["bn1"], eps, cinp)
    s2, b2 = _prep_bn(*params["bn2"], eps, coutp)
    w1 = _prep_w3x3(params["conv1"], cinp, coutp)
    w2 = _prep_w3x3(params["conv2"], coutp, coutp)

    # kernel 1: relu(bn1(x)) -> conv1(3x3, stride) -> relu(bn2(.)),
    # emitted DIRECTLY in conv2's flattened source layout (bf16).
    srcs1, mask1, offs1, m1, (ho, wo, we) = _build_conv_sources(x, stride, cinp, True)
    srcs2 = fused_conv3x3(srcs1, w1, offs1, m1,
                          in_mask=mask1, in_scale=s1, in_bias=b1,
                          out_scale=s2, out_bias=b2,
                          emit_conv_src_layout=True, ext_width=we,
                          out_dtype=jnp.bfloat16)
    # srcs2: (N, (Ho+4)*We, Coutp) — already guard/pad-row framed, junk cols zeroed.

    # shortcut operand laid out on conv2's extended output grid (fused into kernel 2)
    if equal_in_out:
        res = _to_extended(x, coutp, jnp.bfloat16)                 # identity add (bf16 stream)
        res_w = None
    else:
        xs = x[:, ::stride, ::stride, :][:, :ho, :wo, :]
        res = _to_extended(xs, cinp, jnp.bfloat16)
        res_w = _prep_w1x1(params["shortcut"], cinp, coutp)

    # kernel 2: conv2(3x3, stride 1) + shortcut
    m2 = ho * we
    offs2 = [we * (1 + ky) + kx - 1 for ky in range(3) for kx in range(3)]
    outext = fused_conv3x3(srcs2, w2, offs2, m2,
                           residual=res, res_w=res_w, out_dtype=jnp.float32)
    out = outext.reshape(n, ho, we, coutp)[:, :, 1:wo + 1, :cout]
    return jnp.transpose(out, (0, 3, 1, 2))                        # back to NCHW


# ----------------------------- pure-JAX reference -----------------------------
def reference_forward(x, params, *, stride, equal_in_out, eps=1e-5):
    def bn(t, p):
        g, b, m, v = p
        sh = (1, -1, 1, 1)
        return (t - m.reshape(sh)) / jnp.sqrt(v + eps).reshape(sh) * g.reshape(sh) + b.reshape(sh)

    dn = ("NCHW", "OIHW", "NCHW")
    hp = lax.Precision.HIGHEST
    h1 = jax.nn.relu(bn(x, params["bn1"]))
    y1 = lax.conv_general_dilated(h1, params["conv1"], (stride, stride),
                                  ((1, 1), (1, 1)), dimension_numbers=dn, precision=hp)
    h2 = jax.nn.relu(bn(y1, params["bn2"]))
    y2 = lax.conv_general_dilated(h2, params["conv2"], (1, 1),
                                  ((1, 1), (1, 1)), dimension_numbers=dn, precision=hp)
    if equal_in_out:
        sc = x
    else:
        sc = lax.conv_general_dilated(x, params["shortcut"], (stride, stride),
                                      ((0, 0), (0, 0)), dimension_numbers=dn, precision=hp)
    return y2 + sc


# ----------------------------- main -----------------------------
if __name__ == "__main__":
    N, IN_PLANES, OUT_PLANES, H, W = 2, 4, 8, 16, 16
    STRIDE = 2
    EQUAL_IN_OUT = IN_PLANES == OUT_PLANES   # False -> exercises the fused 1x1 shortcut conv

    key = jax.random.PRNGKey(0)
    ks = jax.random.split(key, 12)
    params = {
        "bn1": (
            jax.random.normal(ks[0], (IN_PLANES,), jnp.float32) * 0.1 + 1.0,   # gamma
            jax.random.normal(ks[1], (IN_PLANES,), jnp.float32) * 0.1,          # beta
            jax.random.normal(ks[2], (IN_PLANES,), jnp.float32) * 0.1,          # running_mean
            jax.random.uniform(ks[3], (IN_PLANES,), jnp.float32, 0.5, 1.5),     # running_var
        ),
        "conv1": jax.random.normal(ks[4], (OUT_PLANES, IN_PLANES, 3, 3), jnp.float32) * 0.1,
        "bn2": (
            jax.random.normal(ks[5], (OUT_PLANES,), jnp.float32) * 0.1 + 1.0,
            jax.random.normal(ks[6], (OUT_PLANES,), jnp.float32) * 0.1,
            jax.random.normal(ks[7], (OUT_PLANES,), jnp.float32) * 0.1,
            jax.random.uniform(ks[8], (OUT_PLANES,), jnp.float32, 0.5, 1.5),
        ),
        "conv2": jax.random.normal(ks[9], (OUT_PLANES, OUT_PLANES, 3, 3), jnp.float32) * 0.1,
        "shortcut": jax.random.normal(ks[10], (OUT_PLANES, IN_PLANES, 1, 1), jnp.float32) * 0.1,
    }
    x = jax.random.normal(ks[11], (N, IN_PLANES, H, W), jnp.float32)

    out = basic_block_forward(x, params, stride=STRIDE, equal_in_out=EQUAL_IN_OUT)
    out = jax.block_until_ready(out)

    ref = jax.block_until_ready(
        reference_forward(x, params, stride=STRIDE, equal_in_out=EQUAL_IN_OUT)
    )
    assert out.shape == ref.shape == (N, OUT_PLANES, H // STRIDE, W // STRIDE), out.shape
    # bf16 MXU operands / bf16 intermediate (per perf guidance) with f32 accumulation.
    assert jnp.allclose(out, ref, atol=2e-2, rtol=2e-2), float(jnp.max(jnp.abs(out - ref)))

    print("KERNEL_OK")
</pallas_src>

<mosaic_0001>
module attributes {stable_mosaic.version = 11 : i64} {
  func.func @kernel(%arg0: i32, %arg1: memref<1x440x128xbf16, #tpu.memory_space<vmem>>, %arg2: memref<440x1xf32, #tpu.memory_space<vmem>>, %arg3: memref<1x128xf32, #tpu.memory_space<vmem>>, %arg4: memref<1x128xf32, #tpu.memory_space<vmem>>, %arg5: memref<9x128x128xbf16, #tpu.memory_space<vmem>>, %arg6: memref<1x128xf32, #tpu.memory_space<vmem>>, %arg7: memref<1x128xf32, #tpu.memory_space<vmem>>, %arg8: memref<1x120x128xbf16, #tpu.memory_space<vmem>>, %arg9: memref<440x128xbf16, #tpu.memory_space<vmem>>) attributes {dimension_semantics = [#tpu.dimension_semantics<parallel>], iteration_bounds = array<i64: 2>, scalar_prefetch = 0 : i64, scratch_operands = 1 : i64, tpu.core_type = #tpu.core_type<tc>, window_params = [{transform_indices = @transform_0, window_bounds = array<i64: 1, 440, 128>}, {pipeline_mode = #tpu.pipeline_mode<synchronous>, transform_indices = @transform_1, window_bounds = array<i64: 440, 1>}, {pipeline_mode = #tpu.pipeline_mode<synchronous>, transform_indices = @transform_2, window_bounds = array<i64: 1, 128>}, {pipeline_mode = #tpu.pipeline_mode<synchronous>, transform_indices = @transform_3, window_bounds = array<i64: 1, 128>}, {pipeline_mode = #tpu.pipeline_mode<synchronous>, transform_indices = @transform_4, window_bounds = array<i64: 9, 128, 128>}, {pipeline_mode = #tpu.pipeline_mode<synchronous>, transform_indices = @transform_5, window_bounds = array<i64: 1, 128>}, {pipeline_mode = #tpu.pipeline_mode<synchronous>, transform_indices = @transform_6, window_bounds = array<i64: 1, 128>}, {transform_indices = @transform_7, window_bounds = array<i64: 1, 120, 128>}]} {
    %c0 = arith.constant 0 : index
    %c0_0 = arith.constant 0 : index
    %c0_1 = arith.constant 0 : index
    %0 = vector.load %arg1[%c0, %c0_0, %c0_1] : memref<1x440x128xbf16, #tpu.memory_space<vmem>>, vector<1x440x128xbf16>
    %1 = vector.shape_cast %0 : vector<1x440x128xbf16> to vector<440x128xbf16>
    %2 = arith.extf %1 : vector<440x128xbf16> to vector<440x128xf32>
    %c0_2 = arith.constant 0 : index
    %c0_3 = arith.constant 0 : index
    %3 = vector.load %arg3[%c0_2, %c0_3] : memref<1x128xf32, #tpu.memory_space<vmem>>, vector<1x128xf32>
    %4 = vector.broadcast %3 : vector<1x128xf32> to vector<440x128xf32>
    %5 = arith.mulf %2, %4 : vector<440x128xf32>
    %c0_4 = arith.constant 0 : index
    %c0_5 = arith.constant 0 : index
    %6 = vector.load %arg4[%c0_4, %c0_5] : memref<1x128xf32, #tpu.memory_space<vmem>>, vector<1x128xf32>
    %7 = vector.broadcast %6 : vector<1x128xf32> to vector<440x128xf32>
    %8 = arith.addf %5, %7 : vector<440x128xf32>
    %cst = arith.constant 0.000000e+00 : f32
    %9 = vector.broadcast %cst : f32 to vector<440x128xf32>
    %10 = arith.maximumf %8, %9 : vector<440x128xf32>
    %c0_6 = arith.constant 0 : index
    %c0_7 = arith.constant 0 : index
    %11 = vector.load %arg2[%c0_6, %c0_7] : memref<440x1xf32, #tpu.memory_space<vmem>>, vector<440x1xf32>
    %12 = vector.broadcast %11 : vector<440x1xf32> to vector<440x128xf32>
    %13 = arith.mulf %10, %12 : vector<440x128xf32>
    %14 = arith.truncf %13 : vector<440x128xf32> to vector<440x128xbf16>
    %c0_8 = arith.constant 0 : index
    %c0_9 = arith.constant 0 : index
    %15 = vector.load %arg9[%c0_8, %c0_9] : memref<440x128xbf16, #tpu.memory_space<vmem>>, vector<440x128xbf16>
    tpu.vector_store %arg9[%c0_8, %c0_9], %14 {strides = array<i32>} : memref<440x128xbf16, #tpu.memory_space<vmem>>, vector<440x128xbf16>,
    %c9 = arith.constant 9 : index
    %c0_10 = arith.constant 0 : index
    %16 = vector.load %arg9[%c9, %c0_10] : memref<440x128xbf16, #tpu.memory_space<vmem>>, vector<80x128xbf16>
    %c0_11 = arith.constant 0 : index
    %c0_12 = arith.constant 0 : index
    %c0_13 = arith.constant 0 : index
    %17 = vector.load %arg5[%c0_11, %c0_12, %c0_13] : memref<9x128x128xbf16, #tpu.memory_space<vmem>>, vector<1x128x128xbf16>
    %18 = vector.shape_cast %17 : vector<1x128x128xbf16> to vector<128x128xbf16>
    %cst_14 = arith.constant dense<0.000000e+00> : vector<80x128xf32>
    %19 = tpu.matmul %16, %18, %cst_14 {dimension_numbers = #tpu.dot_dimension_numbers<[1], [0], [0], [1], [0, 0, 1, 1], [], []>} : vector<80x128xbf16>, vector<128x128xbf16>, vector<80x128xf32> -> vector<80x128xf32>
    %c119 = arith.constant 119 : index
    %c0_15 = arith.constant 0 : index
    %20 = vector.load %arg9[%c119, %c0_15] : memref<440x128xbf16, #tpu.memory_space<vmem>>, vector<80x128xbf16>
    %c1 = arith.constant 1 : index
    %c0_16 = arith.constant 0 : index
    %c0_17 = arith.constant 0 : index
    %21 = vector.load %arg5[%c1, %c0_16, %c0_17] : memref<9x128x128xbf16, #tpu.memory_space<vmem>>, vector<1x128x128xbf16>
    %22 = vector.shape_cast %21 : vector<1x128x128xbf16> to vector<128x128xbf16>
    %cst_18 = arith.constant dense<0.000000e+00> : vector<80x128xf32>
    %23 = tpu.matmul %20, %22, %cst_18 {dimension_numbers = #tpu.dot_dimension_numbers<[1], [0], [0], [1], [0, 0, 1, 1], [], []>} : vector<80x128xbf16>, vector<128x128xbf16>, vector<80x128xf32> -> vector<80x128xf32>
    %24 = arith.addf %19, %23 : vector<80x128xf32>
    %c10 = arith.constant 10 : index
    %c0_19 = arith.constant 0 : index
    %25 = vector.load %arg9[%c10, %c0_19] : memref<440x128xbf16, #tpu.memory_space<vmem>>, vector<80x128xbf16>
    %c2 = arith.constant 2 : index
    %c0_20 = arith.constant 0 : index
    %c0_21 = arith.constant 0 : index
    %26 = vector.load %arg5[%c2, %c0_20, %c0_21] : memref<9x128x128xbf16, #tpu.memory_space<vmem>>, vector<1x128x128xbf16>
    %27 = vector.shape_cast %26 : vector<1x128x128xbf16> to vector<128x128xbf16>
    %cst_22 = arith.constant dense<0.000000e+00> : vector<80x128xf32>
    %28 = tpu.matmul %25, %27, %cst_22 {dimension_numbers = #tpu.dot_dimension_numbers<[1], [0], [0], [1], [0, 0, 1, 1], [], []>} : vector<80x128xbf16>, vector<128x128xbf16>, vector<80x128xf32> -> vector<80x128xf32>
    %29 = arith.addf %24, %28 : vector<80x128xf32>
    %c229 = arith.constant 229 : index
    %c0_23 = arith.constant 0 : index
    %30 = vector.load %arg9[%c229, %c0_23] : memref<440x128xbf16, #tpu.memory_space<vmem>>, vector<80x128xbf16>
    %c3 = arith.constant 3 : index
    %c0_24 = arith.constant 0 : index
    %c0_25 = arith.constant 0 : index
    %31 = vector.load %arg5[%c3, %c0_24, %c0_25] : memref<9x128x128xbf16, #tpu.memory_space<vmem>>, vector<1x128x128xbf16>
    %32 = vector.shape_cast %31 : vector<1x128x128xbf16> to vector<128x128xbf16>
    %cst_26 = arith.constant dense<0.000000e+00> : vector<80x128xf32>
    %33 = tpu.matmul %30, %32, %cst_26 {dimension_numbers = #tpu.dot_dimension_numbers<[1], [0], [0], [1], [0, 0, 1, 1], [], []>} : vector<80x128xbf16>, vector<128x128xbf16>, vector<80x128xf32> -> vector<80x128xf32>
    %34 = arith.addf %29, %33 : vector<80x128xf32>
    %c339 = arith.constant 339 : index
    %c0_27 = arith.constant 0 : index
    %35 = vector.load %arg9[%c339, %c0_27] : memref<440x128xbf16, #tpu.memory_space<vmem>>, vector<80x128xbf16>
    %c4 = arith.constant 4 : index
    %c0_28 = arith.constant 0 : index
    %c0_29 = arith.constant 0 : index
    %36 = vector.load %arg5[%c4, %c0_28, %c0_29] : memref<9x128x128xbf16, #tpu.memory_space<vmem>>, vector<1x128x128xbf16>
    %37 = vector.shape_cast %36 : vector<1x128x128xbf16> to vector<128x128xbf16>
    %cst_30 = arith.constant dense<0.000000e+00> : vector<80x128xf32>
    %38 = tpu.matmul %35, %37, %cst_30 {dimension_numbers = #tpu.dot_dimension_numbers<[1], [0], [0], [1], [0, 0, 1, 1], [], []>} : vector<80x128xbf16>, vector<128x128xbf16>, vector<80x128xf32> -> vector<80x128xf32>
    %39 = arith.addf %34, %38 : vector<80x128xf32>
    %c230 = arith.constant 230 : index
    %c0_31 = arith.constant 0 : index
    %40 = vector.load %arg9[%c230, %c0_31] : memref<440x128xbf16, #tpu.memory_space<vmem>>, vector<80x128xbf16>
    %c5 = arith.constant 5 : index
    %c0_32 = arith.constant 0 : index
    %c0_33 = arith.constant 0 : index
    %41 = vector.load %arg5[%c5, %c0_32, %c0_33] : memref<9x128x128xbf16, #tpu.memory_space<vmem>>, vector<1x128x128xbf16>
    %42 = vector.shape_cast %41 : vector<1x128x128xbf16> to vector<128x128xbf16>
    %cst_34 = arith.constant dense<0.000000e+00> : vector<80x128xf32>
    %43 = tpu.matmul %40, %42, %cst_34 {dimension_numbers = #tpu.dot_dimension_numbers<[1], [0], [0], [1], [0, 0, 1, 1], [], []>} : vector<80x128xbf16>, vector<128x128xbf16>, vector<80x128xf32> -> vector<80x128xf32>
    %44 = arith.addf %39, %43 : vector<80x128xf32>
    %c19 = arith.constant 19 : index
    %c0_35 = arith.constant 0 : index
    %45 = vector.load %arg9[%c19, %c0_35] : memref<440x128xbf16, #tpu.memory_space<vmem>>, vector<80x128xbf16>
    %c6 = arith.constant 6 : index
    %c0_36 = arith.constant 0 : index
    %c0_37 = arith.constant 0 : index
    %46 = vector.load %arg5[%c6, %c0_36, %c0_37] : memref<9x128x128xbf16, #tpu.memory_space<vmem>>, vector<1x128x128xbf16>
    %47 = vector.shape_cast %46 : vector<1x128x128xbf16> to vector<128x128xbf16>
    %cst_38 = arith.constant dense<0.000000e+00> : vector<80x128xf32>
    %48 = tpu.matmul %45, %47, %cst_38 {dimension_numbers = #tpu.dot_dimension_numbers<[1], [0], [0], [1], [0, 0, 1, 1], [], []>} : vector<80x128xbf16>, vector<128x128xbf16>, vector<80x128xf32> -> vector<80x128xf32>
    %49 = arith.addf %44, %48 : vector<80x128xf32>
    %c129 = arith.constant 129 : index
    %c0_39 = arith.constant 0 : index
    %50 = vector.load %arg9[%c129, %c0_39] : memref<440x128xbf16, #tpu.memory_space<vmem>>, vector<80x128xbf16>
    %c7 = arith.constant 7 : index
    %c0_40 = arith.constant 0 : index
    %c0_41 = arith.constant 0 : index
    %51 = vector.load %arg5[%c7, %c0_40, %c0_41] : memref<9x128x128xbf16, #tpu.memory_space<vmem>>, vector<1x128x128xbf16>
    %52 = vector.shape_cast %51 : vector<1x128x128xbf16> to vector<128x128xbf16>
    %cst_42 = arith.constant dense<0.000000e+00> : vector<80x128xf32>
    %53 = tpu.matmul %50, %52, %cst_42 {dimension_numbers = #tpu.dot_dimension_numbers<[1], [0], [0], [1], [0, 0, 1, 1], [], []>} : vector<80x128xbf16>, vector<128x128xbf16>, vector<80x128xf32> -> vector<80x128xf32>
    %54 = arith.addf %49, %53 : vector<80x128xf32>
    %c20 = arith.constant 20 : index
    %c0_43 = arith.constant 0 : index
    %55 = vector.load %arg9[%c20, %c0_43] : memref<440x128xbf16, #tpu.memory_space<vmem>>, vector<80x128xbf16>
    %c8 = arith.constant 8 : index
    %c0_44 = arith.constant 0 : index
    %c0_45 = arith.constant 0 : index
    %56 = vector.load %arg5[%c8, %c0_44, %c0_45] : memref<9x128x128xbf16, #tpu.memory_space<vmem>>, vector<1x128x128xbf16>
    %57 = vector.shape_cast %56 : vector<1x128x128xbf16> to vector<128x128xbf16>
    %cst_46 = arith.constant dense<0.000000e+00> : vector<80x128xf32>
    %58 = tpu.matmul %55, %57, %cst_46 {dimension_numbers = #tpu.dot_dimension_numbers<[1], [0], [0], [1], [0, 0, 1, 1], [], []>} : vector<80x128xbf16>, vector<128x128xbf16>, vector<80x128xf32> -> vector<80x128xf32>
    %59 = arith.addf %54, %58 : vector<80x128xf32>
    %c0_47 = arith.constant 0 : index
    %c0_48 = arith.constant 0 : index
    %60 = vector.load %arg6[%c0_47, %c0_48] : memref<1x128xf32, #tpu.memory_space<vmem>>, vector<1x128xf32>
    %61 = vector.broadcast %60 : vector<1x128xf32> to vector<80x128xf32>
    %62 = arith.mulf %59, %61 : vector<80x128xf32>
    %c0_49 = arith.constant 0 : index
    %c0_50 = arith.constant 0 : index
    %63 = vector.load %arg7[%c0_49, %c0_50] : memref<1x128xf32, #tpu.memory_space<vmem>>, vector<1x128xf32>
    %64 = vector.broadcast %63 : vector<1x128xf32> to vector<80x128xf32>
    %65 = arith.addf %62, %64 : vector<80x128xf32>
    %cst_51 = arith.constant 0.000000e+00 : f32
    %66 = vector.broadcast %cst_51 : f32 to vector<80x128xf32>
    %67 = arith.maximumf %65, %66 : vector<80x128xf32>
    %68 = tpu.iota {dimensions = array<i32: 0>} : vector<80x1xi32>
    %c10_i32 = arith.constant 10 : i32
    %c0_i32 = arith.constant 0 : i32
    %69 = arith.cmpi eq, %c10_i32, %c0_i32 : i32
    %c1_i32 = arith.constant 1 : i32
    %70 = arith.select %69, %c1_i32, %c10_i32 : i32
    %71 = vector.broadcast %70 : i32 to vector<80x1xi32>
    %72 = arith.remsi %68, %71 : vector<80x1xi32>
    %c0_i32_52 = arith.constant 0 : i32
    %73 = vector.broadcast %c0_i32_52 : i32 to vector<80x1xi32>
    %74 = arith.cmpi ne, %72, %73 : vector<80x1xi32>
    %c0_i32_53 = arith.constant 0 : i32
    %75 = vector.broadcast %c0_i32_53 : i32 to vector<80x1xi32>
    %76 = arith.cmpi slt, %72, %75 : vector<80x1xi32>
    %c0_i32_54 = arith.constant 0 : i32
    %77 = arith.cmpi slt, %70, %c0_i32_54 : i32
    %78 = vector.broadcast %77 : i1 to vector<80x1xi1>
    %79 = vector.broadcast %78 : vector<80x1xi1> to vector<80x1xi1>
    %80 = arith.xori %76, %79 : vector<80x1xi1>
    %81 = arith.andi %80, %74 : vector<80x1xi1>
    %82 = vector.broadcast %70 : i32 to vector<80x1xi32>
    %83 = arith.addi %72, %82 : vector<80x1xi32>
    %84 = arith.select %81, %83, %72 : vector<80x1xi1>, vector<80x1xi32>
    %c1_i32_55 = arith.constant 1 : i32
    %85 = vector.broadcast %c1_i32_55 : i32 to vector<80x1xi32>
    %86 = arith.cmpi sge, %84, %85 : vector<80x1xi32>
    %c8_i32 = arith.constant 8 : i32
    %87 = vector.broadcast %c8_i32 : i32 to vector<80x1xi32>
    %88 = arith.cmpi sle, %84, %87 : vector<80x1xi32>
    %89 = arith.andi %86, %88 : vector<80x1xi1>
    %cst_56 = arith.constant 0.000000e+00 : f32
    %90 = vector.shape_cast %89 : vector<80x1xi1> to vector<80x1xi1>
    %91 = vector.broadcast %90 : vector<80x1xi1> to vector<80x128xi1>
    %92 = vector.broadcast %cst_56 : f32 to vector<80x128xf32>
    %93 = arith.select %91, %67, %92 : vector<80x128xi1>, vector<80x128xf32>
    %94 = arith.truncf %93 : vector<80x128xf32> to vector<80x128xbf16>
    %cst_57 = arith.constant 0.000000e+00 : bf16
    %95 = vector.broadcast %cst_57 : bf16 to vector<20x128xbf16>
    %c0_58 = arith.constant 0 : index
    %c0_59 = arith.constant 0 : index
    %c0_60 = arith.constant 0 : index
    %96 = vector.load %arg8[%c0_58, %c0_59, %c0_60] : memref<1x120x128xbf16, #tpu.memory_space<vmem>>, vector<1x20x128xbf16>
    %97 = vector.shape_cast %96 : vector<1x20x128xbf16> to vector<20x128xbf16>
    %98 = vector.shape_cast %95 : vector<20x128xbf16> to vector<1x20x128xbf16>
    tpu.vector_store %arg8[%c0_58, %c0_59, %c0_60], %98 {strides = array<i32>} : memref<1x120x128xbf16, #tpu.memory_space<vmem>>, vector<1x20x128xbf16>,
    %c0_61 = arith.constant 0 : index
    %c20_62 = arith.constant 20 : index
    %c0_63 = arith.constant 0 : index
    %99 = vector.load %arg8[%c0_61, %c20_62, %c0_63] : memref<1x120x128xbf16, #tpu.memory_space<vmem>>, vector<1x80x128xbf16>
    %100 = vector.shape_cast %99 : vector<1x80x128xbf16> to vector<80x128xbf16>
    %101 = vector.shape_cast %94 : vector<80x128xbf16> to vector<1x80x128xbf16>
    tpu.vector_store %arg8[%c0_61, %c20_62, %c0_63], %101 {strides = array<i32>} : memref<1x120x128xbf16, #tpu.memory_space<vmem>>, vector<1x80x128xbf16>,
    %c0_64 = arith.constant 0 : index
    %c100 = arith.constant 100 : index
    %c0_65 = arith.constant 0 : index
    %102 = vector.load %arg8[%c0_64, %c100, %c0_65] : memref<1x120x128xbf16, #tpu.memory_space<vmem>>, vector<1x20x128xbf16>
    %103 = vector.shape_cast %102 : vector<1x20x128xbf16> to vector<20x128xbf16>
    %104 = vector.shape_cast %95 : vector<20x128xbf16> to vector<1x20x128xbf16>
    tpu.vector_store %arg8[%c0_64, %c100, %c0_65], %104 {strides = array<i32>} : memref<1x120x128xbf16, #tpu.memory_space<vmem>>, vector<1x20x128xbf16>,
    return
  }
  func.func @transform_0(%arg0: i32) -> (i32, i32, i32) {
    %c0_i32 = arith.constant 0 : i32
    %c0_i32_0 = arith.constant 0 : i32
    %c0_i32_1 = arith.constant 0 : i32
    return %arg0, %c0_i32, %c0_i32_0 : i32, i32, i32
  }
  func.func @transform_1(%arg0: i32) -> (i32, i32) {
    %c0_i32 = arith.constant 0 : i32
    %c0_i32_0 = arith.constant 0 : i32
    %c0_i32_1 = arith.constant 0 : i32
    return %c0_i32, %c0_i32_0 : i32, i32
  }
  func.func @transform_2(%arg0: i32) -> (i32, i32) {
    %c0_i32 = arith.constant 0 : i32
    %c0_i32_0 = arith.constant 0 : i32
    %c0_i32_1 = arith.constant 0 : i32
    return %c0_i32, %c0_i32_0 : i32, i32
  }
  func.func @transform_3(%arg0: i32) -> (i32, i32) {
    %c0_i32 = arith.constant 0 : i32
    %c0_i32_0 = arith.constant 0 : i32
    %c0_i32_1 = arith.constant 0 : i32
    return %c0_i32, %c0_i32_0 : i32, i32
  }
  func.func @transform_4(%arg0: i32) -> (i32, i32, i32) {
    %c0_i32 = arith.constant 0 : i32
    %c0_i32_0 = arith.constant 0 : i32
    %c0_i32_1 = arith.constant 0 : i32
    %c0_i32_2 = arith.constant 0 : i32
    return %c0_i32, %c0_i32_0, %c0_i32_1 : i32, i32, i32
  }
  func.func @transform_5(%arg0: i32) -> (i32, i32) {
    %c0_i32 = arith.constant 0 : i32
    %c0_i32_0 = arith.constant 0 : i32
    %c0_i32_1 = arith.constant 0 : i32
    return %c0_i32, %c0_i32_0 : i32, i32
  }
  func.func @transform_6(%arg0: i32) -> (i32, i32) {
    %c0_i32 = arith.constant 0 : i32
    %c0_i32_0 = arith.constant 0 : i32
    %c0_i32_1 = arith.constant 0 : i32
    return %c0_i32, %c0_i32_0 : i32, i32
  }
  func.func @transform_7(%arg0: i32) -> (i32, i32, i32) {
    %c0_i32 = arith.constant 0 : i32
    %c0_i32_0 = arith.constant 0 : i32
    %c0_i32_1 = arith.constant 0 : i32
    return %arg0, %c0_i32, %c0_i32_0 : i32, i32, i32
  }
}

</mosaic_0001>

<llo_original>
// kernel: tpu_custom_call.1
$region0: #{tpu_custom_call.1}
  #allocation0 [shape = 'u32[]', space=smem, size = 0x4, offset = 0x4, fixed_abs, tag = 'smem constant byte address 0x4 - core index']
  #allocation1 [shape = 'u32[72,128]{1,0:T(1,128)}', space=vmem, size = 0x9000, scoped, tag = 'internal scratch']
  #allocation2 [shape = 'bf16[440,128]{1,0:T(8,128)(2,1)}', space=vmem, size = 0x1b800, scoped, tag = 'scratch operand']
  %s0 = inlined_call_operand.vmem [shape: bf16[2,440,128], index: 0, kind: input, shape index: {}]
  %s1 = inlined_call_operand.vmem [shape: f32[440,1], index: 1, kind: input, shape index: {}]
  %s2 = inlined_call_operand.vmem [shape: f32[1,128], index: 2, kind: input, shape index: {}]
  %s3 = inlined_call_operand.vmem [shape: f32[1,128], index: 3, kind: input, shape index: {}]
  %s4 = inlined_call_operand.hbm [shape: bf16[9,128,128], index: 4, kind: input, shape index: {}]
  %s5 = inlined_call_operand.vmem [shape: f32[1,128], index: 5, kind: input, shape index: {}]
  %s6 = inlined_call_operand.vmem [shape: f32[1,128], index: 6, kind: input, shape index: {}]
  %s7 = inlined_call_operand.hbm [shape: bf16[2,120,128], index: 7, kind: output, shape index: {}]
  %s8 = sld [smem:[#allocation0]]
  $region65: #{tpu_custom_call.1} parent=0
    _
  %s10 = ssub.s32 1, %s8
  %s11 = scalar_select 0, %s10, %s8
  $region1: #{tpu_custom_call.1} parent=0
    #allocation3 [shape = 'u8[294912]{0}', space=vmem, size = 0x48000, scoped, tag = 'input window, operand 4, single buffered']
    #allocation4 [shape = 's32[2]{0}', space=sflag, size = 0x8, scoped, tag = 'scoped memory for tpu_custom_call.1']
    #allocation5 [shape = 's32[2]{0}', space=sflag, size = 0x8, scoped, tag = 'scoped memory for tpu_custom_call.1']
    #allocation6 [shape = 'u8[61440]{0}', space=vmem, size = 0xf000, scoped, tag = 'output window, operand 0']
    %12 = vsyncpa [#allocation4], 0
    %13 = vsyncpa [#allocation5], 0
    %s14 = scalar_lea.sflag [#allocation5], 1
    %15 = vsyncpa %s14, 0
    loop: start=0, step=1, limit=4
    $region2: #{tpu_custom_call.1} parent=1 // loop_pre_header
      _
    $region3: #{tpu_custom_call.1} parent=1 // loop_header
      %s17 = sphi 0, %s21
      %p18 = scmp.ge.s32.totalorder %s17, 4
      %s27 = sphi 0, %s29
      %s30 = sphi 0, %s27
      %s31 = sphi 0, %s30
      %s47 = sphi 0, %s31
      %s51 = sphi 0, %s51
      %s53 = sphi 0, %s51
      %s54 = sphi 0, %s53
      %s68 = sphi 0, %s54
      %s72 = sphi 0, %s72
      %s74 = sphi 0, %s72
      %s75 = sphi 0, %s74
      %s89 = sphi 0, %s75
      %s93 = sphi 0, %s93
      %s95 = sphi 0, %s93
      %s96 = sphi 0, %s95
      %s110 = sphi 0, %s96
      %s114 = sphi 0, %s114
      %s116 = sphi 0, %s114
      %s117 = sphi 0, %s116
      %s131 = sphi 0, %s117
      %s135 = sphi 0, %s135
      %s137 = sphi 0, %s135
      %s138 = sphi 0, %s137
      %s152 = sphi 0, %s138
      %s156 = sphi 0, %s156
      %s158 = sphi 0, %s156
      %s159 = sphi 0, %s158
      %s173 = sphi 0, %s159
      %s179 = sphi 0, %s181
      %s182 = sphi 0, %s179
      %s183 = sphi 0, %s182
      %s199 = sphi 0, %s183
    $region4: #{tpu_custom_call.1} parent=1 // loop_header_branch
      %20 = sbr.rel (%p18) target = $region8
    $region5: #{tpu_custom_call.1} parent=1 // loop_body
      %s22 = ssub.s32 %s17, 1
      %s23 = ssub.s32 %s17, 2
      %s24 = sadd.s32 %s17, 1
      %s25 = ssub.s32 %s17, %s24
      %p26 = scmp.eq.s32.totalorder %s25, 0
      %s28 = sadd.s32 %s27, 1
      %s29 = scalar_select %p26, %s27, %s28
      %p32 = pneg %p26
      %p33 = scmp.eq.s32.totalorder %s17, 1
      %p34 = por %p32, %p33
      %p35 = scmp.ne.s32.totalorder %s27, %s30
      %p36 = scmp.eq.s32.totalorder %s17, 0
      %p37 = por %p35, %p36
      %p38 = scmp.ne.s32.totalorder %s27, %s30
      %p39 = scmp.eq.s32.totalorder %s22, 1
      %p40 = por %p38, %p39
      %p41 = scmp.ne.s32.totalorder %s30, %s31
      %p42 = scmp.eq.s32.totalorder %s22, 0
      %p43 = por %p41, %p42
      %p44 = scmp.ne.s32.totalorder %s30, %s31
      %p45 = scmp.eq.s32.totalorder %s23, 1
      %p46 = por %p44, %p45
      %p48 = scmp.ne.s32.totalorder %s31, %s47
      %p49 = scmp.eq.s32.totalorder %s23, 0
      %p50 = por %p48, %p49
      %s52 = sadd.s32 %s51, 1
      %p55 = scmp.eq.s32.totalorder %s17, 1
      %p56 = scmp.ne.s32.totalorder %s51, %s53
      %p57 = scmp.eq.s32.totalorder %s17, 0
      %p58 = por %p56, %p57
      %p59 = scmp.ne.s32.totalorder %s51, %s53
      %p60 = scmp.eq.s32.totalorder %s22, 1
      %p61 = por %p59, %p60
      %p62 = scmp.ne.s32.totalorder %s53, %s54
      %p63 = scmp.eq.s32.totalorder %s22, 0
      %p64 = por %p62, %p63
      %p65 = scmp.ne.s32.totalorder %s53, %s54
      %p66 = scmp.eq.s32.totalorder %s23, 1
      %p67 = por %p65, %p66
      %p69 = scmp.ne.s32.totalorder %s54, %s68
      %p70 = scmp.eq.s32.totalorder %s23, 0
      %p71 = por %p69, %p70
      %s73 = sadd.s32 %s72, 1
      %p76 = scmp.eq.s32.totalorder %s17, 1
      %p77 = scmp.ne.s32.totalorder %s72, %s74
      %p78 = scmp.eq.s32.totalorder %s17, 0
      %p79 = por %p77, %p78
      %p80 = scmp.ne.s32.totalorder %s72, %s74
      %p81 = scmp.eq.s32.totalorder %s22, 1
      %p82 = por %p80, %p81
      %p83 = scmp.ne.s32.totalorder %s74, %s75
      %p84 = scmp.eq.s32.totalorder %s22, 0
      %p85 = por %p83, %p84
      %p86 = scmp.ne.s32.totalorder %s74, %s75
      %p87 = scmp.eq.s32.totalorder %s23, 1
      %p88 = por %p86, %p87
      %p90 = scmp.ne.s32.totalorder %s75, %s89
      %p91 = scmp.eq.s32.totalorder %s23, 0
      %p92 = por %p90, %p91
      %s94 = sadd.s32 %s93, 1
      %p97 = scmp.eq.s32.totalorder %s17, 1
      %p98 = scmp.ne.s32.totalorder %s93, %s95
      %p99 = scmp.eq.s32.totalorder %s17, 0
      %p100 = por %p98, %p99
      %p101 = scmp.ne.s32.totalorder %s93, %s95
      %p102 = scmp.eq.s32.totalorder %s22, 1
      %p103 = por %p101, %p102
      %p104 = scmp.ne.s32.totalorder %s95, %s96
      %p105 = scmp.eq.s32.totalorder %s22, 0
      %p106 = por %p104, %p105
      %p107 = scmp.ne.s32.totalorder %s95, %s96
      %p108 = scmp.eq.s32.totalorder %s23, 1
      %p109 = por %p107, %p108
      %p111 = scmp.ne.s32.totalorder %s96, %s110
      %p112 = scmp.eq.s32.totalorder %s23, 0
      %p113 = por %p111, %p112
      %s115 = sadd.s32 %s114, 1
      %p118 = scmp.eq.s32.totalorder %s17, 1
      %p119 = scmp.ne.s32.totalorder %s114, %s116
      %p120 = scmp.eq.s32.totalorder %s17, 0
      %p121 = por %p119, %p120
      %p122 = scmp.ne.s32.totalorder %s114, %s116
      %p123 = scmp.eq.s32.totalorder %s22, 1
      %p124 = por %p122, %p123
      %p125 = scmp.ne.s32.totalorder %s116, %s117
      %p126 = scmp.eq.s32.totalorder %s22, 0
      %p127 = por %p125, %p126
      %p128 = scmp.ne.s32.totalorder %s116, %s117
      %p129 = scmp.eq.s32.totalorder %s23, 1
      %p130 = por %p128, %p129
      %p132 = scmp.ne.s32.totalorder %s117, %s131
      %p133 = scmp.eq.s32.totalorder %s23, 0
      %p134 = por %p132, %p133
      %s136 = sadd.s32 %s135, 1
      %p139 = scmp.eq.s32.totalorder %s17, 1
      %p140 = scmp.ne.s32.totalorder %s135, %s137
      %p141 = scmp.eq.s32.totalorder %s17, 0
      %p142 = por %p140, %p141
      %p143 = scmp.ne.s32.totalorder %s135, %s137
      %p144 = scmp.eq.s32.totalorder %s22, 1
      %p145 = por %p143, %p144
      %p146 = scmp.ne.s32.totalorder %s137, %s138
      %p147 = scmp.eq.s32.totalorder %s22, 0
      %p148 = por %p146, %p147
      %p149 = scmp.ne.s32.totalorder %s137, %s138
      %p150 = scmp.eq.s32.totalorder %s23, 1
      %p151 = por %p149, %p150
      %p153 = scmp.ne.s32.totalorder %s138, %s152
      %p154 = scmp.eq.s32.totalorder %s23, 0
      %p155 = por %p153, %p154
      %s157 = sadd.s32 %s156, 1
      %p160 = scmp.eq.s32.totalorder %s17, 1
      %p161 = scmp.ne.s32.totalorder %s156, %s158
      %p162 = scmp.eq.s32.totalorder %s17, 0
      %p163 = por %p161, %p162
      %p164 = scmp.ne.s32.totalorder %s156, %s158
      %p165 = scmp.eq.s32.totalorder %s22, 1
      %p166 = por %p164, %p165
      %p167 = scmp.ne.s32.totalorder %s158, %s159
      %p168 = scmp.eq.s32.totalorder %s22, 0
      %p169 = por %p167, %p168
      %p170 = scmp.ne.s32.totalorder %s158, %s159
      %p171 = scmp.eq.s32.totalorder %s23, 1
      %p172 = por %p170, %p171
      %p174 = scmp.ne.s32.totalorder %s159, %s173
      %p175 = scmp.eq.s32.totalorder %s23, 0
      %p176 = por %p174, %p175
      %s177 = ssub.s32 %s17, %s24
      %p178 = scmp.eq.s32.totalorder %s177, 0
      %s180 = sadd.s32 %s179, 1
      %s181 = scalar_select %p178, %s179, %s180
      %p184 = pneg %p178
      %p185 = scmp.eq.s32.totalorder %s17, 1
      %p186 = por %p184, %p185
      %p187 = scmp.ne.s32.totalorder %s179, %s182
      %p188 = scmp.eq.s32.totalorder %s17, 0
      %p189 = por %p187, %p188
      %p190 = scmp.ne.s32.totalorder %s179, %s182
      %p191 = scmp.eq.s32.totalorder %s22, 1
      %p192 = por %p190, %p191
      %p193 = scmp.ne.s32.totalorder %s182, %s183
      %p194 = scmp.eq.s32.totalorder %s22, 0
      %p195 = por %p193, %p194
      %p196 = scmp.ne.s32.totalorder %s182, %s183
      %p197 = scmp.eq.s32.totalorder %s23, 1
      %p198 = por %p196, %p197
      %p200 = scmp.ne.s32.totalorder %s183, %s199
      %p201 = scmp.eq.s32.totalorder %s23, 0
      %p202 = por %p200, %p201
      %p203 = scmp.le.s32.totalorder 1, %s17
      %p204 = scmp.lt.s32.totalorder %s17, 3
      %p205 = pnand %p203, %p204
      %p206 = pneg %p205
      // Predicated region
      $region9: #{tpu_custom_call.1} parent=5 // pred_check
        _
      $region10: #{tpu_custom_call.1} parent=5 // pred_check_branch
        %208 = sbr.rel (%p205) target = $region12
      $region11: #{tpu_custom_call.1} parent=5 // pred_region
        %s209 = ssub.s32 %s17, 1
        // Predicated region
        $region13: #{tpu_custom_call.1} parent=11 // pred_check
          %p210 = pneg %p64
        $region14: #{tpu_custom_call.1} parent=11 // pred_check_branch
          %212 = sbr.rel (%p210) target = $region16
        $region15: #{tpu_custom_call.1} parent=11 // pred_region
          _
        $region16: #{tpu_custom_call.1} parent=11 // pred_fallthru
          _
        // Predicated region
        $region17: #{tpu_custom_call.1} parent=11 // pred_check
          %p213 = pneg %p85
        $region18: #{tpu_custom_call.1} parent=11 // pred_check_branch
          %215 = sbr.rel (%p213) target = $region20
        $region19: #{tpu_custom_call.1} parent=11 // pred_region
          _
        $region20: #{tpu_custom_call.1} parent=11 // pred_fallthru
          _
        // Predicated region
        $region21: #{tpu_custom_call.1} parent=11 // pred_check
          %p216 = pneg %p106
        $region22: #{tpu_custom_call.1} parent=11 // pred_check_branch
          %218 = sbr.rel (%p216) target = $region24
        $region23: #{tpu_custom_call.1} parent=11 // pred_region
          _
        $region24: #{tpu_custom_call.1} parent=11 // pred_fallthru
          _
        // Predicated region
        $region25: #{tpu_custom_call.1} parent=11 // pred_check
          %p219 = pneg %p127
        $region26: #{tpu_custom_call.1} parent=11 // pred_check_branch
          %221 = sbr.rel (%p219) target = $region28
        $region27: #{tpu_custom_call.1} parent=11 // pred_region
          %223 = vsyncadd [#allocation4], 0
          %s224 = sshll.u32 %s4, 4
          %s225 = int_to_ptr.hbm [resolvable:$true] %s224
          %s226 = sshll.u32 [#allocation3], 4
          %s227 = int_to_ptr.vmem [resolvable:$true] %s226
          %232 = dma.hbm_to_vmem [thread:$0]  %s225, 9216, %s227, [#allocation4], 64, 64, 4
        $region28: #{tpu_custom_call.1} parent=11 // pred_fallthru
          _
        // Predicated region
        $region29: #{tpu_custom_call.1} parent=11 // pred_check
          %p233 = pneg %p148
        $region30: #{tpu_custom_call.1} parent=11 // pred_check_branch
          %235 = sbr.rel (%p233) target = $region32
        $region31: #{tpu_custom_call.1} parent=11 // pred_region
          _
        $region32: #{tpu_custom_call.1} parent=11 // pred_fallthru
          _
        // Predicated region
        $region33: #{tpu_custom_call.1} parent=11 // pred_check
          %p236 = pneg %p169
        $region34: #{tpu_custom_call.1} parent=11 // pred_check_branch
          %238 = sbr.rel (%p236) target = $region36
        $region35: #{tpu_custom_call.1} parent=11 // pred_region
          _
        $region36: #{tpu_custom_call.1} parent=11 // pred_fallthru
          _
      $region12: #{tpu_custom_call.1} parent=5 // pred_fallthru
        _
      %p239 = scmp.lt.s32.totalorder %s17, 2
      // Predicated region
      $region37: #{tpu_custom_call.1} parent=5 // pred_check
        %p240 = pneg %p239
      $region38: #{tpu_custom_call.1} parent=5 // pred_check_branch
        %242 = sbr.rel (%p240) target = $region40
      $region39: #{tpu_custom_call.1} parent=5 // pred_region
        // Predicated region
        $region41: #{tpu_custom_call.1} parent=39 // pred_check
          %p243 = pneg %p37
        $region42: #{tpu_custom_call.1} parent=39 // pred_check_branch
          %245 = sbr.rel (%p243) target = $region44
        $region43: #{tpu_custom_call.1} parent=39 // pred_region
          %p246 = scmp.lt.s32.totalorder %s17, 1
          %s247 = scalar_select %p246, %s17, 1
          %s248 = smul.addr %s247, 55
          %s249 = smul.addr %s248, 4
          %s250 = scalar_lea.vmem %s0, %s249
        $region44: #{tpu_custom_call.1} parent=39 // pred_fallthru
          _
      $region40: #{tpu_custom_call.1} parent=5 // pred_fallthru
        _
      %p251 = scmp.le.s32.totalorder 1, %s17
      %p252 = scmp.lt.s32.totalorder %s17, 3
      %p253 = pnand %p251, %p252
      %p254 = pneg %p253
      // Predicated region
      $region45: #{tpu_custom_call.1} parent=5 // pred_check
        _
      $region46: #{tpu_custom_call.1} parent=5 // pred_check_branch
        %256 = sbr.rel (%p253) target = $region48
      $region47: #{tpu_custom_call.1} parent=5 // pred_region
        %s257 = ssub.s32 %s17, 1
        // Predicated region
        $region49: #{tpu_custom_call.1} parent=47 // pred_check
          %p258 = pneg %p127
        $region50: #{tpu_custom_call.1} parent=47 // pred_check_branch
          %260 = sbr.rel (%p258) target = $region52
        $region51: #{tpu_custom_call.1} parent=47 // pred_region
          %262 = dma.done [#allocation4], 9216
        $region52: #{tpu_custom_call.1} parent=47 // pred_fallthru
          _
        %p263 = scmp.lt.s32.totalorder %s22, 1
        %s264 = scalar_select %p263, %s22, 1
        %s265 = smul.addr %s264, 55
        %s266 = smul.addr %s265, 4
        %s267 = scalar_lea.vmem %s0, %s266
        %p268 = pneg %p43
        %p269 = pneg %p40
        %p270 = pneg %p64
        %p271 = pneg %p61
        %p272 = pneg %p85
        %p273 = pneg %p82
        %p274 = pneg %p106
        %p275 = pneg %p103
        %p276 = pneg %p127
        %p277 = pneg %p124
        %p278 = pneg %p148
        %p279 = pneg %p145
        %p280 = pneg %p169
        %p281 = pneg %p166
        %p282 = pneg %p195
        %p283 = pneg %p192
        %s284 = sand.u32 %s182, 1
        %s285 = scalar_lea.sflag [#allocation5], %s284
        %s286 = sand.u32 %s182, 1
        %s287 = smul.addr %s286, 60
        %s288 = scalar_lea.vmem [#allocation6], %s287
        %p289 = scmp.lt.s32.totalorder %s22, 1
        %s290 = scalar_select %p289, %s22, 1
        %s291 = smul.addr %s290, 55
        %s292 = smul.addr %s291, 4
        %s293 = scalar_lea.vmem %s0, %s292
        %v295 = vld [vmem:[%s293] sm:$0xf]
        %v296 = vld [vmem:[%s293 + $0x4] sm:$0xf]
        %v297 = vld [vmem:[%s293 + $0x8] sm:$0xf]
        %v298 = vld [vmem:[%s293 + $0xc] sm:$0xf]
        %v299 = vld [vmem:[%s293 + $0x10] sm:$0xf]
        %v300 = vld [vmem:[%s293 + $0x14] sm:$0xf]
        %v301 = vld [vmem:[%s293 + $0x18] sm:$0xf]
        %v302 = vld [vmem:[%s293 + $0x1c] sm:$0xf]
        %v303 = vld [vmem:[%s293 + $0x20] sm:$0xf]
        %v304 = vld [vmem:[%s293 + $0x24] sm:$0xf]
        %v305 = vld [vmem:[%s293 + $0x28] sm:$0xf]
        %v306 = vld [vmem:[%s293 + $0x2c] sm:$0xf]
        %v307 = vld [vmem:[%s293 + $0x30] sm:$0xf]
        %v308 = vld [vmem:[%s293 + $0x34] sm:$0xf]
        %v309 = vld [vmem:[%s293 + $0x38] sm:$0xf]
        %v310 = vld [vmem:[%s293 + $0x3c] sm:$0xf]
        %v311 = vld [vmem:[%s293 + $0x40] sm:$0xf]
        %v312 = vld [vmem:[%s293 + $0x44] sm:$0xf]
        %v313 = vld [vmem:[%s293 + $0x48] sm:$0xf]
        %v314 = vld [vmem:[%s293 + $0x4c] sm:$0xf]
        %v315 = vld [vmem:[%s293 + $0x50] sm:$0xf]
        %v316 = vld [vmem:[%s293 + $0x54] sm:$0xf]
        %v317 = vld [vmem:[%s293 + $0x58] sm:$0xf]
        %v318 = vld [vmem:[%s293 + $0x5c] sm:$0xf]
        %v319 = vld [vmem:[%s293 + $0x60] sm:$0xf]
        %v320 = vld [vmem:[%s293 + $0x64] sm:$0xf]
        %v321 = vld [vmem:[%s293 + $0x68] sm:$0xf]
        %v322 = vld [vmem:[%s293 + $0x6c] sm:$0xf]
        %v323 = vld [vmem:[%s293 + $0x70] sm:$0xf]
        %v324 = vld [vmem:[%s293 + $0x74] sm:$0xf]
        %v325 = vld [vmem:[%s293 + $0x78] sm:$0xf]
        %v326 = vld [vmem:[%s293 + $0x7c] sm:$0xf]
        %v327 = vld [vmem:[%s293 + $0x80] sm:$0xf]
        %v328 = vld [vmem:[%s293 + $0x84] sm:$0xf]
        %v329 = vld [vmem:[%s293 + $0x88] sm:$0xf]
        %v330 = vld [vmem:[%s293 + $0x8c] sm:$0xf]
        %v331 = vld [vmem:[%s293 + $0x90] sm:$0xf]
        %v332 = vld [vmem:[%s293 + $0x94] sm:$0xf]
        %v333 = vld [vmem:[%s293 + $0x98] sm:$0xf]
        %v334 = vld [vmem:[%s293 + $0x9c] sm:$0xf]
        %v335 = vld [vmem:[%s293 + $0xa0] sm:$0xf]
        %v336 = vld [vmem:[%s293 + $0xa4] sm:$0xf]
        %v337 = vld [vmem:[%s293 + $0xa8] sm:$0xf]
        %v338 = vld [vmem:[%s293 + $0xac] sm:$0xf]
        %v339 = vld [vmem:[%s293 + $0xb0] sm:$0xf]
        %v340 = vld [vmem:[%s293 + $0xb4] sm:$0xf]
        %v341 = vld [vmem:[%s293 + $0xb8] sm:$0xf]
        %v342 = vld [vmem:[%s293 + $0xbc] sm:$0xf]
        %v343 = vld [vmem:[%s293 + $0xc0] sm:$0xf]
        %v344 = vld [vmem:[%s293 + $0xc4] sm:$0xf]
        %v345 = vld [vmem:[%s293 + $0xc8] sm:$0xf]
        %v346 = vld [vmem:[%s293 + $0xcc] sm:$0xf]
        %v347 = vld [vmem:[%s293 + $0xd0] sm:$0xf]
        %v348 = vld [vmem:[%s293 + $0xd4] sm:$0xf]
        %v349 = vld [vmem:[%s293 + $0xd8] sm:$0xf]
        %v350 = vunpack.c.l.bf16 %v295
        %v351 = vunpack.c.l.bf16 %v296
        %v352 = vunpack.c.l.bf16 %v297
        %v353 = vunpack.c.l.bf16 %v298
        %v354 = vunpack.c.l.bf16 %v299
        %v355 = vunpack.c.l.bf16 %v300
        %v356 = vunpack.c.l.bf16 %v301
        %v357 = vunpack.c.l.bf16 %v302
        %v358 = vunpack.c.l.bf16 %v303
        %v359 = vunpack.c.l.bf16 %v304
        %v360 = vunpack.c.l.bf16 %v305
        %v361 = vunpack.c.l.bf16 %v306
        %v362 = vunpack.c.l.bf16 %v307
        %v363 = vunpack.c.l.bf16 %v308
        %v364 = vunpack.c.l.bf16 %v309
        %v365 = vunpack.c.l.bf16 %v310
        %v366 = vunpack.c.l.bf16 %v311
        %v367 = vunpack.c.l.bf16 %v312
        %v368 = vunpack.c.l.bf16 %v313
        %v369 = vunpack.c.l.bf16 %v314
        %v370 = vunpack.c.l.bf16 %v315
        %v371 = vunpack.c.l.bf16 %v316
        %v372 = vunpack.c.l.bf16 %v317
        %v373 = vunpack.c.l.bf16 %v318
        %v374 = vunpack.c.l.bf16 %v319
        %v375 = vunpack.c.l.bf16 %v320
        %v376 = vunpack.c.l.bf16 %v321
        %v377 = vunpack.c.l.bf16 %v322
        %v378 = vunpack.c.l.bf16 %v323
        %v379 = vunpack.c.l.bf16 %v324
        %v380 = vunpack.c.l.bf16 %v325
        %v381 = vunpack.c.l.bf16 %v326
        %v382 = vunpack.c.l.bf16 %v327
        %v383 = vunpack.c.l.bf16 %v328
        %v384 = vunpack.c.l.bf16 %v329
        %v385 = vunpack.c.l.bf16 %v330
        %v386 = vunpack.c.l.bf16 %v331
        %v387 = vunpack.c.l.bf16 %v332
        %v388 = vunpack.c.l.bf16 %v333
        %v389 = vunpack.c.l.bf16 %v334
        %v390 = vunpack.c.l.bf16 %v335
        %v391 = vunpack.c.l.bf16 %v336
        %v392 = vunpack.c.l.bf16 %v337
        %v393 = vunpack.c.l.bf16 %v338
        %v394 = vunpack.c.l.bf16 %v339
        %v395 = vunpack.c.l.bf16 %v340
        %v396 = vunpack.c.l.bf16 %v341
        %v397 = vunpack.c.l.bf16 %v342
        %v398 = vunpack.c.l.bf16 %v343
        %v399 = vunpack.c.l.bf16 %v344
        %v400 = vunpack.c.l.bf16 %v345
        %v401 = vunpack.c.l.bf16 %v346
        %v402 = vunpack.c.l.bf16 %v347
        %v403 = vunpack.c.l.bf16 %v348
        %v404 = vunpack.c.l.bf16 %v349
        %v405 = vld [vmem:[%s2] sm:$0x1]
        %v407 = vperm.slane %v405, 0
        %v409 = vmul.f32 %v350, %v407
        %v410 = vmul.f32 %v351, %v407
        %v411 = vmul.f32 %v352, %v407
        %v412 = vmul.f32 %v353, %v407
        %v413 = vmul.f32 %v354, %v407
        %v414 = vmul.f32 %v355, %v407
        %v415 = vmul.f32 %v356, %v407
        %v416 = vmul.f32 %v357, %v407
        %v417 = vmul.f32 %v358, %v407
        %v418 = vmul.f32 %v359, %v407
        %v419 = vmul.f32 %v360, %v407
        %v420 = vmul.f32 %v361, %v407
        %v421 = vmul.f32 %v362, %v407
        %v422 = vmul.f32 %v363, %v407
        %v423 = vmul.f32 %v364, %v407
        %v424 = vmul.f32 %v365, %v407
        %v425 = vmul.f32 %v366, %v407
        %v426 = vmul.f32 %v367, %v407
        %v427 = vmul.f32 %v368, %v407
        %v428 = vmul.f32 %v369, %v407
        %v429 = vmul.f32 %v370, %v407
        %v430 = vmul.f32 %v371, %v407
        %v431 = vmul.f32 %v372, %v407
        %v432 = vmul.f32 %v373, %v407
        %v433 = vmul.f32 %v374, %v407
        %v434 = vmul.f32 %v375, %v407
        %v435 = vmul.f32 %v376, %v407
        %v436 = vmul.f32 %v377, %v407
        %v437 = vmul.f32 %v378, %v407
        %v438 = vmul.f32 %v379, %v407
        %v439 = vmul.f32 %v380, %v407
        %v440 = vmul.f32 %v381, %v407
        %v441 = vmul.f32 %v382, %v407
        %v442 = vmul.f32 %v383, %v407
        %v443 = vmul.f32 %v384, %v407
        %v444 = vmul.f32 %v385, %v407
        %v445 = vmul.f32 %v386, %v407
        %v446 = vmul.f32 %v387, %v407
        %v447 = vmul.f32 %v388, %v407
        %v448 = vmul.f32 %v389, %v407
        %v449 = vmul.f32 %v390, %v407
        %v450 = vmul.f32 %v391, %v407
        %v451 = vmul.f32 %v392, %v407
        %v452 = vmul.f32 %v393, %v407
        %v453 = vmul.f32 %v394, %v407
        %v454 = vmul.f32 %v395, %v407
        %v455 = vmul.f32 %v396, %v407
        %v456 = vmul.f32 %v397, %v407
        %v457 = vmul.f32 %v398, %v407
        %v458 = vmul.f32 %v399, %v407
        %v459 = vmul.f32 %v400, %v407
        %v460 = vmul.f32 %v401, %v407
        %v461 = vmul.f32 %v402, %v407
        %v462 = vmul.f32 %v403, %v407
        %v463 = vmul.f32 %v404, %v407
        %v464 = vld [vmem:[%s3] sm:$0x1]
        %v466 = vperm.slane %v464, 0
        %v468 = vadd.f32 %v409, %v466
        %v469 = vadd.f32 %v410, %v466
        %v470 = vadd.f32 %v411, %v466
        %v471 = vadd.f32 %v412, %v466
        %v472 = vadd.f32 %v413, %v466
        %v473 = vadd.f32 %v414, %v466
        %v474 = vadd.f32 %v415, %v466
        %v475 = vadd.f32 %v416, %v466
        %v476 = vadd.f32 %v417, %v466
        %v477 = vadd.f32 %v418, %v466
        %v478 = vadd.f32 %v419, %v466
        %v479 = vadd.f32 %v420, %v466
        %v480 = vadd.f32 %v421, %v466
        %v481 = vadd.f32 %v422, %v466
        %v482 = vadd.f32 %v423, %v466
        %v483 = vadd.f32 %v424, %v466
        %v484 = vadd.f32 %v425, %v466
        %v485 = vadd.f32 %v426, %v466
        %v486 = vadd.f32 %v427, %v466
        %v487 = vadd.f32 %v428, %v466
        %v488 = vadd.f32 %v429, %v466
        %v489 = vadd.f32 %v430, %v466
        %v490 = vadd.f32 %v431, %v466
        %v491 = vadd.f32 %v432, %v466
        %v492 = vadd.f32 %v433, %v466
        %v493 = vadd.f32 %v434, %v466
        %v494 = vadd.f32 %v435, %v466
        %v495 = vadd.f32 %v436, %v466
        %v496 = vadd.f32 %v437, %v466
        %v497 = vadd.f32 %v438, %v466
        %v498 = vadd.f32 %v439, %v466
        %v499 = vadd.f32 %v440, %v466
        %v500 = vadd.f32 %v441, %v466
        %v501 = vadd.f32 %v442, %v466
        %v502 = vadd.f32 %v443, %v466
        %v503 = vadd.f32 %v444, %v466
        %v504 = vadd.f32 %v445, %v466
        %v505 = vadd.f32 %v446, %v466
        %v506 = vadd.f32 %v447, %v466
        %v507 = vadd.f32 %v448, %v466
        %v508 = vadd.f32 %v449, %v466
        %v509 = vadd.f32 %v450, %v466
        %v510 = vadd.f32 %v451, %v466
        %v511 = vadd.f32 %v452, %v466
        %v512 = vadd.f32 %v453, %v466
        %v513 = vadd.f32 %v454, %v466
        %v514 = vadd.f32 %v455, %v466
        %v515 = vadd.f32 %v456, %v466
        %v516 = vadd.f32 %v457, %v466
        %v517 = vadd.f32 %v458, %v466
        %v518 = vadd.f32 %v459, %v466
        %v519 = vadd.f32 %v460, %v466
        %v520 = vadd.f32 %v461, %v466
        %v521 = vadd.f32 %v462, %v466
        %v522 = vadd.f32 %v463, %v466
        %v523 = vmax.f32 %v468, 0.0
        %v524 = vmax.f32 %v469, 0.0
        %v525 = vmax.f32 %v470, 0.0
        %v526 = vmax.f32 %v471, 0.0
        %v527 = vmax.f32 %v472, 0.0
        %v528 = vmax.f32 %v473, 0.0
        %v529 = vmax.f32 %v474, 0.0
        %v530 = vmax.f32 %v475, 0.0
        %v531 = vmax.f32 %v476, 0.0
        %v532 = vmax.f32 %v477, 0.0
        %v533 = vmax.f32 %v478, 0.0
        %v534 = vmax.f32 %v479, 0.0
        %v535 = vmax.f32 %v480, 0.0
        %v536 = vmax.f32 %v481, 0.0
        %v537 = vmax.f32 %v482, 0.0
        %v538 = vmax.f32 %v483, 0.0
        %v539 = vmax.f32 %v484, 0.0
        %v540 = vmax.f32 %v485, 0.0
        %v541 = vmax.f32 %v486, 0.0
        %v542 = vmax.f32 %v487, 0.0
        %v543 = vmax.f32 %v488, 0.0
        %v544 = vmax.f32 %v489, 0.0
        %v545 = vmax.f32 %v490, 0.0
        %v546 = vmax.f32 %v491, 0.0
        %v547 = vmax.f32 %v492, 0.0
        %v548 = vmax.f32 %v493, 0.0
        %v549 = vmax.f32 %v494, 0.0
        %v550 = vmax.f32 %v495, 0.0
        %v551 = vmax.f32 %v496, 0.0
        %v552 = vmax.f32 %v497, 0.0
        %v553 = vmax.f32 %v498, 0.0
        %v554 = vmax.f32 %v499, 0.0
        %v555 = vmax.f32 %v500, 0.0
        %v556 = vmax.f32 %v501, 0.0
        %v557 = vmax.f32 %v502, 0.0
        %v558 = vmax.f32 %v503, 0.0
        %v559 = vmax.f32 %v504, 0.0
        %v560 = vmax.f32 %v505, 0.0
        %v561 = vmax.f32 %v506, 0.0
        %v562 = vmax.f32 %v507, 0.0
        %v563 = vmax.f32 %v508, 0.0
        %v564 = vmax.f32 %v509, 0.0
        %v565 = vmax.f32 %v510, 0.0
        %v566 = vmax.f32 %v511, 0.0
        %v567 = vmax.f32 %v512, 0.0
        %v568 = vmax.f32 %v513, 0.0
        %v569 = vmax.f32 %v514, 0.0
        %v570 = vmax.f32 %v515, 0.0
        %v571 = vmax.f32 %v516, 0.0
        %v572 = vmax.f32 %v517, 0.0
        %v573 = vmax.f32 %v518, 0.0
        %v574 = vmax.f32 %v519, 0.0
        %v575 = vmax.f32 %v520, 0.0
        %v576 = vmax.f32 %v521, 0.0
        %v577 = vmax.f32 %v522, 0.0
        %v578 = vld [vmem:[%s1] sm:$0xff]
        %v579 = vld [vmem:[%s1 + $0x8] sm:$0xff]
        %v580 = vld [vmem:[%s1 + $0x10] sm:$0xff]
        %v581 = vld [vmem:[%s1 + $0x18] sm:$0xff]
        %v582 = vld [vmem:[%s1 + $0x20] sm:$0xff]
        %v583 = vld [vmem:[%s1 + $0x28] sm:$0xff]
        %v584 = vld [vmem:[%s1 + $0x30] sm:$0xff]
        %v585 = vld [vmem:[%s1 + $0x38] sm:$0xff]
        %v586 = vld [vmem:[%s1 + $0x40] sm:$0xff]
        %v587 = vld [vmem:[%s1 + $0x48] sm:$0xff]
        %v588 = vld [vmem:[%s1 + $0x50] sm:$0xff]
        %v589 = vld [vmem:[%s1 + $0x58] sm:$0xff]
        %v590 = vld [vmem:[%s1 + $0x60] sm:$0xff]
        %v591 = vld [vmem:[%s1 + $0x68] sm:$0xff]
        %v592 = vld [vmem:[%s1 + $0x70] sm:$0xff]
        %v593 = vld [vmem:[%s1 + $0x78] sm:$0xff]
        %v594 = vld [vmem:[%s1 + $0x80] sm:$0xff]
        %v595 = vld [vmem:[%s1 + $0x88] sm:$0xff]
        %v596 = vld [vmem:[%s1 + $0x90] sm:$0xff]
        %v597 = vld [vmem:[%s1 + $0x98] sm:$0xff]
        %v598 = vld [vmem:[%s1 + $0xa0] sm:$0xff]
        %v599 = vld [vmem:[%s1 + $0xa8] sm:$0xff]
        %v600 = vld [vmem:[%s1 + $0xb0] sm:$0xff]
        %v601 = vld [vmem:[%s1 + $0xb8] sm:$0xff]
        %v602 = vld [vmem:[%s1 + $0xc0] sm:$0xff]
        %v603 = vld [vmem:[%s1 + $0xc8] sm:$0xff]
        %v604 = vld [vmem:[%s1 + $0xd0] sm:$0xff]
        %v605 = vld [vmem:[%s1 + $0xd8] sm:$0xff]
        %v606 = vld [vmem:[%s1 + $0xe0] sm:$0xff]
        %v607 = vld [vmem:[%s1 + $0xe8] sm:$0xff]
        %v608 = vld [vmem:[%s1 + $0xf0] sm:$0xff]
        %v609 = vld [vmem:[%s1 + $0xf8] sm:$0xff]
        %v610 = vld [vmem:[%s1 + $0x100] sm:$0xff]
        %v611 = vld [vmem:[%s1 + $0x108] sm:$0xff]
        %v612 = vld [vmem:[%s1 + $0x110] sm:$0xff]
        %v613 = vld [vmem:[%s1 + $0x118] sm:$0xff]
        %v614 = vld [vmem:[%s1 + $0x120] sm:$0xff]
        %v615 = vld [vmem:[%s1 + $0x128] sm:$0xff]
        %v616 = vld [vmem:[%s1 + $0x130] sm:$0xff]
        %v617 = vld [vmem:[%s1 + $0x138] sm:$0xff]
        %v618 = vld [vmem:[%s1 + $0x140] sm:$0xff]
        %v619 = vld [vmem:[%s1 + $0x148] sm:$0xff]
        %v620 = vld [vmem:[%s1 + $0x150] sm:$0xff]
        %v621 = vld [vmem:[%s1 + $0x158] sm:$0xff]
        %v622 = vld [vmem:[%s1 + $0x160] sm:$0xff]
        %v623 = vld [vmem:[%s1 + $0x168] sm:$0xff]
        %v624 = vld [vmem:[%s1 + $0x170] sm:$0xff]
        %v625 = vld [vmem:[%s1 + $0x178] sm:$0xff]
        %v626 = vld [vmem:[%s1 + $0x180] sm:$0xff]
        %v627 = vld [vmem:[%s1 + $0x188] sm:$0xff]
        %v628 = vld [vmem:[%s1 + $0x190] sm:$0xff]
        %v629 = vld [vmem:[%s1 + $0x198] sm:$0xff]
        %v630 = vld [vmem:[%s1 + $0x1a0] sm:$0xff]
        %v631 = vld [vmem:[%s1 + $0x1a8] sm:$0xff]
        %v632 = vld [vmem:[%s1 + $0x1b0] sm:$0xff]
        %634 = vset.pattern.permute.xlu0 0
        %635 = vperm.xlu0 %634, %v578
        %v636 = vpop.permute.xlu0 %635
        %639 = vset.pattern.permute.xlu0 0
        %640 = vperm.xlu0 %639, %v579
        %v641 = vpop.permute.xlu0 %640
        %644 = vset.pattern.permute.xlu0 0
        %645 = vperm.xlu0 %644, %v580
        %v646 = vpop.permute.xlu0 %645
        %649 = vset.pattern.permute.xlu0 0
        %650 = vperm.xlu0 %649, %v581
        %v651 = vpop.permute.xlu0 %650
        %654 = vset.pattern.permute.xlu0 0
        %655 = vperm.xlu0 %654, %v582
        %v656 = vpop.permute.xlu0 %655
        %659 = vset.pattern.permute.xlu0 0
        %660 = vperm.xlu0 %659, %v583
        %v661 = vpop.permute.xlu0 %660
        %664 = vset.pattern.permute.xlu0 0
        %665 = vperm.xlu0 %664, %v584
        %v666 = vpop.permute.xlu0 %665
        %669 = vset.pattern.permute.xlu0 0
        %670 = vperm.xlu0 %669, %v585
        %v671 = vpop.permute.xlu0 %670
        %674 = vset.pattern.permute.xlu0 0
        %675 = vperm.xlu0 %674, %v586
        %v676 = vpop.permute.xlu0 %675
        %679 = vset.pattern.permute.xlu0 0
        %680 = vperm.xlu0 %679, %v587
        %v681 = vpop.permute.xlu0 %680
        %684 = vset.pattern.permute.xlu0 0
        %685 = vperm.xlu0 %684, %v588
        %v686 = vpop.permute.xlu0 %685
        %689 = vset.pattern.permute.xlu0 0
        %690 = vperm.xlu0 %689, %v589
        %v691 = vpop.permute.xlu0 %690
        %694 = vset.pattern.permute.xlu0 0
        %695 = vperm.xlu0 %694, %v590
        %v696 = vpop.permute.xlu0 %695
        %699 = vset.pattern.permute.xlu0 0
        %700 = vperm.xlu0 %699, %v591
        %v701 = vpop.permute.xlu0 %700
        %704 = vset.pattern.permute.xlu0 0
        %705 = vperm.xlu0 %704, %v592
        %v706 = vpop.permute.xlu0 %705
        %709 = vset.pattern.permute.xlu0 0
        %710 = vperm.xlu0 %709, %v593
        %v711 = vpop.permute.xlu0 %710
        %714 = vset.pattern.permute.xlu0 0
        %715 = vperm.xlu0 %714, %v594
        %v716 = vpop.permute.xlu0 %715
        %719 = vset.pattern.permute.xlu0 0
        %720 = vperm.xlu0 %719, %v595
        %v721 = vpop.permute.xlu0 %720
        %724 = vset.pattern.permute.xlu0 0
        %725 = vperm.xlu0 %724, %v596
        %v726 = vpop.permute.xlu0 %725
        %729 = vset.pattern.permute.xlu0 0
        %730 = vperm.xlu0 %729, %v597
        %v731 = vpop.permute.xlu0 %730
        %734 = vset.pattern.permute.xlu0 0
        %735 = vperm.xlu0 %734, %v598
        %v736 = vpop.permute.xlu0 %735
        %739 = vset.pattern.permute.xlu0 0
        %740 = vperm.xlu0 %739, %v599
        %v741 = vpop.permute.xlu0 %740
        %744 = vset.pattern.permute.xlu0 0
        %745 = vperm.xlu0 %744, %v600
        %v746 = vpop.permute.xlu0 %745
        %749 = vset.pattern.permute.xlu0 0
        %750 = vperm.xlu0 %749, %v601
        %v751 = vpop.permute.xlu0 %750
        %754 = vset.pattern.permute.xlu0 0
        %755 = vperm.xlu0 %754, %v602
        %v756 = vpop.permute.xlu0 %755
        %759 = vset.pattern.permute.xlu0 0
        %760 = vperm.xlu0 %759, %v603
        %v761 = vpop.permute.xlu0 %760
        %764 = vset.pattern.permute.xlu0 0
        %765 = vperm.xlu0 %764, %v604
        %v766 = vpop.permute.xlu0 %765
        %769 = vset.pattern.permute.xlu0 0
        %770 = vperm.xlu0 %769, %v605
        %v771 = vpop.permute.xlu0 %770
        %774 = vset.pattern.permute.xlu0 0
        %775 = vperm.xlu0 %774, %v606
        %v776 = vpop.permute.xlu0 %775
        %779 = vset.pattern.permute.xlu0 0
        %780 = vperm.xlu0 %779, %v607
        %v781 = vpop.permute.xlu0 %780
        %784 = vset.pattern.permute.xlu0 0
        %785 = vperm.xlu0 %784, %v608
        %v786 = vpop.permute.xlu0 %785
        %789 = vset.pattern.permute.xlu0 0
        %790 = vperm.xlu0 %789, %v609
        %v791 = vpop.permute.xlu0 %790
        %794 = vset.pattern.permute.xlu0 0
        %795 = vperm.xlu0 %794, %v610
        %v796 = vpop.permute.xlu0 %795
        %799 = vset.pattern.permute.xlu0 0
        %800 = vperm.xlu0 %799, %v611
        %v801 = vpop.permute.xlu0 %800
        %804 = vset.pattern.permute.xlu0 0
        %805 = vperm.xlu0 %804, %v612
        %v806 = vpop.permute.xlu0 %805
        %809 = vset.pattern.permute.xlu0 0
        %810 = vperm.xlu0 %809, %v613
        %v811 = vpop.permute.xlu0 %810
        %814 = vset.pattern.permute.xlu0 0
        %815 = vperm.xlu0 %814, %v614
        %v816 = vpop.permute.xlu0 %815
        %819 = vset.pattern.permute.xlu0 0
        %820 = vperm.xlu0 %819, %v615
        %v821 = vpop.permute.xlu0 %820
        %824 = vset.pattern.permute.xlu0 0
        %825 = vperm.xlu0 %824, %v616
        %v826 = vpop.permute.xlu0 %825
        %829 = vset.pattern.permute.xlu0 0
        %830 = vperm.xlu0 %829, %v617
        %v831 = vpop.permute.xlu0 %830
        %834 = vset.pattern.permute.xlu0 0
        %835 = vperm.xlu0 %834, %v618
        %v836 = vpop.permute.xlu0 %835
        %839 = vset.pattern.permute.xlu0 0
        %840 = vperm.xlu0 %839, %v619
        %v841 = vpop.permute.xlu0 %840
        %844 = vset.pattern.permute.xlu0 0
        %845 = vperm.xlu0 %844, %v620
        %v846 = vpop.permute.xlu0 %845
        %849 = vset.pattern.permute.xlu0 0
        %850 = vperm.xlu0 %849, %v621
        %v851 = vpop.permute.xlu0 %850
        %854 = vset.pattern.permute.xlu0 0
        %855 = vperm.xlu0 %854, %v622
        %v856 = vpop.permute.xlu0 %855
        %859 = vset.pattern.permute.xlu0 0
        %860 = vperm.xlu0 %859, %v623
        %v861 = vpop.permute.xlu0 %860
        %864 = vset.pattern.permute.xlu0 0
        %865 = vperm.xlu0 %864, %v624
        %v866 = vpop.permute.xlu0 %865
        %869 = vset.pattern.permute.xlu0 0
        %870 = vperm.xlu0 %869, %v625
        %v871 = vpop.permute.xlu0 %870
        %874 = vset.pattern.permute.xlu0 0
        %875 = vperm.xlu0 %874, %v626
        %v876 = vpop.permute.xlu0 %875
        %879 = vset.pattern.permute.xlu0 0
        %880 = vperm.xlu0 %879, %v627
        %v881 = vpop.permute.xlu0 %880
        %884 = vset.pattern.permute.xlu0 0
        %885 = vperm.xlu0 %884, %v628
        %v886 = vpop.permute.xlu0 %885
        %889 = vset.pattern.permute.xlu0 0
        %890 = vperm.xlu0 %889, %v629
        %v891 = vpop.permute.xlu0 %890
        %894 = vset.pattern.permute.xlu0 0
        %895 = vperm.xlu0 %894, %v630
        %v896 = vpop.permute.xlu0 %895
        %899 = vset.pattern.permute.xlu0 0
        %900 = vperm.xlu0 %899, %v631
        %v901 = vpop.permute.xlu0 %900
        %904 = vset.pattern.permute.xlu0 0
        %905 = vperm.xlu0 %904, %v632
        %v906 = vpop.permute.xlu0 %905
        %v908 = vmul.f32 %v523, %v636
        %v909 = vmul.f32 %v524, %v641
        %v910 = vmul.f32 %v525, %v646
        %v911 = vmul.f32 %v526, %v651
        %v912 = vmul.f32 %v527, %v656
        %v913 = vmul.f32 %v528, %v661
        %v914 = vmul.f32 %v529, %v666
        %v915 = vmul.f32 %v530, %v671
        %v916 = vmul.f32 %v531, %v676
        %v917 = vmul.f32 %v532, %v681
        %v918 = vmul.f32 %v533, %v686
        %v919 = vmul.f32 %v534, %v691
        %v920 = vmul.f32 %v535, %v696
        %v921 = vmul.f32 %v536, %v701
        %v922 = vmul.f32 %v537, %v706
        %v923 = vmul.f32 %v538, %v711
        %v924 = vmul.f32 %v539, %v716
        %v925 = vmul.f32 %v540, %v721
        %v926 = vmul.f32 %v541, %v726
        %v927 = vmul.f32 %v542, %v731
        %v928 = vmul.f32 %v543, %v736
        %v929 = vmul.f32 %v544, %v741
        %v930 = vmul.f32 %v545, %v746
        %v931 = vmul.f32 %v546, %v751
        %v932 = vmul.f32 %v547, %v756
        %v933 = vmul.f32 %v548, %v761
        %v934 = vmul.f32 %v549, %v766
        %v935 = vmul.f32 %v550, %v771
        %v936 = vmul.f32 %v551, %v776
        %v937 = vmul.f32 %v552, %v781
        %v938 = vmul.f32 %v553, %v786
        %v939 = vmul.f32 %v554, %v791
        %v940 = vmul.f32 %v555, %v796
        %v941 = vmul.f32 %v556, %v801
        %v942 = vmul.f32 %v557, %v806
        %v943 = vmul.f32 %v558, %v811
        %v944 = vmul.f32 %v559, %v816
        %v945 = vmul.f32 %v560, %v821
        %v946 = vmul.f32 %v561, %v826
        %v947 = vmul.f32 %v562, %v831
        %v948 = vmul.f32 %v563, %v836
        %v949 = vmul.f32 %v564, %v841
        %v950 = vmul.f32 %v565, %v846
        %v951 = vmul.f32 %v566, %v851
        %v952 = vmul.f32 %v567, %v856
        %v953 = vmul.f32 %v568, %v861
        %v954 = vmul.f32 %v569, %v866
        %v955 = vmul.f32 %v570, %v871
        %v956 = vmul.f32 %v571, %v876
        %v957 = vmul.f32 %v572, %v881
        %v958 = vmul.f32 %v573, %v886
        %v959 = vmul.f32 %v574, %v891
        %v960 = vmul.f32 %v575, %v896
        %v961 = vmul.f32 %v576, %v901
        %v962 = vmul.f32 %v577, %v906
        %v963 = vpack.c.bf16 %v908, %v908
        %v964 = vpack.c.bf16 %v909, %v909
        %v965 = vpack.c.bf16 %v910, %v910
        %v966 = vpack.c.bf16 %v911, %v911
        %v967 = vpack.c.bf16 %v912, %v912
        %v968 = vpack.c.bf16 %v913, %v913
        %v969 = vpack.c.bf16 %v914, %v914
        %v970 = vpack.c.bf16 %v915, %v915
        %v971 = vpack.c.bf16 %v916, %v916
        %v972 = vpack.c.bf16 %v917, %v917
        %v973 = vpack.c.bf16 %v918, %v918
        %v974 = vpack.c.bf16 %v919, %v919
        %v975 = vpack.c.bf16 %v920, %v920
        %v976 = vpack.c.bf16 %v921, %v921
        %v977 = vpack.c.bf16 %v922, %v922
        %v978 = vpack.c.bf16 %v923, %v923
        %v979 = vpack.c.bf16 %v924, %v924
        %v980 = vpack.c.bf16 %v925, %v925
        %v981 = vpack.c.bf16 %v926, %v926
        %v982 = vpack.c.bf16 %v927, %v927
        %v983 = vpack.c.bf16 %v928, %v928
        %v984 = vpack.c.bf16 %v929, %v929
        %v985 = vpack.c.bf16 %v930, %v930
        %v986 = vpack.c.bf16 %v931, %v931
        %v987 = vpack.c.bf16 %v932, %v932
        %v988 = vpack.c.bf16 %v933, %v933
        %v989 = vpack.c.bf16 %v934, %v934
        %v990 = vpack.c.bf16 %v935, %v935
        %v991 = vpack.c.bf16 %v936, %v936
        %v992 = vpack.c.bf16 %v937, %v937
        %v993 = vpack.c.bf16 %v938, %v938
        %v994 = vpack.c.bf16 %v939, %v939
        %v995 = vpack.c.bf16 %v940, %v940
        %v996 = vpack.c.bf16 %v941, %v941
        %v997 = vpack.c.bf16 %v942, %v942
        %v998 = vpack.c.bf16 %v943, %v943
        %v999 = vpack.c.bf16 %v944, %v944
        %v1000 = vpack.c.bf16 %v945, %v945
        %v1001 = vpack.c.bf16 %v946, %v946
        %v1002 = vpack.c.bf16 %v947, %v947
        %v1003 = vpack.c.bf16 %v948, %v948
        %v1004 = vpack.c.bf16 %v949, %v949
        %v1005 = vpack.c.bf16 %v950, %v950
        %v1006 = vpack.c.bf16 %v951, %v951
        %v1007 = vpack.c.bf16 %v952, %v952
        %v1008 = vpack.c.bf16 %v953, %v953
        %v1009 = vpack.c.bf16 %v954, %v954
        %v1010 = vpack.c.bf16 %v955, %v955
        %v1011 = vpack.c.bf16 %v956, %v956
        %v1012 = vpack.c.bf16 %v957, %v957
        %v1013 = vpack.c.bf16 %v958, %v958
        %v1014 = vpack.c.bf16 %v959, %v959
        %v1015 = vpack.c.bf16 %v960, %v960
        %v1016 = vpack.c.bf16 %v961, %v961
        %v1017 = vpack.c.bf16 %v962, %v962
        %1018 = vst [vmem:[#allocation2] sm:$0xf] %v963
        %1019 = vst [vmem:[#allocation2 + $0x4] sm:$0xf] %v964
        %1020 = vst [vmem:[#allocation2 + $0x8] sm:$0xf] %v965
        %1021 = vst [vmem:[#allocation2 + $0xc] sm:$0xf] %v966
        %1022 = vst [vmem:[#allocation2 + $0x10] sm:$0xf] %v967
        %1023 = vst [vmem:[#allocation2 + $0x14] sm:$0xf] %v968
        %1024 = vst [vmem:[#allocation2 + $0x18] sm:$0xf] %v969
        %1025 = vst [vmem:[#allocation2 + $0x1c] sm:$0xf] %v970
        %1026 = vst [vmem:[#allocation2 + $0x20] sm:$0xf] %v971
        %1027 = vst [vmem:[#allocation2 + $0x24] sm:$0xf] %v972
        %1028 = vst [vmem:[#allocation2 + $0x28] sm:$0xf] %v973
        %1029 = vst [vmem:[#allocation2 + $0x2c] sm:$0xf] %v974
        %1030 = vst [vmem:[#allocation2 + $0x30] sm:$0xf] %v975
        %1031 = vst [vmem:[#allocation2 + $0x34] sm:$0xf] %v976
        %1032 = vst [vmem:[#allocation2 + $0x38] sm:$0xf] %v977
        %1033 = vst [vmem:[#allocation2 + $0x3c] sm:$0xf] %v978
        %1034 = vst [vmem:[#allocation2 + $0x40] sm:$0xf] %v979
        %1035 = vst [vmem:[#allocation2 + $0x44] sm:$0xf] %v980
        %1036 = vst [vmem:[#allocation2 + $0x48] sm:$0xf] %v981
        %1037 = vst [vmem:[#allocation2 + $0x4c] sm:$0xf] %v982
        %1038 = vst [vmem:[#allocation2 + $0x50] sm:$0xf] %v983
        %1039 = vst [vmem:[#allocation2 + $0x54] sm:$0xf] %v984
        %1040 = vst [vmem:[#allocation2 + $0x58] sm:$0xf] %v985
        %1041 = vst [vmem:[#allocation2 + $0x5c] sm:$0xf] %v986
        %1042 = vst [vmem:[#allocation2 + $0x60] sm:$0xf] %v987
        %1043 = vst [vmem:[#allocation2 + $0x64] sm:$0xf] %v988
        %1044 = vst [vmem:[#allocation2 + $0x68] sm:$0xf] %v989
        %1045 = vst [vmem:[#allocation2 + $0x6c] sm:$0xf] %v990
        %1046 = vst [vmem:[#allocation2 + $0x70] sm:$0xf] %v991
        %1047 = vst [vmem:[#allocation2 + $0x74] sm:$0xf] %v992
        %1048 = vst [vmem:[#allocation2 + $0x78] sm:$0xf] %v993
        %1049 = vst [vmem:[#allocation2 + $0x7c] sm:$0xf] %v994
        %1050 = vst [vmem:[#allocation2 + $0x80] sm:$0xf] %v995
        %1051 = vst [vmem:[#allocation2 + $0x84] sm:$0xf] %v996
        %1052 = vst [vmem:[#allocation2 + $0x88] sm:$0xf] %v997
        %1053 = vst [vmem:[#allocation2 + $0x8c] sm:$0xf] %v998
        %1054 = vst [vmem:[#allocation2 + $0x90] sm:$0xf] %v999
        %1055 = vst [vmem:[#allocation2 + $0x94] sm:$0xf] %v1000
        %1056 = vst [vmem:[#allocation2 + $0x98] sm:$0xf] %v1001
        %1057 = vst [vmem:[#allocation2 + $0x9c] sm:$0xf] %v1002
        %1058 = vst [vmem:[#allocation2 + $0xa0] sm:$0xf] %v1003
        %1059 = vst [vmem:[#allocation2 + $0xa4] sm:$0xf] %v1004
        %1060 = vst [vmem:[#allocation2 + $0xa8] sm:$0xf] %v1005
        %1061 = vst [vmem:[#allocation2 + $0xac] sm:$0xf] %v1006
        %1062 = vst [vmem:[#allocation2 + $0xb0] sm:$0xf] %v1007
        %1063 = vst [vmem:[#allocation2 + $0xb4] sm:$0xf] %v1008
        %1064 = vst [vmem:[#allocation2 + $0xb8] sm:$0xf] %v1009
        %1065 = vst [vmem:[#allocation2 + $0xbc] sm:$0xf] %v1010
        %1066 = vst [vmem:[#allocation2 + $0xc0] sm:$0xf] %v1011
        %1067 = vst [vmem:[#allocation2 + $0xc4] sm:$0xf] %v1012
        %1068 = vst [vmem:[#allocation2 + $0xc8] sm:$0xf] %v1013
        %1069 = vst [vmem:[#allocation2 + $0xcc] sm:$0xf] %v1014
        %1070 = vst [vmem:[#allocation2 + $0xd0] sm:$0xf] %v1015
        %1071 = vst [vmem:[#allocation2 + $0xd4] sm:$0xf] %v1016
        %1072 = vst [vmem:[#allocation2 + $0xd8] sm:$0xf] %v1017
        %v1073 = vld [vmem:[#allocation2 + $0x4] sm:$0xf]
        %v1074 = vld [vmem:[#allocation2 + $0x8] sm:$0xf]
        %v1075 = vld [vmem:[#allocation2 + $0xc] sm:$0xf]
        %v1076 = vld [vmem:[#allocation2 + $0x10] sm:$0xf]
        %v1077 = vld [vmem:[#allocation2 + $0x14] sm:$0xf]
        %v1078 = vld [vmem:[#allocation2 + $0x18] sm:$0xf]
        %v1079 = vld [vmem:[#allocation2 + $0x1c] sm:$0xf]
        %v1080 = vld [vmem:[#allocation2 + $0x20] sm:$0xf]
        %v1081 = vld [vmem:[#allocation2 + $0x24] sm:$0xf]
        %v1082 = vld [vmem:[#allocation2 + $0x28] sm:$0xf]
        %v1083 = vld [vmem:[#allocation2 + $0x2c] sm:$0x1]
        %v1084 = vld [vmem:[#allocation3] sm:$0xf]
        %v1085 = vld [vmem:[#allocation3 + $0x4] sm:$0xf]
        %v1086 = vld [vmem:[#allocation3 + $0x8] sm:$0xf]
        %v1087 = vld [vmem:[#allocation3 + $0xc] sm:$0xf]
        %v1088 = vld [vmem:[#allocation3 + $0x10] sm:$0xf]
        %v1089 = vld [vmem:[#allocation3 + $0x14] sm:$0xf]
        %v1090 = vld [vmem:[#allocation3 + $0x18] sm:$0xf]
        %v1091 = vld [vmem:[#allocation3 + $0x1c] sm:$0xf]
        %v1092 = vld [vmem:[#allocation3 + $0x20] sm:$0xf]
        %v1093 = vld [vmem:[#allocation3 + $0x24] sm:$0xf]
        %v1094 = vld [vmem:[#allocation3 + $0x28] sm:$0xf]
        %v1095 = vld [vmem:[#allocation3 + $0x2c] sm:$0xf]
        %v1096 = vld [vmem:[#allocation3 + $0x30] sm:$0xf]
        %v1097 = vld [vmem:[#allocation3 + $0x34] sm:$0xf]
        %v1098 = vld [vmem:[#allocation3 + $0x38] sm:$0xf]
        %v1099 = vld [vmem:[#allocation3 + $0x3c] sm:$0xf]
        %v1100 = vld [vmem:[#allocation2 + $0x38] sm:$0x8]
        %v1101 = vld [vmem:[#allocation2 + $0x3c] sm:$0xf]
        %v1102 = vld [vmem:[#allocation2 + $0x40] sm:$0xf]
        %v1103 = vld [vmem:[#allocation2 + $0x44] sm:$0xf]
        %v1104 = vld [vmem:[#allocation2 + $0x48] sm:$0xf]
        %v1105 = vld [vmem:[#allocation2 + $0x4c] sm:$0xf]
        %v1106 = vld [vmem:[#allocation2 + $0x50] sm:$0xf]
        %v1107 = vld [vmem:[#allocation2 + $0x54] sm:$0xf]
        %v1108 = vld [vmem:[#allocation2 + $0x58] sm:$0xf]
        %v1109 = vld [vmem:[#allocation2 + $0x5c] sm:$0xf]
        %v1110 = vld [vmem:[#allocation2 + $0x60] sm:$0xf]
        %s1111 = scalar_lea.vmem [#allocation3], 64
        %v1112 = vld [vmem:[%s1111] sm:$0xf]
        %v1113 = vld [vmem:[%s1111 + $0x4] sm:$0xf]
        %v1114 = vld [vmem:[%s1111 + $0x8] sm:$0xf]
        %v1115 = vld [vmem:[%s1111 + $0xc] sm:$0xf]
        %v1116 = vld [vmem:[%s1111 + $0x10] sm:$0xf]
        %v1117 = vld [vmem:[%s1111 + $0x14] sm:$0xf]
        %v1118 = vld [vmem:[%s1111 + $0x18] sm:$0xf]
        %v1119 = vld [vmem:[%s1111 + $0x1c] sm:$0xf]
        %v1120 = vld [vmem:[%s1111 + $0x20] sm:$0xf]
        %v1121 = vld [vmem:[%s1111 + $0x24] sm:$0xf]
        %v1122 = vld [vmem:[%s1111 + $0x28] sm:$0xf]
        %v1123 = vld [vmem:[%s1111 + $0x2c] sm:$0xf]
        %v1124 = vld [vmem:[%s1111 + $0x30] sm:$0xf]
        %v1125 = vld [vmem:[%s1111 + $0x34] sm:$0xf]
        %v1126 = vld [vmem:[%s1111 + $0x38] sm:$0xf]
        %v1127 = vld [vmem:[%s1111 + $0x3c] sm:$0xf]
        %v1139 = vunpack.c.l.b16 %v1100
        %v1140 = vunpack.c.l.b16 %v1101
        %v1141 = vunpack.c.l.b16 %v1102
        %v1142 = vunpack.c.l.b16 %v1103
        %v1143 = vunpack.c.l.b16 %v1104
        %v1144 = vunpack.c.l.b16 %v1105
        %v1145 = vunpack.c.l.b16 %v1106
        %v1146 = vunpack.c.l.b16 %v1107
        %v1147 = vunpack.c.l.b16 %v1108
        %v1148 = vunpack.c.l.b16 %v1109
        %v1149 = vunpack.c.l.b16 %v1110
        %v1150 = vpack.c.b16 %v1140, %v1139
        %v1151 = vpack.c.b16 %v1142, %v1141
        %v1152 = vpack.c.b16 %v1144, %v1143
        %v1153 = vpack.c.b16 %v1146, %v1145
        %v1154 = vpack.c.b16 %v1148, %v1147
        %v1155 = vpack.c.b16 %v1149, %v1149
        %vm1156 = vsmask.f32 4352
        %v1158 = vshrl.u32 %v1150, 16
        %v1160 = vrot.slane %v1158, 3
        %v1161 = vshll.u32 %v1150, 16
        %v1163 = vrot.slane %v1161, 4
        %v1164 = vor.u32 %v1160, %v1163
        %v1166 = vshrl.u32 %v1151, 16
        %v1168 = vrot.slane %v1166, 3
        %v1169 = vshll.u32 %v1151, 16
        %v1171 = vrot.slane %v1169, 4
        %v1172 = vor.u32 %v1168, %v1171
        %v1173 = vsel %vm1156, %v1164, %v1172
        %v1175 = vshrl.u32 %v1152, 16
        %v1177 = vrot.slane %v1175, 3
        %v1178 = vshll.u32 %v1152, 16
        %v1180 = vrot.slane %v1178, 4
        %v1181 = vor.u32 %v1177, %v1180
        %v1182 = vsel %vm1156, %v1172, %v1181
        %v1184 = vshrl.u32 %v1153, 16
        %v1186 = vrot.slane %v1184, 3
        %v1187 = vshll.u32 %v1153, 16
        %v1189 = vrot.slane %v1187, 4
        %v1190 = vor.u32 %v1186, %v1189
        %v1191 = vsel %vm1156, %v1181, %v1190
        %v1193 = vshrl.u32 %v1154, 16
        %v1195 = vrot.slane %v1193, 3
        %v1196 = vshll.u32 %v1154, 16
        %v1198 = vrot.slane %v1196, 4
        %v1199 = vor.u32 %v1195, %v1198
        %v1200 = vsel %vm1156, %v1190, %v1199
        %v1202 = vshrl.u32 %v1155, 16
        %v1204 = vrot.slane %v1202, 3
        %v1205 = vshll.u32 %v1155, 16
        %v1207 = vrot.slane %v1205, 4
        %v1208 = vor.u32 %v1204, %v1207
        %v1209 = vsel %vm1156, %v1199, %v1208
        %v1231 = vunpack.c.l.b16 %v1112
        %v1232 = vunpack.c.l.b16 %v1113
        %v1233 = vunpack.c.l.b16 %v1114
        %v1234 = vunpack.c.l.b16 %v1115
        %v1235 = vunpack.c.l.b16 %v1116
        %v1236 = vunpack.c.l.b16 %v1117
        %v1237 = vunpack.c.l.b16 %v1118
        %v1238 = vunpack.c.l.b16 %v1119
        %v1239 = vunpack.c.l.b16 %v1120
        %v1240 = vunpack.c.l.b16 %v1121
        %v1241 = vunpack.c.l.b16 %v1122
        %v1242 = vunpack.c.l.b16 %v1123
        %v1243 = vunpack.c.l.b16 %v1124
        %v1244 = vunpack.c.l.b16 %v1125
        %v1245 = vunpack.c.l.b16 %v1126
        %v1246 = vunpack.c.l.b16 %v1127
        %v1247 = vpack.c.b16 %v1232, %v1231
        %v1248 = vpack.c.b16 %v1234, %v1233
        %v1249 = vpack.c.b16 %v1236, %v1235
        %v1250 = vpack.c.b16 %v1238, %v1237
        %v1251 = vpack.c.b16 %v1240, %v1239
        %v1252 = vpack.c.b16 %v1242, %v1241
        %v1253 = vpack.c.b16 %v1244, %v1243
        %v1254 = vpack.c.b16 %v1246, %v1245
        %1263 = vmatpush.bf16.msra.mxu0 %v1254
        %1264 = vmatpush.bf16.msra.mxu0 %v1253
        %1265 = vmatpush.bf16.msra.mxu0 %v1252
        %1266 = vmatpush.bf16.msra.mxu0 %v1251
        %1267 = vmatpush.bf16.msra.mxu0 %v1250
        %1268 = vmatpush.bf16.msra.mxu0 %v1249
        %1269 = vmatpush.bf16.msra.mxu0 %v1248
        %1270 = vmatpush.bf16.msra.mxu0 %v1247
        %1271 = vmatmul.bf16.gmra.mxu0 %v1173
        %v1272 = vpop.f32.mrf.mxu0
        %v1273 = vadd.f32 0.0, %v1272
        %v1274 = vpop.f32.mrf.mxu0
        %v1275 = vadd.f32 0.0, %v1274
        %1276 = vmatmul.bf16.gmra.mxu0 %v1182
        %v1277 = vpop.f32.mrf.mxu0
        %v1278 = vadd.f32 0.0, %v1277
        %v1279 = vpop.f32.mrf.mxu0
        %v1280 = vadd.f32 0.0, %v1279
        %1281 = vmatmul.bf16.gmra.mxu0 %v1191
        %v1282 = vpop.f32.mrf.mxu0
        %v1283 = vadd.f32 0.0, %v1282
        %v1284 = vpop.f32.mrf.mxu0
        %v1285 = vadd.f32 0.0, %v1284
        %1286 = vmatmul.bf16.gmra.mxu0 %v1200
        %v1287 = vpop.f32.mrf.mxu0
        %v1288 = vadd.f32 0.0, %v1287
        %v1289 = vpop.f32.mrf.mxu0
        %v1290 = vadd.f32 0.0, %v1289
        %1291 = vmatmul.bf16.gmra.mxu0 %v1209
        %v1292 = vpop.f32.mrf.mxu0
        %v1293 = vadd.f32 0.0, %v1292
        %v1294 = vpop.f32.mrf.mxu0
        %v1295 = vadd.f32 0.0, %v1294
        %1296 = vdwg.mxu0
        %v1308 = vunpack.c.l.b16 %v1073
        %v1309 = vunpack.c.l.b16 %v1074
        %v1310 = vunpack.c.l.b16 %v1075
        %v1311 = vunpack.c.l.b16 %v1076
        %v1312 = vunpack.c.l.b16 %v1077
        %v1313 = vunpack.c.l.b16 %v1078
        %v1314 = vunpack.c.l.b16 %v1079
        %v1315 = vunpack.c.l.b16 %v1080
        %v1316 = vunpack.c.l.b16 %v1081
        %v1317 = vunpack.c.l.b16 %v1082
        %v1318 = vunpack.c.l.b16 %v1083
        %v1319 = vpack.c.b16 %v1309, %v1308
        %v1320 = vpack.c.b16 %v1311, %v1310
        %v1321 = vpack.c.b16 %v1313, %v1312
        %v1322 = vpack.c.b16 %v1315, %v1314
        %v1323 = vpack.c.b16 %v1317, %v1316
        %v1324 = vpack.c.b16 %v1318, %v1318
        %vm1325 = vsmask.f32 7424
        %v1327 = vshrl.u32 %v1319, 16
        %v1329 = vshll.u32 %v1319, 16
        %v1331 = vrot.slane %v1329, 1
        %v1332 = vor.u32 %v1327, %v1331
        %v1334 = vshll.u32 %v1320, 16
        %v1336 = vrot.slane %v1334, 1
        %v1337 = vsel %vm1325, %v1332, %v1336
        %v1338 = vshrl.u32 %v1320, 16
        %v1340 = vor.u32 %v1338, %v1336
        %v1342 = vshll.u32 %v1321, 16
        %v1344 = vrot.slane %v1342, 1
        %v1345 = vsel %vm1325, %v1340, %v1344
        %v1346 = vshrl.u32 %v1321, 16
        %v1348 = vor.u32 %v1346, %v1344
        %v1350 = vshll.u32 %v1322, 16
        %v1352 = vrot.slane %v1350, 1
        %v1353 = vsel %vm1325, %v1348, %v1352
        %v1354 = vshrl.u32 %v1322, 16
        %v1356 = vor.u32 %v1354, %v1352
        %v1358 = vshll.u32 %v1323, 16
        %v1360 = vrot.slane %v1358, 1
        %v1361 = vsel %vm1325, %v1356, %v1360
        %v1362 = vshrl.u32 %v1323, 16
        %v1364 = vor.u32 %v1362, %v1360
        %v1366 = vshll.u32 %v1324, 16
        %v1368 = vrot.slane %v1366, 1
        %v1369 = vsel %vm1325, %v1364, %v1368
        %v1391 = vunpack.c.l.b16 %v1084
        %v1392 = vunpack.c.l.b16 %v1085
        %v1393 = vunpack.c.l.b16 %v1086
        %v1394 = vunpack.c.l.b16 %v1087
        %v1395 = vunpack.c.l.b16 %v1088
        %v1396 = vunpack.c.l.b16 %v1089
        %v1397 = vunpack.c.l.b16 %v1090
        %v1398 = vunpack.c.l.b16 %v1091
        %v1399 = vunpack.c.l.b16 %v1092
        %v1400 = vunpack.c.l.b16 %v1093
        %v1401 = vunpack.c.l.b16 %v1094
        %v1402 = vunpack.c.l.b16 %v1095
        %v1403 = vunpack.c.l.b16 %v1096
        %v1404 = vunpack.c.l.b16 %v1097
        %v1405 = vunpack.c.l.b16 %v1098
        %v1406 = vunpack.c.l.b16 %v1099
        %v1407 = vpack.c.b16 %v1392, %v1391
        %v1408 = vpack.c.b16 %v1394, %v1393
        %v1409 = vpack.c.b16 %v1396, %v1395
        %v1410 = vpack.c.b16 %v1398, %v1397
        %v1411 = vpack.c.b16 %v1400, %v1399
        %v1412 = vpack.c.b16 %v1402, %v1401
        %v1413 = vpack.c.b16 %v1404, %v1403
        %v1414 = vpack.c.b16 %v1406, %v1405
        %1423 = vmatpush.bf16.msra.mxu0 %v1414
        %1424 = vmatpush.bf16.msra.mxu0 %v1413
        %1425 = vmatpush.bf16.msra.mxu0 %v1412
        %1426 = vmatpush.bf16.msra.mxu0 %v1411
        %1427 = vmatpush.bf16.msra.mxu0 %v1410
        %1428 = vmatpush.bf16.msra.mxu0 %v1409
        %1429 = vmatpush.bf16.msra.mxu0 %v1408
        %1430 = vmatpush.bf16.msra.mxu0 %v1407
        %1431 = vmatmul.bf16.gmra.mxu0 %v1337
        %v1432 = vpop.f32.mrf.mxu0
        %v1433 = vadd.f32 %v1273, %v1432
        %v1434 = vpop.f32.mrf.mxu0
        %v1435 = vadd.f32 %v1275, %v1434
        %1436 = vmatmul.bf16.gmra.mxu0 %v1345
        %v1437 = vpop.f32.mrf.mxu0
        %v1438 = vadd.f32 %v1278, %v1437
        %v1439 = vpop.f32.mrf.mxu0
        %v1440 = vadd.f32 %v1280, %v1439
        %1441 = vmatmul.bf16.gmra.mxu0 %v1353
        %v1442 = vpop.f32.mrf.mxu0
        %v1443 = vadd.f32 %v1283, %v1442
        %v1444 = vpop.f32.mrf.mxu0
        %v1445 = vadd.f32 %v1285, %v1444
        %1446 = vmatmul.bf16.gmra.mxu0 %v1361
        %v1447 = vpop.f32.mrf.mxu0
        %v1448 = vadd.f32 %v1288, %v1447
        %v1449 = vpop.f32.mrf.mxu0
        %v1450 = vadd.f32 %v1290, %v1449
        %1451 = vmatmul.bf16.gmra.mxu0 %v1369
        %v1452 = vpop.f32.mrf.mxu0
        %v1453 = vadd.f32 %v1293, %v1452
        %v1454 = vpop.f32.mrf.mxu0
        %v1455 = vadd.f32 %v1295, %v1454
        %1456 = vdwg.mxu0
        %v1457 = vld [vmem:[#allocation2 + $0x4] sm:$0xe]
        %s1458 = scalar_lea.vmem [#allocation3], 128
        %v1459 = vld [vmem:[%s1458] sm:$0xf]
        %v1460 = vld [vmem:[%s1458 + $0x4] sm:$0xf]
        %v1461 = vld [vmem:[%s1458 + $0x8] sm:$0xf]
        %v1462 = vld [vmem:[%s1458 + $0xc] sm:$0xf]
        %v1463 = vld [vmem:[%s1458 + $0x10] sm:$0xf]
        %v1464 = vld [vmem:[%s1458 + $0x14] sm:$0xf]
        %v1465 = vld [vmem:[%s1458 + $0x18] sm:$0xf]
        %v1466 = vld [vmem:[%s1458 + $0x1c] sm:$0xf]
        %v1467 = vld [vmem:[%s1458 + $0x20] sm:$0xf]
        %v1468 = vld [vmem:[%s1458 + $0x24] sm:$0xf]
        %v1469 = vld [vmem:[%s1458 + $0x28] sm:$0xf]
        %v1470 = vld [vmem:[%s1458 + $0x2c] sm:$0xf]
        %v1471 = vld [vmem:[%s1458 + $0x30] sm:$0xf]
        %v1472 = vld [vmem:[%s1458 + $0x34] sm:$0xf]
        %v1473 = vld [vmem:[%s1458 + $0x38] sm:$0xf]
        %v1474 = vld [vmem:[%s1458 + $0x3c] sm:$0xf]
        %v1476 = vunpack.c.l.b16 %v1457
        %v1477 = vpack.c.b16 %v1309, %v1476
        %vm1478 = vcmask 1046528
        %v1479 = vrot.slane %v1477, 1
        %v1480 = vrot.slane %v1320, 1
        %v1481 = vsel %vm1478, %v1479, %v1480
        %v1482 = vrot.slane %v1321, 1
        %v1483 = vsel %vm1478, %v1480, %v1482
        %v1484 = vrot.slane %v1322, 1
        %v1485 = vsel %vm1478, %v1482, %v1484
        %v1486 = vrot.slane %v1323, 1
        %v1487 = vsel %vm1478, %v1484, %v1486
        %v1488 = vrot.slane %v1324, 1
        %v1489 = vsel %vm1478, %v1486, %v1488
        %v1511 = vunpack.c.l.b16 %v1459
        %v1512 = vunpack.c.l.b16 %v1460
        %v1513 = vunpack.c.l.b16 %v1461
        %v1514 = vunpack.c.l.b16 %v1462
        %v1515 = vunpack.c.l.b16 %v1463
        %v1516 = vunpack.c.l.b16 %v1464
        %v1517 = vunpack.c.l.b16 %v1465
        %v1518 = vunpack.c.l.b16 %v1466
        %v1519 = vunpack.c.l.b16 %v1467
        %v1520 = vunpack.c.l.b16 %v1468
        %v1521 = vunpack.c.l.b16 %v1469
        %v1522 = vunpack.c.l.b16 %v1470
        %v1523 = vunpack.c.l.b16 %v1471
        %v1524 = vunpack.c.l.b16 %v1472
        %v1525 = vunpack.c.l.b16 %v1473
        %v1526 = vunpack.c.l.b16 %v1474
        %v1527 = vpack.c.b16 %v1512, %v1511
        %v1528 = vpack.c.b16 %v1514, %v1513
        %v1529 = vpack.c.b16 %v1516, %v1515
        %v1530 = vpack.c.b16 %v1518, %v1517
        %v1531 = vpack.c.b16 %v1520, %v1519
        %v1532 = vpack.c.b16 %v1522, %v1521
        %v1533 = vpack.c.b16 %v1524, %v1523
        %v1534 = vpack.c.b16 %v1526, %v1525
        %1543 = vmatpush.bf16.msra.mxu0 %v1534
        %1544 = vmatpush.bf16.msra.mxu0 %v1533
        %1545 = vmatpush.bf16.msra.mxu0 %v1532
        %1546 = vmatpush.bf16.msra.mxu0 %v1531
        %1547 = vmatpush.bf16.msra.mxu0 %v1530
        %1548 = vmatpush.bf16.msra.mxu0 %v1529
        %1549 = vmatpush.bf16.msra.mxu0 %v1528
        %1550 = vmatpush.bf16.msra.mxu0 %v1527
        %1551 = vmatmul.bf16.gmra.mxu0 %v1481
        %v1552 = vpop.f32.mrf.mxu0
        %v1553 = vadd.f32 0.0, %v1552
        %v1554 = vpop.f32.mrf.mxu0
        %v1555 = vadd.f32 0.0, %v1554
        %1556 = vmatmul.bf16.gmra.mxu0 %v1483
        %v1557 = vpop.f32.mrf.mxu0
        %v1558 = vadd.f32 0.0, %v1557
        %v1559 = vpop.f32.mrf.mxu0
        %v1560 = vadd.f32 0.0, %v1559
        %1561 = vmatmul.bf16.gmra.mxu0 %v1485
        %v1562 = vpop.f32.mrf.mxu0
        %v1563 = vadd.f32 0.0, %v1562
        %v1564 = vpop.f32.mrf.mxu0
        %v1565 = vadd.f32 0.0, %v1564
        %1566 = vmatmul.bf16.gmra.mxu0 %v1487
        %v1567 = vpop.f32.mrf.mxu0
        %v1568 = vadd.f32 0.0, %v1567
        %v1569 = vpop.f32.mrf.mxu0
        %v1570 = vadd.f32 0.0, %v1569
        %1571 = vmatmul.bf16.gmra.mxu0 %v1489
        %v1572 = vpop.f32.mrf.mxu0
        %v1573 = vadd.f32 0.0, %v1572
        %v1574 = vpop.f32.mrf.mxu0
        %v1575 = vadd.f32 0.0, %v1574
        %1576 = vdwg.mxu0
        %v1577 = vadd.f32 %v1433, %v1553
        %v1578 = vadd.f32 %v1435, %v1555
        %v1579 = vadd.f32 %v1438, %v1558
        %v1580 = vadd.f32 %v1440, %v1560
        %v1581 = vadd.f32 %v1443, %v1563
        %v1582 = vadd.f32 %v1445, %v1565
        %v1583 = vadd.f32 %v1448, %v1568
        %v1584 = vadd.f32 %v1450, %v1570
        %v1585 = vadd.f32 %v1453, %v1573
        %v1586 = vadd.f32 %v1455, %v1575
        %v1587 = vld [vmem:[#allocation2 + $0x70] sm:$0xc]
        %v1588 = vld [vmem:[#allocation2 + $0x74] sm:$0xf]
        %v1589 = vld [vmem:[#allocation2 + $0x78] sm:$0xf]
        %v1590 = vld [vmem:[#allocation2 + $0x7c] sm:$0xf]
        %v1591 = vld [vmem:[#allocation2 + $0x80] sm:$0xf]
        %v1592 = vld [vmem:[#allocation2 + $0x84] sm:$0xf]
        %v1593 = vld [vmem:[#allocation2 + $0x88] sm:$0xf]
        %v1594 = vld [vmem:[#allocation2 + $0x8c] sm:$0xf]
        %v1595 = vld [vmem:[#allocation2 + $0x90] sm:$0xf]
        %v1596 = vld [vmem:[#allocation2 + $0x94] sm:$0xf]
        %v1597 = vld [vmem:[#allocation2 + $0x98] sm:$0x7]
        %s1598 = scalar_lea.vmem [#allocation3], 192
        %v1599 = vld [vmem:[%s1598] sm:$0xf]
        %v1600 = vld [vmem:[%s1598 + $0x4] sm:$0xf]
        %v1601 = vld [vmem:[%s1598 + $0x8] sm:$0xf]
        %v1602 = vld [vmem:[%s1598 + $0xc] sm:$0xf]
        %v1603 = vld [vmem:[%s1598 + $0x10] sm:$0xf]
        %v1604 = vld [vmem:[%s1598 + $0x14] sm:$0xf]
        %v1605 = vld [vmem:[%s1598 + $0x18] sm:$0xf]
        %v1606 = vld [vmem:[%s1598 + $0x1c] sm:$0xf]
        %v1607 = vld [vmem:[%s1598 + $0x20] sm:$0xf]
        %v1608 = vld [vmem:[%s1598 + $0x24] sm:$0xf]
        %v1609 = vld [vmem:[%s1598 + $0x28] sm:$0xf]
        %v1610 = vld [vmem:[%s1598 + $0x2c] sm:$0xf]
        %v1611 = vld [vmem:[%s1598 + $0x30] sm:$0xf]
        %v1612 = vld [vmem:[%s1598 + $0x34] sm:$0xf]
        %v1613 = vld [vmem:[%s1598 + $0x38] sm:$0xf]
        %v1614 = vld [vmem:[%s1598 + $0x3c] sm:$0xf]
        %v1626 = vunpack.c.l.b16 %v1587
        %v1627 = vunpack.c.l.b16 %v1588
        %v1628 = vunpack.c.l.b16 %v1589
        %v1629 = vunpack.c.l.b16 %v1590
        %v1630 = vunpack.c.l.b16 %v1591
        %v1631 = vunpack.c.l.b16 %v1592
        %v1632 = vunpack.c.l.b16 %v1593
        %v1633 = vunpack.c.l.b16 %v1594
        %v1634 = vunpack.c.l.b16 %v1595
        %v1635 = vunpack.c.l.b16 %v1596
        %v1636 = vunpack.c.l.b16 %v1597
        %v1637 = vpack.c.b16 %v1627, %v1626
        %v1638 = vpack.c.b16 %v1629, %v1628
        %v1639 = vpack.c.b16 %v1631, %v1630
        %v1640 = vpack.c.b16 %v1633, %v1632
        %v1641 = vpack.c.b16 %v1635, %v1634
        %v1642 = vpack.c.b16 %v1636, %v1636
        %vm1643 = vsmask.f32 5376
        %v1645 = vshrl.u32 %v1637, 16
        %v1647 = vrot.slane %v1645, 2
        %v1648 = vshll.u32 %v1637, 16
        %v1650 = vrot.slane %v1648, 3
        %v1651 = vor.u32 %v1647, %v1650
        %v1653 = vshrl.u32 %v1638, 16
        %v1655 = vrot.slane %v1653, 2
        %v1656 = vshll.u32 %v1638, 16
        %v1658 = vrot.slane %v1656, 3
        %v1659 = vor.u32 %v1655, %v1658
        %v1660 = vsel %vm1643, %v1651, %v1659
        %v1662 = vshrl.u32 %v1639, 16
        %v1664 = vrot.slane %v1662, 2
        %v1665 = vshll.u32 %v1639, 16
        %v1667 = vrot.slane %v1665, 3
        %v1668 = vor.u32 %v1664, %v1667
        %v1669 = vsel %vm1643, %v1659, %v1668
        %v1671 = vshrl.u32 %v1640, 16
        %v1673 = vrot.slane %v1671, 2
        %v1674 = vshll.u32 %v1640, 16
        %v1676 = vrot.slane %v1674, 3
        %v1677 = vor.u32 %v1673, %v1676
        %v1678 = vsel %vm1643, %v1668, %v1677
        %v1680 = vshrl.u32 %v1641, 16
        %v1682 = vrot.slane %v1680, 2
        %v1683 = vshll.u32 %v1641, 16
        %v1685 = vrot.slane %v1683, 3
        %v1686 = vor.u32 %v1682, %v1685
        %v1687 = vsel %vm1643, %v1677, %v1686
        %v1689 = vshrl.u32 %v1642, 16
        %v1691 = vrot.slane %v1689, 2
        %v1692 = vshll.u32 %v1642, 16
        %v1694 = vrot.slane %v1692, 3
        %v1695 = vor.u32 %v1691, %v1694
        %v1696 = vsel %vm1643, %v1686, %v1695
        %v1718 = vunpack.c.l.b16 %v1599
        %v1719 = vunpack.c.l.b16 %v1600
        %v1720 = vunpack.c.l.b16 %v1601
        %v1721 = vunpack.c.l.b16 %v1602
        %v1722 = vunpack.c.l.b16 %v1603
        %v1723 = vunpack.c.l.b16 %v1604
        %v1724 = vunpack.c.l.b16 %v1605
        %v1725 = vunpack.c.l.b16 %v1606
        %v1726 = vunpack.c.l.b16 %v1607
        %v1727 = vunpack.c.l.b16 %v1608
        %v1728 = vunpack.c.l.b16 %v1609
        %v1729 = vunpack.c.l.b16 %v1610
        %v1730 = vunpack.c.l.b16 %v1611
        %v1731 = vunpack.c.l.b16 %v1612
        %v1732 = vunpack.c.l.b16 %v1613
        %v1733 = vunpack.c.l.b16 %v1614
        %v1734 = vpack.c.b16 %v1719, %v1718
        %v1735 = vpack.c.b16 %v1721, %v1720
        %v1736 = vpack.c.b16 %v1723, %v1722
        %v1737 = vpack.c.b16 %v1725, %v1724
        %v1738 = vpack.c.b16 %v1727, %v1726
        %v1739 = vpack.c.b16 %v1729, %v1728
        %v1740 = vpack.c.b16 %v1731, %v1730
        %v1741 = vpack.c.b16 %v1733, %v1732
        %1750 = vmatpush.bf16.msra.mxu0 %v1741
        %1751 = vmatpush.bf16.msra.mxu0 %v1740
        %1752 = vmatpush.bf16.msra.mxu0 %v1739
        %1753 = vmatpush.bf16.msra.mxu0 %v1738
        %1754 = vmatpush.bf16.msra.mxu0 %v1737
        %1755 = vmatpush.bf16.msra.mxu0 %v1736
        %1756 = vmatpush.bf16.msra.mxu0 %v1735
        %1757 = vmatpush.bf16.msra.mxu0 %v1734
        %1758 = vmatmul.bf16.gmra.mxu0 %v1660
        %v1759 = vpop.f32.mrf.mxu0
        %v1760 = vadd.f32 0.0, %v1759
        %v1761 = vpop.f32.mrf.mxu0
        %v1762 = vadd.f32 0.0, %v1761
        %1763 = vmatmul.bf16.gmra.mxu0 %v1669
        %v1764 = vpop.f32.mrf.mxu0
        %v1765 = vadd.f32 0.0, %v1764
        %v1766 = vpop.f32.mrf.mxu0
        %v1767 = vadd.f32 0.0, %v1766
        %1768 = vmatmul.bf16.gmra.mxu0 %v1678
        %v1769 = vpop.f32.mrf.mxu0
        %v1770 = vadd.f32 0.0, %v1769
        %v1771 = vpop.f32.mrf.mxu0
        %v1772 = vadd.f32 0.0, %v1771
        %1773 = vmatmul.bf16.gmra.mxu0 %v1687
        %v1774 = vpop.f32.mrf.mxu0
        %v1775 = vadd.f32 0.0, %v1774
        %v1776 = vpop.f32.mrf.mxu0
        %v1777 = vadd.f32 0.0, %v1776
        %1778 = vmatmul.bf16.gmra.mxu0 %v1696
        %v1779 = vpop.f32.mrf.mxu0
        %v1780 = vadd.f32 0.0, %v1779
        %v1781 = vpop.f32.mrf.mxu0
        %v1782 = vadd.f32 0.0, %v1781
        %1783 = vdwg.mxu0
        %v1784 = vadd.f32 %v1577, %v1760
        %v1785 = vadd.f32 %v1578, %v1762
        %v1786 = vadd.f32 %v1579, %v1765
        %v1787 = vadd.f32 %v1580, %v1767
        %v1788 = vadd.f32 %v1581, %v1770
        %v1789 = vadd.f32 %v1582, %v1772
        %v1790 = vadd.f32 %v1583, %v1775
        %v1791 = vadd.f32 %v1584, %v1777
        %v1792 = vadd.f32 %v1585, %v1780
        %v1793 = vadd.f32 %v1586, %v1782
        %v1794 = vld [vmem:[#allocation2 + $0xa8] sm:$0xe]
        %v1795 = vld [vmem:[#allocation2 + $0xac] sm:$0xf]
        %v1796 = vld [vmem:[#allocation2 + $0xb0] sm:$0xf]
        %v1797 = vld [vmem:[#allocation2 + $0xb4] sm:$0xf]
        %v1798 = vld [vmem:[#allocation2 + $0xb8] sm:$0xf]
        %v1799 = vld [vmem:[#allocation2 + $0xbc] sm:$0xf]
        %v1800 = vld [vmem:[#allocation2 + $0xc0] sm:$0xf]
        %v1801 = vld [vmem:[#allocation2 + $0xc4] sm:$0xf]
        %v1802 = vld [vmem:[#allocation2 + $0xc8] sm:$0xf]
        %v1803 = vld [vmem:[#allocation2 + $0xcc] sm:$0xf]
        %v1804 = vld [vmem:[#allocation2 + $0xd0] sm:$0x3]
        %s1805 = scalar_lea.vmem [#allocation3], 256
        %v1806 = vld [vmem:[%s1805] sm:$0xf]
        %v1807 = vld [vmem:[%s1805 + $0x4] sm:$0xf]
        %v1808 = vld [vmem:[%s1805 + $0x8] sm:$0xf]
        %v1809 = vld [vmem:[%s1805 + $0xc] sm:$0xf]
        %v1810 = vld [vmem:[%s1805 + $0x10] sm:$0xf]
        %v1811 = vld [vmem:[%s1805 + $0x14] sm:$0xf]
        %v1812 = vld [vmem:[%s1805 + $0x18] sm:$0xf]
        %v1813 = vld [vmem:[%s1805 + $0x1c] sm:$0xf]
        %v1814 = vld [vmem:[%s1805 + $0x20] sm:$0xf]
        %v1815 = vld [vmem:[%s1805 + $0x24] sm:$0xf]
        %v1816 = vld [vmem:[%s1805 + $0x28] sm:$0xf]
        %v1817 = vld [vmem:[%s1805 + $0x2c] sm:$0xf]
        %v1818 = vld [vmem:[%s1805 + $0x30] sm:$0xf]
        %v1819 = vld [vmem:[%s1805 + $0x34] sm:$0xf]
        %v1820 = vld [vmem:[%s1805 + $0x38] sm:$0xf]
        %v1821 = vld [vmem:[%s1805 + $0x3c] sm:$0xf]
        %v1833 = vunpack.c.l.b16 %v1794
        %v1834 = vunpack.c.l.b16 %v1795
        %v1835 = vunpack.c.l.b16 %v1796
        %v1836 = vunpack.c.l.b16 %v1797
        %v1837 = vunpack.c.l.b16 %v1798
        %v1838 = vunpack.c.l.b16 %v1799
        %v1839 = vunpack.c.l.b16 %v1800
        %v1840 = vunpack.c.l.b16 %v1801
        %v1841 = vunpack.c.l.b16 %v1802
        %v1842 = vunpack.c.l.b16 %v1803
        %v1843 = vunpack.c.l.b16 %v1804
        %v1844 = vpack.c.b16 %v1834, %v1833
        %v1845 = vpack.c.b16 %v1836, %v1835
        %v1846 = vpack.c.b16 %v1838, %v1837
        %v1847 = vpack.c.b16 %v1840, %v1839
        %v1848 = vpack.c.b16 %v1842, %v1841
        %v1849 = vpack.c.b16 %v1843, %v1843
        %vm1850 = vsmask.f32 6400
        %v1852 = vshrl.u32 %v1844, 16
        %v1854 = vrot.slane %v1852, 1
        %v1855 = vshll.u32 %v1844, 16
        %v1857 = vrot.slane %v1855, 2
        %v1858 = vor.u32 %v1854, %v1857
        %v1860 = vshrl.u32 %v1845, 16
        %v1862 = vrot.slane %v1860, 1
        %v1863 = vshll.u32 %v1845, 16
        %v1865 = vrot.slane %v1863, 2
        %v1866 = vor.u32 %v1862, %v1865
        %v1867 = vsel %vm1850, %v1858, %v1866
        %v1869 = vshrl.u32 %v1846, 16
        %v1871 = vrot.slane %v1869, 1
        %v1872 = vshll.u32 %v1846, 16
        %v1874 = vrot.slane %v1872, 2
        %v1875 = vor.u32 %v1871, %v1874
        %v1876 = vsel %vm1850, %v1866, %v1875
        %v1878 = vshrl.u32 %v1847, 16
        %v1880 = vrot.slane %v1878, 1
        %v1881 = vshll.u32 %v1847, 16
        %v1883 = vrot.slane %v1881, 2
        %v1884 = vor.u32 %v1880, %v1883
        %v1885 = vsel %vm1850, %v1875, %v1884
        %v1887 = vshrl.u32 %v1848, 16
        %v1889 = vrot.slane %v1887, 1
        %v1890 = vshll.u32 %v1848, 16
        %v1892 = vrot.slane %v1890, 2
        %v1893 = vor.u32 %v1889, %v1892
        %v1894 = vsel %vm1850, %v1884, %v1893
        %v1896 = vshrl.u32 %v1849, 16
        %v1898 = vrot.slane %v1896, 1
        %v1899 = vshll.u32 %v1849, 16
        %v1901 = vrot.slane %v1899, 2
        %v1902 = vor.u32 %v1898, %v1901
        %v1903 = vsel %vm1850, %v1893, %v1902
        %v1925 = vunpack.c.l.b16 %v1806
        %v1926 = vunpack.c.l.b16 %v1807
        %v1927 = vunpack.c.l.b16 %v1808
        %v1928 = vunpack.c.l.b16 %v1809
        %v1929 = vunpack.c.l.b16 %v1810
        %v1930 = vunpack.c.l.b16 %v1811
        %v1931 = vunpack.c.l.b16 %v1812
        %v1932 = vunpack.c.l.b16 %v1813
        %v1933 = vunpack.c.l.b16 %v1814
        %v1934 = vunpack.c.l.b16 %v1815
        %v1935 = vunpack.c.l.b16 %v1816
        %v1936 = vunpack.c.l.b16 %v1817
        %v1937 = vunpack.c.l.b16 %v1818
        %v1938 = vunpack.c.l.b16 %v1819
        %v1939 = vunpack.c.l.b16 %v1820
        %v1940 = vunpack.c.l.b16 %v1821
        %v1941 = vpack.c.b16 %v1926, %v1925
        %v1942 = vpack.c.b16 %v1928, %v1927
        %v1943 = vpack.c.b16 %v1930, %v1929
        %v1944 = vpack.c.b16 %v1932, %v1931
        %v1945 = vpack.c.b16 %v1934, %v1933
        %v1946 = vpack.c.b16 %v1936, %v1935
        %v1947 = vpack.c.b16 %v1938, %v1937
        %v1948 = vpack.c.b16 %v1940, %v1939
        %1957 = vmatpush.bf16.msra.mxu0 %v1948
        %1958 = vmatpush.bf16.msra.mxu0 %v1947
        %1959 = vmatpush.bf16.msra.mxu0 %v1946
        %1960 = vmatpush.bf16.msra.mxu0 %v1945
        %1961 = vmatpush.bf16.msra.mxu0 %v1944
        %1962 = vmatpush.bf16.msra.mxu0 %v1943
        %1963 = vmatpush.bf16.msra.mxu0 %v1942
        %1964 = vmatpush.bf16.msra.mxu0 %v1941
        %1965 = vmatmul.bf16.gmra.mxu0 %v1867
        %v1966 = vpop.f32.mrf.mxu0
        %v1967 = vadd.f32 0.0, %v1966
        %v1968 = vpop.f32.mrf.mxu0
        %v1969 = vadd.f32 0.0, %v1968
        %1970 = vmatmul.bf16.gmra.mxu0 %v1876
        %v1971 = vpop.f32.mrf.mxu0
        %v1972 = vadd.f32 0.0, %v1971
        %v1973 = vpop.f32.mrf.mxu0
        %v1974 = vadd.f32 0.0, %v1973
        %1975 = vmatmul.bf16.gmra.mxu0 %v1885
        %v1976 = vpop.f32.mrf.mxu0
        %v1977 = vadd.f32 0.0, %v1976
        %v1978 = vpop.f32.mrf.mxu0
        %v1979 = vadd.f32 0.0, %v1978
        %1980 = vmatmul.bf16.gmra.mxu0 %v1894
        %v1981 = vpop.f32.mrf.mxu0
        %v1982 = vadd.f32 0.0, %v1981
        %v1983 = vpop.f32.mrf.mxu0
        %v1984 = vadd.f32 0.0, %v1983
        %1985 = vmatmul.bf16.gmra.mxu0 %v1903
        %v1986 = vpop.f32.mrf.mxu0
        %v1987 = vadd.f32 0.0, %v1986
        %v1988 = vpop.f32.mrf.mxu0
        %v1989 = vadd.f32 0.0, %v1988
        %1990 = vdwg.mxu0
        %v1991 = vadd.f32 %v1784, %v1967
        %v1992 = vadd.f32 %v1785, %v1969
        %v1993 = vadd.f32 %v1786, %v1972
        %v1994 = vadd.f32 %v1787, %v1974
        %v1995 = vadd.f32 %v1788, %v1977
        %v1996 = vadd.f32 %v1789, %v1979
        %v1997 = vadd.f32 %v1790, %v1982
        %v1998 = vadd.f32 %v1791, %v1984
        %v1999 = vadd.f32 %v1792, %v1987
        %v2000 = vadd.f32 %v1793, %v1989
        %v2001 = vld [vmem:[#allocation2 + $0x70] sm:$0x8]
        %s2002 = scalar_lea.vmem [#allocation3], 320
        %v2003 = vld [vmem:[%s2002] sm:$0xf]
        %v2004 = vld [vmem:[%s2002 + $0x4] sm:$0xf]
        %v2005 = vld [vmem:[%s2002 + $0x8] sm:$0xf]
        %v2006 = vld [vmem:[%s2002 + $0xc] sm:$0xf]
        %v2007 = vld [vmem:[%s2002 + $0x10] sm:$0xf]
        %v2008 = vld [vmem:[%s2002 + $0x14] sm:$0xf]
        %v2009 = vld [vmem:[%s2002 + $0x18] sm:$0xf]
        %v2010 = vld [vmem:[%s2002 + $0x1c] sm:$0xf]
        %v2011 = vld [vmem:[%s2002 + $0x20] sm:$0xf]
        %v2012 = vld [vmem:[%s2002 + $0x24] sm:$0xf]
        %v2013 = vld [vmem:[%s2002 + $0x28] sm:$0xf]
        %v2014 = vld [vmem:[%s2002 + $0x2c] sm:$0xf]
        %v2015 = vld [vmem:[%s2002 + $0x30] sm:$0xf]
        %v2016 = vld [vmem:[%s2002 + $0x34] sm:$0xf]
        %v2017 = vld [vmem:[%s2002 + $0x38] sm:$0xf]
        %v2018 = vld [vmem:[%s2002 + $0x3c] sm:$0xf]
        %v2020 = vunpack.c.l.b16 %v2001
        %v2021 = vpack.c.b16 %v1627, %v2020
        %vm2022 = vcmask 1044480
        %v2023 = vrot.slane %v2021, 3
        %v2024 = vrot.slane %v1638, 3
        %v2025 = vsel %vm2022, %v2023, %v2024
        %v2026 = vrot.slane %v1639, 3
        %v2027 = vsel %vm2022, %v2024, %v2026
        %v2028 = vrot.slane %v1640, 3
        %v2029 = vsel %vm2022, %v2026, %v2028
        %v2030 = vrot.slane %v1641, 3
        %v2031 = vsel %vm2022, %v2028, %v2030
        %v2032 = vrot.slane %v1642, 3
        %v2033 = vsel %vm2022, %v2030, %v2032
        %v2055 = vunpack.c.l.b16 %v2003
        %v2056 = vunpack.c.l.b16 %v2004
        %v2057 = vunpack.c.l.b16 %v2005
        %v2058 = vunpack.c.l.b16 %v2006
        %v2059 = vunpack.c.l.b16 %v2007
        %v2060 = vunpack.c.l.b16 %v2008
        %v2061 = vunpack.c.l.b16 %v2009
        %v2062 = vunpack.c.l.b16 %v2010
        %v2063 = vunpack.c.l.b16 %v2011
        %v2064 = vunpack.c.l.b16 %v2012
        %v2065 = vunpack.c.l.b16 %v2013
        %v2066 = vunpack.c.l.b16 %v2014
        %v2067 = vunpack.c.l.b16 %v2015
        %v2068 = vunpack.c.l.b16 %v2016
        %v2069 = vunpack.c.l.b16 %v2017
        %v2070 = vunpack.c.l.b16 %v2018
        %v2071 = vpack.c.b16 %v2056, %v2055
        %v2072 = vpack.c.b16 %v2058, %v2057
        %v2073 = vpack.c.b16 %v2060, %v2059
        %v2074 = vpack.c.b16 %v2062, %v2061
        %v2075 = vpack.c.b16 %v2064, %v2063
        %v2076 = vpack.c.b16 %v2066, %v2065
        %v2077 = vpack.c.b16 %v2068, %v2067
        %v2078 = vpack.c.b16 %v2070, %v2069
        %2087 = vmatpush.bf16.msra.mxu0 %v2078
        %2088 = vmatpush.bf16.msra.mxu0 %v2077
        %2089 = vmatpush.bf16.msra.mxu0 %v2076
        %2090 = vmatpush.bf16.msra.mxu0 %v2075
        %2091 = vmatpush.bf16.msra.mxu0 %v2074
        %2092 = vmatpush.bf16.msra.mxu0 %v2073
        %2093 = vmatpush.bf16.msra.mxu0 %v2072
        %2094 = vmatpush.bf16.msra.mxu0 %v2071
        %2095 = vmatmul.bf16.gmra.mxu0 %v2025
        %v2096 = vpop.f32.mrf.mxu0
        %v2097 = vadd.f32 0.0, %v2096
        %v2098 = vpop.f32.mrf.mxu0
        %v2099 = vadd.f32 0.0, %v2098
        %2100 = vmatmul.bf16.gmra.mxu0 %v2027
        %v2101 = vpop.f32.mrf.mxu0
        %v2102 = vadd.f32 0.0, %v2101
        %v2103 = vpop.f32.mrf.mxu0
        %v2104 = vadd.f32 0.0, %v2103
        %2105 = vmatmul.bf16.gmra.mxu0 %v2029
        %v2106 = vpop.f32.mrf.mxu0
        %v2107 = vadd.f32 0.0, %v2106
        %v2108 = vpop.f32.mrf.mxu0
        %v2109 = vadd.f32 0.0, %v2108
        %2110 = vmatmul.bf16.gmra.mxu0 %v2031
        %v2111 = vpop.f32.mrf.mxu0
        %v2112 = vadd.f32 0.0, %v2111
        %v2113 = vpop.f32.mrf.mxu0
        %v2114 = vadd.f32 0.0, %v2113
        %2115 = vmatmul.bf16.gmra.mxu0 %v2033
        %v2116 = vpop.f32.mrf.mxu0
        %v2117 = vadd.f32 0.0, %v2116
        %v2118 = vpop.f32.mrf.mxu0
        %v2119 = vadd.f32 0.0, %v2118
        %2120 = vdwg.mxu0
        %v2121 = vadd.f32 %v1991, %v2097
        %v2122 = vadd.f32 %v1992, %v2099
        %v2123 = vadd.f32 %v1993, %v2102
        %v2124 = vadd.f32 %v1994, %v2104
        %v2125 = vadd.f32 %v1995, %v2107
        %v2126 = vadd.f32 %v1996, %v2109
        %v2127 = vadd.f32 %v1997, %v2112
        %v2128 = vadd.f32 %v1998, %v2114
        %v2129 = vadd.f32 %v1999, %v2117
        %v2130 = vadd.f32 %v2000, %v2119
        %v2131 = vld [vmem:[#allocation2 + $0x8] sm:$0xe]
        %v2132 = vld [vmem:[#allocation2 + $0xc] sm:$0xf]
        %v2133 = vld [vmem:[#allocation2 + $0x10] sm:$0xf]
        %v2134 = vld [vmem:[#allocation2 + $0x14] sm:$0xf]
        %v2135 = vld [vmem:[#allocation2 + $0x18] sm:$0xf]
        %v2136 = vld [vmem:[#allocation2 + $0x1c] sm:$0xf]
        %v2137 = vld [vmem:[#allocation2 + $0x20] sm:$0xf]
        %v2138 = vld [vmem:[#allocation2 + $0x24] sm:$0xf]
        %v2139 = vld [vmem:[#allocation2 + $0x28] sm:$0xf]
        %v2140 = vld [vmem:[#allocation2 + $0x2c] sm:$0xf]
        %v2141 = vld [vmem:[#allocation2 + $0x30] sm:$0x3]
        %s2142 = scalar_lea.vmem [#allocation3], 384
        %v2143 = vld [vmem:[%s2142] sm:$0xf]
        %v2144 = vld [vmem:[%s2142 + $0x4] sm:$0xf]
        %v2145 = vld [vmem:[%s2142 + $0x8] sm:$0xf]
        %v2146 = vld [vmem:[%s2142 + $0xc] sm:$0xf]
        %v2147 = vld [vmem:[%s2142 + $0x10] sm:$0xf]
        %v2148 = vld [vmem:[%s2142 + $0x14] sm:$0xf]
        %v2149 = vld [vmem:[%s2142 + $0x18] sm:$0xf]
        %v2150 = vld [vmem:[%s2142 + $0x1c] sm:$0xf]
        %v2151 = vld [vmem:[%s2142 + $0x20] sm:$0xf]
        %v2152 = vld [vmem:[%s2142 + $0x24] sm:$0xf]
        %v2153 = vld [vmem:[%s2142 + $0x28] sm:$0xf]
        %v2154 = vld [vmem:[%s2142 + $0x2c] sm:$0xf]
        %v2155 = vld [vmem:[%s2142 + $0x30] sm:$0xf]
        %v2156 = vld [vmem:[%s2142 + $0x34] sm:$0xf]
        %v2157 = vld [vmem:[%s2142 + $0x38] sm:$0xf]
        %v2158 = vld [vmem:[%s2142 + $0x3c] sm:$0xf]
        %v2170 = vunpack.c.l.b16 %v2131
        %v2171 = vunpack.c.l.b16 %v2132
        %v2172 = vunpack.c.l.b16 %v2133
        %v2173 = vunpack.c.l.b16 %v2134
        %v2174 = vunpack.c.l.b16 %v2135
        %v2175 = vunpack.c.l.b16 %v2136
        %v2176 = vunpack.c.l.b16 %v2137
        %v2177 = vunpack.c.l.b16 %v2138
        %v2178 = vunpack.c.l.b16 %v2139
        %v2179 = vunpack.c.l.b16 %v2140
        %v2180 = vunpack.c.l.b16 %v2141
        %v2181 = vpack.c.b16 %v2171, %v2170
        %v2182 = vpack.c.b16 %v2173, %v2172
        %v2183 = vpack.c.b16 %v2175, %v2174
        %v2184 = vpack.c.b16 %v2177, %v2176
        %v2185 = vpack.c.b16 %v2179, %v2178
        %v2186 = vpack.c.b16 %v2180, %v2180
        %v2188 = vshrl.u32 %v2181, 16
        %v2190 = vrot.slane %v2188, 1
        %v2191 = vshll.u32 %v2181, 16
        %v2193 = vrot.slane %v2191, 2
        %v2194 = vor.u32 %v2190, %v2193
        %v2196 = vshrl.u32 %v2182, 16
        %v2198 = vrot.slane %v2196, 1
        %v2199 = vshll.u32 %v2182, 16
        %v2201 = vrot.slane %v2199, 2
        %v2202 = vor.u32 %v2198, %v2201
        %v2203 = vsel %vm1850, %v2194, %v2202
        %v2205 = vshrl.u32 %v2183, 16
        %v2207 = vrot.slane %v2205, 1
        %v2208 = vshll.u32 %v2183, 16
        %v2210 = vrot.slane %v2208, 2
        %v2211 = vor.u32 %v2207, %v2210
        %v2212 = vsel %vm1850, %v2202, %v2211
        %v2214 = vshrl.u32 %v2184, 16
        %v2216 = vrot.slane %v2214, 1
        %v2217 = vshll.u32 %v2184, 16
        %v2219 = vrot.slane %v2217, 2
        %v2220 = vor.u32 %v2216, %v2219
        %v2221 = vsel %vm1850, %v2211, %v2220
        %v2223 = vshrl.u32 %v2185, 16
        %v2225 = vrot.slane %v2223, 1
        %v2226 = vshll.u32 %v2185, 16
        %v2228 = vrot.slane %v2226, 2
        %v2229 = vor.u32 %v2225, %v2228
        %v2230 = vsel %vm1850, %v2220, %v2229
        %v2232 = vshrl.u32 %v2186, 16
        %v2234 = vrot.slane %v2232, 1
        %v2235 = vshll.u32 %v2186, 16
        %v2237 = vrot.slane %v2235, 2
        %v2238 = vor.u32 %v2234, %v2237
        %v2239 = vsel %vm1850, %v2229, %v2238
        %v2261 = vunpack.c.l.b16 %v2143
        %v2262 = vunpack.c.l.b16 %v2144
        %v2263 = vunpack.c.l.b16 %v2145
        %v2264 = vunpack.c.l.b16 %v2146
        %v2265 = vunpack.c.l.b16 %v2147
        %v2266 = vunpack.c.l.b16 %v2148
        %v2267 = vunpack.c.l.b16 %v2149
        %v2268 = vunpack.c.l.b16 %v2150
        %v2269 = vunpack.c.l.b16 %v2151
        %v2270 = vunpack.c.l.b16 %v2152
        %v2271 = vunpack.c.l.b16 %v2153
        %v2272 = vunpack.c.l.b16 %v2154
        %v2273 = vunpack.c.l.b16 %v2155
        %v2274 = vunpack.c.l.b16 %v2156
        %v2275 = vunpack.c.l.b16 %v2157
        %v2276 = vunpack.c.l.b16 %v2158
        %v2277 = vpack.c.b16 %v2262, %v2261
        %v2278 = vpack.c.b16 %v2264, %v2263
        %v2279 = vpack.c.b16 %v2266, %v2265
        %v2280 = vpack.c.b16 %v2268, %v2267
        %v2281 = vpack.c.b16 %v2270, %v2269
        %v2282 = vpack.c.b16 %v2272, %v2271
        %v2283 = vpack.c.b16 %v2274, %v2273
        %v2284 = vpack.c.b16 %v2276, %v2275
        %2293 = vmatpush.bf16.msra.mxu0 %v2284
        %2294 = vmatpush.bf16.msra.mxu0 %v2283
        %2295 = vmatpush.bf16.msra.mxu0 %v2282
        %2296 = vmatpush.bf16.msra.mxu0 %v2281
        %2297 = vmatpush.bf16.msra.mxu0 %v2280
        %2298 = vmatpush.bf16.msra.mxu0 %v2279
        %2299 = vmatpush.bf16.msra.mxu0 %v2278
        %2300 = vmatpush.bf16.msra.mxu0 %v2277
        %2301 = vmatmul.bf16.gmra.mxu0 %v2203
        %v2302 = vpop.f32.mrf.mxu0
        %v2303 = vadd.f32 0.0, %v2302
        %v2304 = vpop.f32.mrf.mxu0
        %v2305 = vadd.f32 0.0, %v2304
        %2306 = vmatmul.bf16.gmra.mxu0 %v2212
        %v2307 = vpop.f32.mrf.mxu0
        %v2308 = vadd.f32 0.0, %v2307
        %v2309 = vpop.f32.mrf.mxu0
        %v2310 = vadd.f32 0.0, %v2309
        %2311 = vmatmul.bf16.gmra.mxu0 %v2221
        %v2312 = vpop.f32.mrf.mxu0
        %v2313 = vadd.f32 0.0, %v2312
        %v2314 = vpop.f32.mrf.mxu0
        %v2315 = vadd.f32 0.0, %v2314
        %2316 = vmatmul.bf16.gmra.mxu0 %v2230
        %v2317 = vpop.f32.mrf.mxu0
        %v2318 = vadd.f32 0.0, %v2317
        %v2319 = vpop.f32.mrf.mxu0
        %v2320 = vadd.f32 0.0, %v2319
        %2321 = vmatmul.bf16.gmra.mxu0 %v2239
        %v2322 = vpop.f32.mrf.mxu0
        %v2323 = vadd.f32 0.0, %v2322
        %v2324 = vpop.f32.mrf.mxu0
        %v2325 = vadd.f32 0.0, %v2324
        %2326 = vdwg.mxu0
        %v2327 = vadd.f32 %v2121, %v2303
        %v2328 = vadd.f32 %v2122, %v2305
        %v2329 = vadd.f32 %v2123, %v2308
        %v2330 = vadd.f32 %v2124, %v2310
        %v2331 = vadd.f32 %v2125, %v2313
        %v2332 = vadd.f32 %v2126, %v2315
        %v2333 = vadd.f32 %v2127, %v2318
        %v2334 = vadd.f32 %v2128, %v2320
        %v2335 = vadd.f32 %v2129, %v2323
        %v2336 = vadd.f32 %v2130, %v2325
        %v2337 = vld [vmem:[#allocation2 + $0x40] sm:$0xf]
        %v2338 = vld [vmem:[#allocation2 + $0x44] sm:$0xf]
        %v2339 = vld [vmem:[#allocation2 + $0x48] sm:$0xf]
        %v2340 = vld [vmem:[#allocation2 + $0x4c] sm:$0xf]
        %v2341 = vld [vmem:[#allocation2 + $0x50] sm:$0xf]
        %v2342 = vld [vmem:[#allocation2 + $0x54] sm:$0xf]
        %v2343 = vld [vmem:[#allocation2 + $0x58] sm:$0xf]
        %v2344 = vld [vmem:[#allocation2 + $0x5c] sm:$0xf]
        %v2345 = vld [vmem:[#allocation2 + $0x60] sm:$0xf]
        %v2346 = vld [vmem:[#allocation2 + $0x64] sm:$0xf]
        %v2347 = vld [vmem:[#allocation2 + $0x68] sm:$0x1]
        %s2348 = scalar_lea.vmem [#allocation3], 448
        %v2349 = vld [vmem:[%s2348] sm:$0xf]
        %v2350 = vld [vmem:[%s2348 + $0x4] sm:$0xf]
        %v2351 = vld [vmem:[%s2348 + $0x8] sm:$0xf]
        %v2352 = vld [vmem:[%s2348 + $0xc] sm:$0xf]
        %v2353 = vld [vmem:[%s2348 + $0x10] sm:$0xf]
        %v2354 = vld [vmem:[%s2348 + $0x14] sm:$0xf]
        %v2355 = vld [vmem:[%s2348 + $0x18] sm:$0xf]
        %v2356 = vld [vmem:[%s2348 + $0x1c] sm:$0xf]
        %v2357 = vld [vmem:[%s2348 + $0x20] sm:$0xf]
        %v2358 = vld [vmem:[%s2348 + $0x24] sm:$0xf]
        %v2359 = vld [vmem:[%s2348 + $0x28] sm:$0xf]
        %v2360 = vld [vmem:[%s2348 + $0x2c] sm:$0xf]
        %v2361 = vld [vmem:[%s2348 + $0x30] sm:$0xf]
        %v2362 = vld [vmem:[%s2348 + $0x34] sm:$0xf]
        %v2363 = vld [vmem:[%s2348 + $0x38] sm:$0xf]
        %v2364 = vld [vmem:[%s2348 + $0x3c] sm:$0xf]
        %v2376 = vunpack.c.l.b16 %v2337
        %v2377 = vunpack.c.l.b16 %v2338
        %v2378 = vunpack.c.l.b16 %v2339
        %v2379 = vunpack.c.l.b16 %v2340
        %v2380 = vunpack.c.l.b16 %v2341
        %v2381 = vunpack.c.l.b16 %v2342
        %v2382 = vunpack.c.l.b16 %v2343
        %v2383 = vunpack.c.l.b16 %v2344
        %v2384 = vunpack.c.l.b16 %v2345
        %v2385 = vunpack.c.l.b16 %v2346
        %v2386 = vunpack.c.l.b16 %v2347
        %v2387 = vpack.c.b16 %v2377, %v2376
        %v2388 = vpack.c.b16 %v2379, %v2378
        %v2389 = vpack.c.b16 %v2381, %v2380
        %v2390 = vpack.c.b16 %v2383, %v2382
        %v2391 = vpack.c.b16 %v2385, %v2384
        %v2392 = vpack.c.b16 %v2386, %v2386
        %v2394 = vshrl.u32 %v2387, 16
        %v2396 = vshll.u32 %v2387, 16
        %v2398 = vrot.slane %v2396, 1
        %v2399 = vor.u32 %v2394, %v2398
        %v2401 = vshll.u32 %v2388, 16
        %v2403 = vrot.slane %v2401, 1
        %v2404 = vsel %vm1325, %v2399, %v2403
        %v2405 = vshrl.u32 %v2388, 16
        %v2407 = vor.u32 %v2405, %v2403
        %v2409 = vshll.u32 %v2389, 16
        %v2411 = vrot.slane %v2409, 1
        %v2412 = vsel %vm1325, %v2407, %v2411
        %v2413 = vshrl.u32 %v2389, 16
        %v2415 = vor.u32 %v2413, %v2411
        %v2417 = vshll.u32 %v2390, 16
        %v2419 = vrot.slane %v2417, 1
        %v2420 = vsel %vm1325, %v2415, %v2419
        %v2421 = vshrl.u32 %v2390, 16
        %v2423 = vor.u32 %v2421, %v2419
        %v2425 = vshll.u32 %v2391, 16
        %v2427 = vrot.slane %v2425, 1
        %v2428 = vsel %vm1325, %v2423, %v2427
        %v2429 = vshrl.u32 %v2391, 16
        %v2431 = vor.u32 %v2429, %v2427
        %v2433 = vshll.u32 %v2392, 16
        %v2435 = vrot.slane %v2433, 1
        %v2436 = vsel %vm1325, %v2431, %v2435
        %v2458 = vunpack.c.l.b16 %v2349
        %v2459 = vunpack.c.l.b16 %v2350
        %v2460 = vunpack.c.l.b16 %v2351
        %v2461 = vunpack.c.l.b16 %v2352
        %v2462 = vunpack.c.l.b16 %v2353
        %v2463 = vunpack.c.l.b16 %v2354
        %v2464 = vunpack.c.l.b16 %v2355
        %v2465 = vunpack.c.l.b16 %v2356
        %v2466 = vunpack.c.l.b16 %v2357
        %v2467 = vunpack.c.l.b16 %v2358
        %v2468 = vunpack.c.l.b16 %v2359
        %v2469 = vunpack.c.l.b16 %v2360
        %v2470 = vunpack.c.l.b16 %v2361
        %v2471 = vunpack.c.l.b16 %v2362
        %v2472 = vunpack.c.l.b16 %v2363
        %v2473 = vunpack.c.l.b16 %v2364
        %v2474 = vpack.c.b16 %v2459, %v2458
        %v2475 = vpack.c.b16 %v2461, %v2460
        %v2476 = vpack.c.b16 %v2463, %v2462
        %v2477 = vpack.c.b16 %v2465, %v2464
        %v2478 = vpack.c.b16 %v2467, %v2466
        %v2479 = vpack.c.b16 %v2469, %v2468
        %v2480 = vpack.c.b16 %v2471, %v2470
        %v2481 = vpack.c.b16 %v2473, %v2472
        %2490 = vmatpush.bf16.msra.mxu0 %v2481
        %2491 = vmatpush.bf16.msra.mxu0 %v2480
        %2492 = vmatpush.bf16.msra.mxu0 %v2479
        %2493 = vmatpush.bf16.msra.mxu0 %v2478
        %2494 = vmatpush.bf16.msra.mxu0 %v2477
        %2495 = vmatpush.bf16.msra.mxu0 %v2476
        %2496 = vmatpush.bf16.msra.mxu0 %v2475
        %2497 = vmatpush.bf16.msra.mxu0 %v2474
        %2498 = vmatmul.bf16.gmra.mxu0 %v2404
        %v2499 = vpop.f32.mrf.mxu0
        %v2500 = vadd.f32 0.0, %v2499
        %v2501 = vpop.f32.mrf.mxu0
        %v2502 = vadd.f32 0.0, %v2501
        %2503 = vmatmul.bf16.gmra.mxu0 %v2412
        %v2504 = vpop.f32.mrf.mxu0
        %v2505 = vadd.f32 0.0, %v2504
        %v2506 = vpop.f32.mrf.mxu0
        %v2507 = vadd.f32 0.0, %v2506
        %2508 = vmatmul.bf16.gmra.mxu0 %v2420
        %v2509 = vpop.f32.mrf.mxu0
        %v2510 = vadd.f32 0.0, %v2509
        %v2511 = vpop.f32.mrf.mxu0
        %v2512 = vadd.f32 0.0, %v2511
        %2513 = vmatmul.bf16.gmra.mxu0 %v2428
        %v2514 = vpop.f32.mrf.mxu0
        %v2515 = vadd.f32 0.0, %v2514
        %v2516 = vpop.f32.mrf.mxu0
        %v2517 = vadd.f32 0.0, %v2516
        %2518 = vmatmul.bf16.gmra.mxu0 %v2436
        %v2519 = vpop.f32.mrf.mxu0
        %v2520 = vadd.f32 0.0, %v2519
        %v2521 = vpop.f32.mrf.mxu0
        %v2522 = vadd.f32 0.0, %v2521
        %2523 = vdwg.mxu0
        %v2524 = vadd.f32 %v2327, %v2500
        %v2525 = vadd.f32 %v2328, %v2502
        %v2526 = vadd.f32 %v2329, %v2505
        %v2527 = vadd.f32 %v2330, %v2507
        %v2528 = vadd.f32 %v2331, %v2510
        %v2529 = vadd.f32 %v2332, %v2512
        %v2530 = vadd.f32 %v2333, %v2515
        %v2531 = vadd.f32 %v2334, %v2517
        %v2532 = vadd.f32 %v2335, %v2520
        %v2533 = vadd.f32 %v2336, %v2522
        %v2534 = vld [vmem:[#allocation2 + $0x8] sm:$0xc]
        %s2535 = scalar_lea.vmem [#allocation3], 512
        %v2536 = vld [vmem:[%s2535] sm:$0xf]
        %v2537 = vld [vmem:[%s2535 + $0x4] sm:$0xf]
        %v2538 = vld [vmem:[%s2535 + $0x8] sm:$0xf]
        %v2539 = vld [vmem:[%s2535 + $0xc] sm:$0xf]
        %v2540 = vld [vmem:[%s2535 + $0x10] sm:$0xf]
        %v2541 = vld [vmem:[%s2535 + $0x14] sm:$0xf]
        %v2542 = vld [vmem:[%s2535 + $0x18] sm:$0xf]
        %v2543 = vld [vmem:[%s2535 + $0x1c] sm:$0xf]
        %v2544 = vld [vmem:[%s2535 + $0x20] sm:$0xf]
        %v2545 = vld [vmem:[%s2535 + $0x24] sm:$0xf]
        %v2546 = vld [vmem:[%s2535 + $0x28] sm:$0xf]
        %v2547 = vld [vmem:[%s2535 + $0x2c] sm:$0xf]
        %v2548 = vld [vmem:[%s2535 + $0x30] sm:$0xf]
        %v2549 = vld [vmem:[%s2535 + $0x34] sm:$0xf]
        %v2550 = vld [vmem:[%s2535 + $0x38] sm:$0xf]
        %v2551 = vld [vmem:[%s2535 + $0x3c] sm:$0xf]
        %v2553 = vunpack.c.l.b16 %v2534
        %v2554 = vpack.c.b16 %v2171, %v2553
        %vm2555 = vcmask 1045504
        %v2556 = vrot.slane %v2554, 2
        %v2557 = vrot.slane %v2182, 2
        %v2558 = vsel %vm2555, %v2556, %v2557
        %v2559 = vrot.slane %v2183, 2
        %v2560 = vsel %vm2555, %v2557, %v2559
        %v2561 = vrot.slane %v2184, 2
        %v2562 = vsel %vm2555, %v2559, %v2561
        %v2563 = vrot.slane %v2185, 2
        %v2564 = vsel %vm2555, %v2561, %v2563
        %v2565 = vrot.slane %v2186, 2
        %v2566 = vsel %vm2555, %v2563, %v2565
        %v2588 = vunpack.c.l.b16 %v2536
        %v2589 = vunpack.c.l.b16 %v2537
        %v2590 = vunpack.c.l.b16 %v2538
        %v2591 = vunpack.c.l.b16 %v2539
        %v2592 = vunpack.c.l.b16 %v2540
        %v2593 = vunpack.c.l.b16 %v2541
        %v2594 = vunpack.c.l.b16 %v2542
        %v2595 = vunpack.c.l.b16 %v2543
        %v2596 = vunpack.c.l.b16 %v2544
        %v2597 = vunpack.c.l.b16 %v2545
        %v2598 = vunpack.c.l.b16 %v2546
        %v2599 = vunpack.c.l.b16 %v2547
        %v2600 = vunpack.c.l.b16 %v2548
        %v2601 = vunpack.c.l.b16 %v2549
        %v2602 = vunpack.c.l.b16 %v2550
        %v2603 = vunpack.c.l.b16 %v2551
        %v2604 = vpack.c.b16 %v2589, %v2588
        %v2605 = vpack.c.b16 %v2591, %v2590
        %v2606 = vpack.c.b16 %v2593, %v2592
        %v2607 = vpack.c.b16 %v2595, %v2594
        %v2608 = vpack.c.b16 %v2597, %v2596
        %v2609 = vpack.c.b16 %v2599, %v2598
        %v2610 = vpack.c.b16 %v2601, %v2600
        %v2611 = vpack.c.b16 %v2603, %v2602
        %2620 = vmatpush.bf16.msra.mxu0 %v2611
        %2621 = vmatpush.bf16.msra.mxu0 %v2610
        %2622 = vmatpush.bf16.msra.mxu0 %v2609
        %2623 = vmatpush.bf16.msra.mxu0 %v2608
        %2624 = vmatpush.bf16.msra.mxu0 %v2607
        %2625 = vmatpush.bf16.msra.mxu0 %v2606
        %2626 = vmatpush.bf16.msra.mxu0 %v2605
        %2627 = vmatpush.bf16.msra.mxu0 %v2604
        %2628 = vmatmul.bf16.gmra.mxu0 %v2558
        %v2629 = vpop.f32.mrf.mxu0
        %v2630 = vadd.f32 0.0, %v2629
        %v2631 = vpop.f32.mrf.mxu0
        %v2632 = vadd.f32 0.0, %v2631
        %2633 = vmatmul.bf16.gmra.mxu0 %v2560
        %v2634 = vpop.f32.mrf.mxu0
        %v2635 = vadd.f32 0.0, %v2634
        %v2636 = vpop.f32.mrf.mxu0
        %v2637 = vadd.f32 0.0, %v2636
        %2638 = vmatmul.bf16.gmra.mxu0 %v2562
        %v2639 = vpop.f32.mrf.mxu0
        %v2640 = vadd.f32 0.0, %v2639
        %v2641 = vpop.f32.mrf.mxu0
        %v2642 = vadd.f32 0.0, %v2641
        %2643 = vmatmul.bf16.gmra.mxu0 %v2564
        %v2644 = vpop.f32.mrf.mxu0
        %v2645 = vadd.f32 0.0, %v2644
        %v2646 = vpop.f32.mrf.mxu0
        %v2647 = vadd.f32 0.0, %v2646
        %2648 = vmatmul.bf16.gmra.mxu0 %v2566
        %v2649 = vpop.f32.mrf.mxu0
        %v2650 = vadd.f32 0.0, %v2649
        %v2651 = vpop.f32.mrf.mxu0
        %v2652 = vadd.f32 0.0, %v2651
        %2653 = vdwg.mxu0
        %v2654 = vadd.f32 %v2524, %v2630
        %v2655 = vadd.f32 %v2525, %v2632
        %v2656 = vadd.f32 %v2526, %v2635
        %v2657 = vadd.f32 %v2527, %v2637
        %v2658 = vadd.f32 %v2528, %v2640
        %v2659 = vadd.f32 %v2529, %v2642
        %v2660 = vadd.f32 %v2530, %v2645
        %v2661 = vadd.f32 %v2531, %v2647
        %v2662 = vadd.f32 %v2532, %v2650
        %v2663 = vadd.f32 %v2533, %v2652
        %v2664 = vld [vmem:[%s5] sm:$0x1]
        %v2666 = vperm.slane %v2664, 0
        %v2668 = vmul.f32 %v2654, %v2666
        %v2669 = vmul.f32 %v2655, %v2666
        %v2670 = vmul.f32 %v2656, %v2666
        %v2671 = vmul.f32 %v2657, %v2666
        %v2672 = vmul.f32 %v2658, %v2666
        %v2673 = vmul.f32 %v2659, %v2666
        %v2674 = vmul.f32 %v2660, %v2666
        %v2675 = vmul.f32 %v2661, %v2666
        %v2676 = vmul.f32 %v2662, %v2666
        %v2677 = vmul.f32 %v2663, %v2666
        %v2678 = vld [vmem:[%s6] sm:$0x1]
        %v2680 = vperm.slane %v2678, 0
        %v2682 = vadd.f32 %v2668, %v2680
        %v2683 = vadd.f32 %v2669, %v2680
        %v2684 = vadd.f32 %v2670, %v2680
        %v2685 = vadd.f32 %v2671, %v2680
        %v2686 = vadd.f32 %v2672, %v2680
        %v2687 = vadd.f32 %v2673, %v2680
        %v2688 = vadd.f32 %v2674, %v2680
        %v2689 = vadd.f32 %v2675, %v2680
        %v2690 = vadd.f32 %v2676, %v2680
        %v2691 = vadd.f32 %v2677, %v2680
        %v2692 = vmax.f32 %v2682, 0.0
        %v2693 = vmax.f32 %v2683, 0.0
        %v2694 = vmax.f32 %v2684, 0.0
        %v2695 = vmax.f32 %v2685, 0.0
        %v2696 = vmax.f32 %v2686, 0.0
        %v2697 = vmax.f32 %v2687, 0.0
        %v2698 = vmax.f32 %v2688, 0.0
        %v2699 = vmax.f32 %v2689, 0.0
        %v2700 = vmax.f32 %v2690, 0.0
        %v2701 = vmax.f32 %v2691, 0.0
        %v2702 = vlaneseq
        %v2703 = vshrl.u32 %v2702, 7
        %v2704 = vadd.s32 %v2703, 8
        %v2705 = vadd.s32 %v2703, 16
        %v2706 = vadd.s32 %v2703, 24
        %v2707 = vadd.s32 %v2703, 32
        %v2708 = vadd.s32 %v2703, 40
        %v2709 = vadd.s32 %v2703, 48
        %v2710 = vadd.s32 %v2703, 56
        %v2711 = vadd.s32 %v2703, 64
        %v2712 = vadd.s32 %v2703, 72
        %vm2713 = vcmp.lt.s32.totalorder %v2703, 0
        %v2714 = vsub.s32 0, %v2703
        %v2715 = vsel %vm2713, %v2714, %v2703
        %v2716 = vand.u32 %v2715, 65535
        %v2717 = vshrl.u32 %v2715, 16
        %v2719 = vmul.u32 %v2716, 52429
        %v2720 = vmul.u32 %v2716, 52428
        %v2721 = vmul.u32 %v2717, 52429
        %v2722 = vmul.u32 %v2717, 52428
        %v2723 = vshll.u32 %v2720, 16
        %v2724 = vshrl.u32 %v2720, 16
        %v2725 = vshll.u32 %v2721, 16
        %v2726 = vshrl.u32 %v2721, 16
        %vm2727 = vc.u32 %v2719, %v2723
        %v2728 = vsel %vm2727, 1, 0
        %v2729 = vadd.s32 %v2719, %v2723
        %v2730 = vadd.s32 %v2722, %v2728
        %vm2731 = vc.u32 %v2729, %v2725
        %v2732 = vsel %vm2731, 1, 0
        %v2733 = vadd.s32 %v2729, %v2725
        %v2734 = vadd.s32 %v2730, %v2732
        %v2735 = vadd.s32 %v2734, %v2724
        %v2736 = vadd.s32 %v2735, %v2726
        %v2737 = vshrl.u32 %v2736, 3
        %v2738 = vmul.u32 %v2737, 10
        %v2739 = vsub.s32 %v2715, %v2738
        %v2740 = vsub.s32 0, %v2739
        %v2741 = vsel %vm2713, %v2740, %v2739
        %vm2742 = vcmp.lt.s32.totalorder %v2704, 0
        %v2743 = vsub.s32 0, %v2704
        %v2744 = vsel %vm2742, %v2743, %v2704
        %v2745 = vand.u32 %v2744, 65535
        %v2746 = vshrl.u32 %v2744, 16
        %v2748 = vmul.u32 %v2745, 52429
        %v2749 = vmul.u32 %v2745, 52428
        %v2750 = vmul.u32 %v2746, 52429
        %v2751 = vmul.u32 %v2746, 52428
        %v2752 = vshll.u32 %v2749, 16
        %v2753 = vshrl.u32 %v2749, 16
        %v2754 = vshll.u32 %v2750, 16
        %v2755 = vshrl.u32 %v2750, 16
        %vm2756 = vc.u32 %v2748, %v2752
        %v2757 = vsel %vm2756, 1, 0
        %v2758 = vadd.s32 %v2748, %v2752
        %v2759 = vadd.s32 %v2751, %v2757
        %vm2760 = vc.u32 %v2758, %v2754
        %v2761 = vsel %vm2760, 1, 0
        %v2762 = vadd.s32 %v2758, %v2754
        %v2763 = vadd.s32 %v2759, %v2761
        %v2764 = vadd.s32 %v2763, %v2753
        %v2765 = vadd.s32 %v2764, %v2755
        %v2766 = vshrl.u32 %v2765, 3
        %v2767 = vmul.u32 %v2766, 10
        %v2768 = vsub.s32 %v2744, %v2767
        %v2769 = vsub.s32 0, %v2768
        %v2770 = vsel %vm2742, %v2769, %v2768
        %vm2771 = vcmp.lt.s32.totalorder %v2705, 0
        %v2772 = vsub.s32 0, %v2705
        %v2773 = vsel %vm2771, %v2772, %v2705
        %v2774 = vand.u32 %v2773, 65535
        %v2775 = vshrl.u32 %v2773, 16
        %v2777 = vmul.u32 %v2774, 52429
        %v2778 = vmul.u32 %v2774, 52428
        %v2779 = vmul.u32 %v2775, 52429
        %v2780 = vmul.u32 %v2775, 52428
        %v2781 = vshll.u32 %v2778, 16
        %v2782 = vshrl.u32 %v2778, 16
        %v2783 = vshll.u32 %v2779, 16
        %v2784 = vshrl.u32 %v2779, 16
        %vm2785 = vc.u32 %v2777, %v2781
        %v2786 = vsel %vm2785, 1, 0
        %v2787 = vadd.s32 %v2777, %v2781
        %v2788 = vadd.s32 %v2780, %v2786
        %vm2789 = vc.u32 %v2787, %v2783
        %v2790 = vsel %vm2789, 1, 0
        %v2791 = vadd.s32 %v2787, %v2783
        %v2792 = vadd.s32 %v2788, %v2790
        %v2793 = vadd.s32 %v2792, %v2782
        %v2794 = vadd.s32 %v2793, %v2784
        %v2795 = vshrl.u32 %v2794, 3
        %v2796 = vmul.u32 %v2795, 10
        %v2797 = vsub.s32 %v2773, %v2796
        %v2798 = vsub.s32 0, %v2797
        %v2799 = vsel %vm2771, %v2798, %v2797
        %vm2800 = vcmp.lt.s32.totalorder %v2706, 0
        %v2801 = vsub.s32 0, %v2706
        %v2802 = vsel %vm2800, %v2801, %v2706
        %v2803 = vand.u32 %v2802, 65535
        %v2804 = vshrl.u32 %v2802, 16
        %v2806 = vmul.u32 %v2803, 52429
        %v2807 = vmul.u32 %v2803, 52428
        %v2808 = vmul.u32 %v2804, 52429
        %v2809 = vmul.u32 %v2804, 52428
        %v2810 = vshll.u32 %v2807, 16
        %v2811 = vshrl.u32 %v2807, 16
        %v2812 = vshll.u32 %v2808, 16
        %v2813 = vshrl.u32 %v2808, 16
        %vm2814 = vc.u32 %v2806, %v2810
        %v2815 = vsel %vm2814, 1, 0
        %v2816 = vadd.s32 %v2806, %v2810
        %v2817 = vadd.s32 %v2809, %v2815
        %vm2818 = vc.u32 %v2816, %v2812
        %v2819 = vsel %vm2818, 1, 0
        %v2820 = vadd.s32 %v2816, %v2812
        %v2821 = vadd.s32 %v2817, %v2819
        %v2822 = vadd.s32 %v2821, %v2811
        %v2823 = vadd.s32 %v2822, %v2813
        %v2824 = vshrl.u32 %v2823, 3
        %v2825 = vmul.u32 %v2824, 10
        %v2826 = vsub.s32 %v2802, %v2825
        %v2827 = vsub.s32 0, %v2826
        %v2828 = vsel %vm2800, %v2827, %v2826
        %vm2829 = vcmp.lt.s32.totalorder %v2707, 0
        %v2830 = vsub.s32 0, %v2707
        %v2831 = vsel %vm2829, %v2830, %v2707
        %v2832 = vand.u32 %v2831, 65535
        %v2833 = vshrl.u32 %v2831, 16
        %v2835 = vmul.u32 %v2832, 52429
        %v2836 = vmul.u32 %v2832, 52428
        %v2837 = vmul.u32 %v2833, 52429
        %v2838 = vmul.u32 %v2833, 52428
        %v2839 = vshll.u32 %v2836, 16
        %v2840 = vshrl.u32 %v2836, 16
        %v2841 = vshll.u32 %v2837, 16
        %v2842 = vshrl.u32 %v2837, 16
        %vm2843 = vc.u32 %v2835, %v2839
        %v2844 = vsel %vm2843, 1, 0
        %v2845 = vadd.s32 %v2835, %v2839
        %v2846 = vadd.s32 %v2838, %v2844
        %vm2847 = vc.u32 %v2845, %v2841
        %v2848 = vsel %vm2847, 1, 0
        %v2849 = vadd.s32 %v2845, %v2841
        %v2850 = vadd.s32 %v2846, %v2848
        %v2851 = vadd.s32 %v2850, %v2840
        %v2852 = vadd.s32 %v2851, %v2842
        %v2853 = vshrl.u32 %v2852, 3
        %v2854 = vmul.u32 %v2853, 10
        %v2855 = vsub.s32 %v2831, %v2854
        %v2856 = vsub.s32 0, %v2855
        %v2857 = vsel %vm2829, %v2856, %v2855
        %vm2858 = vcmp.lt.s32.totalorder %v2708, 0
        %v2859 = vsub.s32 0, %v2708
        %v2860 = vsel %vm2858, %v2859, %v2708
        %v2861 = vand.u32 %v2860, 65535
        %v2862 = vshrl.u32 %v2860, 16
        %v2864 = vmul.u32 %v2861, 52429
        %v2865 = vmul.u32 %v2861, 52428
        %v2866 = vmul.u32 %v2862, 52429
        %v2867 = vmul.u32 %v2862, 52428
        %v2868 = vshll.u32 %v2865, 16
        %v2869 = vshrl.u32 %v2865, 16
        %v2870 = vshll.u32 %v2866, 16
        %v2871 = vshrl.u32 %v2866, 16
        %vm2872 = vc.u32 %v2864, %v2868
        %v2873 = vsel %vm2872, 1, 0
        %v2874 = vadd.s32 %v2864, %v2868
        %v2875 = vadd.s32 %v2867, %v2873
        %vm2876 = vc.u32 %v2874, %v2870
        %v2877 = vsel %vm2876, 1, 0
        %v2878 = vadd.s32 %v2874, %v2870
        %v2879 = vadd.s32 %v2875, %v2877
        %v2880 = vadd.s32 %v2879, %v2869
        %v2881 = vadd.s32 %v2880, %v2871
        %v2882 = vshrl.u32 %v2881, 3
        %v2883 = vmul.u32 %v2882, 10
        %v2884 = vsub.s32 %v2860, %v2883
        %v2885 = vsub.s32 0, %v2884
        %v2886 = vsel %vm2858, %v2885, %v2884
        %vm2887 = vcmp.lt.s32.totalorder %v2709, 0
        %v2888 = vsub.s32 0, %v2709
        %v2889 = vsel %vm2887, %v2888, %v2709
        %v2890 = vand.u32 %v2889, 65535
        %v2891 = vshrl.u32 %v2889, 16
        %v2893 = vmul.u32 %v2890, 52429
        %v2894 = vmul.u32 %v2890, 52428
        %v2895 = vmul.u32 %v2891, 52429
        %v2896 = vmul.u32 %v2891, 52428
        %v2897 = vshll.u32 %v2894, 16
        %v2898 = vshrl.u32 %v2894, 16
        %v2899 = vshll.u32 %v2895, 16
        %v2900 = vshrl.u32 %v2895, 16
        %vm2901 = vc.u32 %v2893, %v2897
        %v2902 = vsel %vm2901, 1, 0
        %v2903 = vadd.s32 %v2893, %v2897
        %v2904 = vadd.s32 %v2896, %v2902
        %vm2905 = vc.u32 %v2903, %v2899
        %v2906 = vsel %vm2905, 1, 0
        %v2907 = vadd.s32 %v2903, %v2899
        %v2908 = vadd.s32 %v2904, %v2906
        %v2909 = vadd.s32 %v2908, %v2898
        %v2910 = vadd.s32 %v2909, %v2900
        %v2911 = vshrl.u32 %v2910, 3
        %v2912 = vmul.u32 %v2911, 10
        %v2913 = vsub.s32 %v2889, %v2912
        %v2914 = vsub.s32 0, %v2913
        %v2915 = vsel %vm2887, %v2914, %v2913
        %vm2916 = vcmp.lt.s32.totalorder %v2710, 0
        %v2917 = vsub.s32 0, %v2710
        %v2918 = vsel %vm2916, %v2917, %v2710
        %v2919 = vand.u32 %v2918, 65535
        %v2920 = vshrl.u32 %v2918, 16
        %v2922 = vmul.u32 %v2919, 52429
        %v2923 = vmul.u32 %v2919, 52428
        %v2924 = vmul.u32 %v2920, 52429
        %v2925 = vmul.u32 %v2920, 52428
        %v2926 = vshll.u32 %v2923, 16
        %v2927 = vshrl.u32 %v2923, 16
        %v2928 = vshll.u32 %v2924, 16
        %v2929 = vshrl.u32 %v2924, 16
        %vm2930 = vc.u32 %v2922, %v2926
        %v2931 = vsel %vm2930, 1, 0
        %v2932 = vadd.s32 %v2922, %v2926
        %v2933 = vadd.s32 %v2925, %v2931
        %vm2934 = vc.u32 %v2932, %v2928
        %v2935 = vsel %vm2934, 1, 0
        %v2936 = vadd.s32 %v2932, %v2928
        %v2937 = vadd.s32 %v2933, %v2935
        %v2938 = vadd.s32 %v2937, %v2927
        %v2939 = vadd.s32 %v2938, %v2929
        %v2940 = vshrl.u32 %v2939, 3
        %v2941 = vmul.u32 %v2940, 10
        %v2942 = vsub.s32 %v2918, %v2941
        %v2943 = vsub.s32 0, %v2942
        %v2944 = vsel %vm2916, %v2943, %v2942
        %vm2945 = vcmp.lt.s32.totalorder %v2711, 0
        %v2946 = vsub.s32 0, %v2711
        %v2947 = vsel %vm2945, %v2946, %v2711
        %v2948 = vand.u32 %v2947, 65535
        %v2949 = vshrl.u32 %v2947, 16
        %v2951 = vmul.u32 %v2948, 52429
        %v2952 = vmul.u32 %v2948, 52428
        %v2953 = vmul.u32 %v2949, 52429
        %v2954 = vmul.u32 %v2949, 52428
        %v2955 = vshll.u32 %v2952, 16
        %v2956 = vshrl.u32 %v2952, 16
        %v2957 = vshll.u32 %v2953, 16
        %v2958 = vshrl.u32 %v2953, 16
        %vm2959 = vc.u32 %v2951, %v2955
        %v2960 = vsel %vm2959, 1, 0
        %v2961 = vadd.s32 %v2951, %v2955
        %v2962 = vadd.s32 %v2954, %v2960
        %vm2963 = vc.u32 %v2961, %v2957
        %v2964 = vsel %vm2963, 1, 0
        %v2965 = vadd.s32 %v2961, %v2957
        %v2966 = vadd.s32 %v2962, %v2964
        %v2967 = vadd.s32 %v2966, %v2956
        %v2968 = vadd.s32 %v2967, %v2958
        %v2969 = vshrl.u32 %v2968, 3
        %v2970 = vmul.u32 %v2969, 10
        %v2971 = vsub.s32 %v2947, %v2970
        %v2972 = vsub.s32 0, %v2971
        %v2973 = vsel %vm2945, %v2972, %v2971
        %vm2974 = vcmp.lt.s32.totalorder %v2712, 0
        %v2975 = vsub.s32 0, %v2712
        %v2976 = vsel %vm2974, %v2975, %v2712
        %v2977 = vand.u32 %v2976, 65535
        %v2978 = vshrl.u32 %v2976, 16
        %v2980 = vmul.u32 %v2977, 52429
        %v2981 = vmul.u32 %v2977, 52428
        %v2982 = vmul.u32 %v2978, 52429
        %v2983 = vmul.u32 %v2978, 52428
        %v2984 = vshll.u32 %v2981, 16
        %v2985 = vshrl.u32 %v2981, 16
        %v2986 = vshll.u32 %v2982, 16
        %v2987 = vshrl.u32 %v2982, 16
        %vm2988 = vc.u32 %v2980, %v2984
        %v2989 = vsel %vm2988, 1, 0
        %v2990 = vadd.s32 %v2980, %v2984
        %v2991 = vadd.s32 %v2983, %v2989
        %vm2992 = vc.u32 %v2990, %v2986
        %v2993 = vsel %vm2992, 1, 0
        %v2994 = vadd.s32 %v2990, %v2986
        %v2995 = vadd.s32 %v2991, %v2993
        %v2996 = vadd.s32 %v2995, %v2985
        %v2997 = vadd.s32 %v2996, %v2987
        %v2998 = vshrl.u32 %v2997, 3
        %v2999 = vmul.u32 %v2998, 10
        %v3000 = vsub.s32 %v2976, %v2999
        %v3001 = vsub.s32 0, %v3000
        %v3002 = vsel %vm2974, %v3001, %v3000
        %vm3003 = vcmp.ne.s32.totalorder %v2741, 0
        %vm3004 = vcmp.ne.s32.totalorder %v2770, 0
        %vm3005 = vcmp.ne.s32.totalorder %v2799, 0
        %vm3006 = vcmp.ne.s32.totalorder %v2828, 0
        %vm3007 = vcmp.ne.s32.totalorder %v2857, 0
        %vm3008 = vcmp.ne.s32.totalorder %v2886, 0
        %vm3009 = vcmp.ne.s32.totalorder %v2915, 0
        %vm3010 = vcmp.ne.s32.totalorder %v2944, 0
        %vm3011 = vcmp.ne.s32.totalorder %v2973, 0
        %vm3012 = vcmp.ne.s32.totalorder %v3002, 0
        %vm3013 = vcmp.lt.s32.totalorder %v2741, 0
        %vm3014 = vcmp.lt.s32.totalorder %v2770, 0
        %vm3015 = vcmp.lt.s32.totalorder %v2799, 0
        %vm3016 = vcmp.lt.s32.totalorder %v2828, 0
        %vm3017 = vcmp.lt.s32.totalorder %v2857, 0
        %vm3018 = vcmp.lt.s32.totalorder %v2886, 0
        %vm3019 = vcmp.lt.s32.totalorder %v2915, 0
        %vm3020 = vcmp.lt.s32.totalorder %v2944, 0
        %vm3021 = vcmp.lt.s32.totalorder %v2973, 0
        %vm3022 = vcmp.lt.s32.totalorder %v3002, 0
        %vm3023 = vmand %vm3013, %vm3003
        %vm3024 = vmand %vm3014, %vm3004
        %vm3025 = vmand %vm3015, %vm3005
        %vm3026 = vmand %vm3016, %vm3006
        %vm3027 = vmand %vm3017, %vm3007
        %vm3028 = vmand %vm3018, %vm3008
        %vm3029 = vmand %vm3019, %vm3009
        %vm3030 = vmand %vm3020, %vm3010
        %vm3031 = vmand %vm3021, %vm3011
        %vm3032 = vmand %vm3022, %vm3012
        %v3033 = vadd.s32 %v2741, 10
        %v3034 = vadd.s32 %v2770, 10
        %v3035 = vadd.s32 %v2799, 10
        %v3036 = vadd.s32 %v2828, 10
        %v3037 = vadd.s32 %v2857, 10
        %v3038 = vadd.s32 %v2886, 10
        %v3039 = vadd.s32 %v2915, 10
        %v3040 = vadd.s32 %v2944, 10
        %v3041 = vadd.s32 %v2973, 10
        %v3042 = vadd.s32 %v3002, 10
        %v3043 = vsel %vm3023, %v3033, %v2741
        %v3044 = vsel %vm3024, %v3034, %v2770
        %v3045 = vsel %vm3025, %v3035, %v2799
        %v3046 = vsel %vm3026, %v3036, %v2828
        %v3047 = vsel %vm3027, %v3037, %v2857
        %v3048 = vsel %vm3028, %v3038, %v2886
        %v3049 = vsel %vm3029, %v3039, %v2915
        %v3050 = vsel %vm3030, %v3040, %v2944
        %v3051 = vsel %vm3031, %v3041, %v2973
        %v3052 = vsel %vm3032, %v3042, %v3002
        %vm3053 = vcmp.ge.s32.totalorder %v3043, 1
        %vm3054 = vcmp.ge.s32.totalorder %v3044, 1
        %vm3055 = vcmp.ge.s32.totalorder %v3045, 1
        %vm3056 = vcmp.ge.s32.totalorder %v3046, 1
        %vm3057 = vcmp.ge.s32.totalorder %v3047, 1
        %vm3058 = vcmp.ge.s32.totalorder %v3048, 1
        %vm3059 = vcmp.ge.s32.totalorder %v3049, 1
        %vm3060 = vcmp.ge.s32.totalorder %v3050, 1
        %vm3061 = vcmp.ge.s32.totalorder %v3051, 1
        %vm3062 = vcmp.ge.s32.totalorder %v3052, 1
        %vm3063 = vcmp.le.s32.totalorder %v3043, 8
        %vm3064 = vcmp.le.s32.totalorder %v3044, 8
        %vm3065 = vcmp.le.s32.totalorder %v3045, 8
        %vm3066 = vcmp.le.s32.totalorder %v3046, 8
        %vm3067 = vcmp.le.s32.totalorder %v3047, 8
        %vm3068 = vcmp.le.s32.totalorder %v3048, 8
        %vm3069 = vcmp.le.s32.totalorder %v3049, 8
        %vm3070 = vcmp.le.s32.totalorder %v3050, 8
        %vm3071 = vcmp.le.s32.totalorder %v3051, 8
        %vm3072 = vcmp.le.s32.totalorder %v3052, 8
        %vm3073 = vmand %vm3053, %vm3063
        %vm3074 = vmand %vm3054, %vm3064
        %vm3075 = vmand %vm3055, %vm3065
        %vm3076 = vmand %vm3056, %vm3066
        %vm3077 = vmand %vm3057, %vm3067
        %vm3078 = vmand %vm3058, %vm3068
        %vm3079 = vmand %vm3059, %vm3069
        %vm3080 = vmand %vm3060, %vm3070
        %vm3081 = vmand %vm3061, %vm3071
        %vm3082 = vmand %vm3062, %vm3072
        %v3083 = vsel %vm3073, 1, 0
        %v3084 = vsel %vm3074, 1, 0
        %v3085 = vsel %vm3075, 1, 0
        %v3086 = vsel %vm3076, 1, 0
        %v3087 = vsel %vm3077, 1, 0
        %v3088 = vsel %vm3078, 1, 0
        %v3089 = vsel %vm3079, 1, 0
        %v3090 = vsel %vm3080, 1, 0
        %v3091 = vsel %vm3081, 1, 0
        %v3092 = vsel %vm3082, 1, 0
        %vm3093 = vcmp.eq.s32.totalorder %v3083, 1
        %vm3094 = vcmp.eq.s32.totalorder %v3084, 1
        %vm3095 = vcmp.eq.s32.totalorder %v3085, 1
        %vm3096 = vcmp.eq.s32.totalorder %v3086, 1
        %vm3097 = vcmp.eq.s32.totalorder %v3087, 1
        %vm3098 = vcmp.eq.s32.totalorder %v3088, 1
        %vm3099 = vcmp.eq.s32.totalorder %v3089, 1
        %vm3100 = vcmp.eq.s32.totalorder %v3090, 1
        %vm3101 = vcmp.eq.s32.totalorder %v3091, 1
        %vm3102 = vcmp.eq.s32.totalorder %v3092, 1
        %v3103 = vsel %vm3093, %v2692, 0.0
        %v3104 = vsel %vm3094, %v2693, 0.0
        %v3105 = vsel %vm3095, %v2694, 0.0
        %v3106 = vsel %vm3096, %v2695, 0.0
        %v3107 = vsel %vm3097, %v2696, 0.0
        %v3108 = vsel %vm3098, %v2697, 0.0
        %v3109 = vsel %vm3099, %v2698, 0.0
        %v3110 = vsel %vm3100, %v2699, 0.0
        %v3111 = vsel %vm3101, %v2700, 0.0
        %v3112 = vsel %vm3102, %v2701, 0.0
        %v3113 = vpack.c.bf16 %v3103, %v3103
        %v3114 = vpack.c.bf16 %v3104, %v3104
        %v3115 = vpack.c.bf16 %v3105, %v3105
        %v3116 = vpack.c.bf16 %v3106, %v3106
        %v3117 = vpack.c.bf16 %v3107, %v3107
        %v3118 = vpack.c.bf16 %v3108, %v3108
        %v3119 = vpack.c.bf16 %v3109, %v3109
        %v3120 = vpack.c.bf16 %v3110, %v3110
        %v3121 = vpack.c.bf16 %v3111, %v3111
        %v3122 = vpack.c.bf16 %v3112, %v3112
        %3123 = vst [vmem:[%s288] sm:$0xf] 0
        %3124 = vst [vmem:[%s288 + $0x4] sm:$0xf] 0
        %3125 = vst [vmem:[%s288 + $0x8] sm:$0x3] 0
        %vm3136 = vcmask 1041408
        %vm3137 = vcmask 1045508
        %vm3138 = vmor %vm3136, %vm3137
        %v3139 = vrot.slane %v3113, 6
        %v3140 = vrot.slane %v3139, 4
        %v3141 = vrot.slane %v3114, 6
        %v3142 = vsel %vm3138, %v3140, %v3141
        %v3143 = vrot.slane %v3141, 4
        %v3144 = vrot.slane %v3115, 6
        %v3145 = vsel %vm3138, %v3143, %v3144
        %v3146 = vrot.slane %v3144, 4
        %v3147 = vrot.slane %v3116, 6
        %v3148 = vsel %vm3138, %v3146, %v3147
        %v3149 = vrot.slane %v3147, 4
        %v3150 = vrot.slane %v3117, 6
        %v3151 = vsel %vm3138, %v3149, %v3150
        %v3152 = vrot.slane %v3150, 4
        %v3153 = vrot.slane %v3118, 6
        %v3154 = vsel %vm3138, %v3152, %v3153
        %v3155 = vrot.slane %v3153, 4
        %v3156 = vrot.slane %v3119, 6
        %v3157 = vsel %vm3138, %v3155, %v3156
        %v3158 = vrot.slane %v3156, 4
        %v3159 = vrot.slane %v3120, 6
        %v3160 = vsel %vm3138, %v3158, %v3159
        %v3161 = vrot.slane %v3159, 4
        %v3162 = vrot.slane %v3121, 6
        %v3163 = vsel %vm3138, %v3161, %v3162
        %v3164 = vrot.slane %v3162, 4
        %v3165 = vrot.slane %v3122, 6
        %v3166 = vsel %vm3138, %v3164, %v3165
        %v3167 = vrot.slane %v3165, 4
        %3179 = vst [vmem:[%s288 + $0x8] sm:$0xc] %v3139
        %3180 = vst [vmem:[%s288 + $0xc] sm:$0xf] %v3142
        %3181 = vst [vmem:[%s288 + $0x10] sm:$0xf] %v3145
        %3182 = vst [vmem:[%s288 + $0x14] sm:$0xf] %v3148
        %3183 = vst [vmem:[%s288 + $0x18] sm:$0xf] %v3151
        %3184 = vst [vmem:[%s288 + $0x1c] sm:$0xf] %v3154
        %3185 = vst [vmem:[%s288 + $0x20] sm:$0xf] %v3157
        %3186 = vst [vmem:[%s288 + $0x24] sm:$0xf] %v3160
        %3187 = vst [vmem:[%s288 + $0x28] sm:$0xf] %v3163
        %3188 = vst [vmem:[%s288 + $0x2c] sm:$0xf] %v3166
        %3189 = vst [vmem:[%s288 + $0x30] sm:$0x3] %v3167
        %3190 = vst [vmem:[%s288 + $0x30] sm:$0xc] 0
        %3191 = vst [vmem:[%s288 + $0x34] sm:$0xf] 0
        %3192 = vst [vmem:[%s288 + $0x38] sm:$0xf] 0
        %s3193 = sand.u32 %s182, 1
        %s3194 = scalar_lea.sflag [#allocation5], %s3193
        %s3195 = sand.u32 %s182, 1
        %s3196 = smul.addr %s3195, 60
        %s3197 = scalar_lea.vmem [#allocation6], %s3196
        // Predicated region
        $region53: #{tpu_custom_call.1} parent=47 // pred_check
          %p3198 = pneg %p192
        $region54: #{tpu_custom_call.1} parent=47 // pred_check_branch
          %3200 = sbr.rel (%p3198) target = $region56
        $region55: #{tpu_custom_call.1} parent=47 // pred_region
          %3202 = vsyncadd %s3194, 0
          %s3203 = smul.addr %s22, 15
          %s3204 = smul.addr %s3203, 4
          %s3205 = scalar_lea.hbm %s7, %s3204
          %s3206 = sshll.u32 %s3197, 4
          %s3207 = int_to_ptr.vmem [resolvable:$true] %s3206
          %s3208 = sshll.u32 %s3205, 4
          %s3209 = int_to_ptr.hbm [resolvable:$true] %s3208
          %3214 = dma.vmem_to_hbm [thread:$0]  %s3207, 960, %s3209, %s3194, 64, 64, 4
        $region56: #{tpu_custom_call.1} parent=47 // pred_fallthru
          _
      $region48: #{tpu_custom_call.1} parent=5 // pred_fallthru
        _
      %p3215 = scmp.le.s32.totalorder 2, %s17
      // Predicated region
      $region57: #{tpu_custom_call.1} parent=5 // pred_check
        %p3216 = pneg %p3215
      $region58: #{tpu_custom_call.1} parent=5 // pred_check_branch
        %3218 = sbr.rel (%p3216) target = $region60
      $region59: #{tpu_custom_call.1} parent=5 // pred_region
        %s3219 = ssub.s32 %s17, 2
        // Predicated region
        $region61: #{tpu_custom_call.1} parent=59 // pred_check
          %p3220 = pneg %p198
        $region62: #{tpu_custom_call.1} parent=59 // pred_check_branch
          %3222 = sbr.rel (%p3220) target = $region64
        $region63: #{tpu_custom_call.1} parent=59 // pred_region
          %s3223 = sand.u32 %s183, 1
          %s3224 = scalar_lea.sflag [#allocation5], %s3223
          %s3225 = sand.u32 %s183, 1
          %s3226 = smul.addr %s3225, 60
          %s3227 = scalar_lea.vmem [#allocation6], %s3226
          %3229 = dma.done %s3224, 960
        $region64: #{tpu_custom_call.1} parent=59 // pred_fallthru
          _
      $region60: #{tpu_custom_call.1} parent=5 // pred_fallthru
        _
    $region6: #{tpu_custom_call.1} parent=1 // loop_footer
      %s21 = sadd.s32 1, %s17
    $region7: #{tpu_custom_call.1} parent=1 // loop_footer_branch
      %16 = sbr.rel target = $region3
    $region8: #{tpu_custom_call.1} parent=1 // loop_exit
      _
    %3230 = vsyncpa [#allocation4], 1
    %s3231 = scalar_lea.sflag [#allocation4], 1
    %3232 = vsyncpa %s3231, 1
    %3233 = vsyncpa [#allocation5], 1
    %s3234 = scalar_lea.sflag [#allocation5], 1
    %3235 = vsyncpa %s3234, 1

</llo_original>
